<compile_context>
chip_gen: v6e
topology: v6e:2x2x1
jax: 0.10.0
libtpu: 0.0.40
codegen_flags: <defaults>
</compile_context>

<pallas_src>
import functools

import numpy as np
import jax
import jax.numpy as jnp
from jax.experimental import pallas as pl
from jax.experimental.pallas import tpu as pltpu


_LANE_PAD = 128   # lane-aligned halo width of the per-image shift buffer


def _inverted_residual_kernel(x_ref, wf_ref, bf_ref, gamma_ref, beta_ref,
                              wg_ref, bg_ref, o_ref,
                              t_ref, skip_ref, pad_ref, patch_ref,
                              *, n_layers, W):
    N, Cin, HW = x_ref.shape                # (batch, Cin, H*W), spatial on lanes
    Cexp = gamma_ref.shape[0]
    Cpad = pad_ref.shape[0]                 # per-tap channel stride (16-aligned)
    PAD = (pad_ref.shape[1] - HW) // 2      # lane-aligned halo (128)
    f32 = jnp.float32

    # ---- stage 1: fused 1x1 convs (expansion + skip projection share one
    #      pass) + entry ReLU.  K = Cin is tiny, so this runs as Cin
    #      broadcast-FMA passes on the VPU instead of an MXU pass.  Per-channel
    #      batch statistics are accumulated across images for BatchNorm. ----
    s1 = jnp.zeros((Cexp, 1), f32)
    s2 = jnp.zeros((Cexp, 1), f32)
    for n in range(N):
        xb = x_ref[n]                                       # (Cin, HW)
        fused = wf_ref[:, 0:1] * xb[0:1, :]
        for c in range(1, Cin):
            fused = fused + wf_ref[:, c:c + 1] * xb[c:c + 1, :]
        fused = fused + bf_ref[...]                         # (Cexp+Cout, HW)
        t = jnp.maximum(fused[:Cexp, :], 0.0)               # entry-block ReLU
        t_ref[n] = t                                        # park pre-BN act in VMEM
        skip_ref[n] = fused[Cexp:, :]                       # park skip path in VMEM
        s1 = s1 + jnp.sum(t, axis=1, keepdims=True)
        s2 = s2 + jnp.sum(t * t, axis=1, keepdims=True)

    # ---- BatchNorm2d (training-mode batch stats, biased variance, eps=1e-5)
    #      folded to one per-channel scale/shift ----
    inv_n = 1.0 / (N * HW)
    mean = s1 * inv_n
    var = jnp.maximum(s2 * inv_n - mean * mean, 0.0)        # clamp f32 cancellation
    scale = gamma_ref[...] * jax.lax.rsqrt(var + 1e-5)      # EUP rsqrt (free slot)
    shift = beta_ref[...] - mean * scale

    # ---- grouped 3x3 conv setup ----
    # Only horizontal wrap needs masking: vertical out-of-image taps read the
    # zero halo of the per-image shift buffer, so just 2 small masks stay live.
    xx = jax.lax.broadcasted_iota(jnp.int32, (1, HW), 1) % W
    mask_l = (xx >= 1).astype(f32)          # tap reads column x-1
    mask_r = (xx < W - 1).astype(f32)       # tap reads column x+1
    tap_offsets = [dy * W + dx for dy in (-1, 0, 1) for dx in (-1, 0, 1)]
    tap_masks = [mask_l if dx == -1 else (mask_r if dx == 1 else None)
                 for dy in (-1, 0, 1) for dx in (-1, 0, 1)]

    # Zero the shift buffer ONCE: keeps the halo and the padded channel rows
    # (Cexp..Cpad) at zero; the interior Cexp rows are overwritten per layer.
    pad_ref[...] = jnp.zeros(pad_ref.shape, pad_ref.dtype)

    # ---- grouped 3x3 conv, n_layers applications with SHARED weights, each as
    #      one stacked-K im2col matmul: (Cpad, 9*Cpad) @ (9*Cpad, HW) in bf16
    #      with f32 accumulation.  Patches go tap-by-tap into a preallocated
    #      bf16 VMEM scratch; every bf16 store is (16,128)-tile aligned because
    #      the per-tap stride Cpad is a multiple of 16. ----
    for n in range(N):
        cur = t_ref[n] * scale + shift                      # BN apply, (Cexp, HW)
        for _ in range(n_layers):                           # small static count
            pad_ref[:Cexp, PAD:PAD + HW] = cur              # lane-aligned store
            for tap in range(9):
                start = PAD + tap_offsets[tap]
                sh = pad_ref[:, start:start + HW]           # lane-shifted window read
                m = tap_masks[tap]
                if m is not None:
                    sh = sh * m                             # zero wrapped columns
                patch_ref[tap * Cpad:(tap + 1) * Cpad, :] = sh.astype(patch_ref.dtype)
            acc = jnp.dot(wg_ref[...], patch_ref[...],      # bf16 MXU, f32 acc
                          preferred_element_type=jnp.float32)
            cur = acc[:Cexp, :] + bg_ref[...]
        # ---- final activation + residual (1x1 skip projection) ----
        o_ref[n] = jnp.maximum(cur, 0.0) + skip_ref[n]      # lane-dense unmasked store


def pack_params(w1, b1, gamma, beta, wg, bg, ws, bs, *, groups):
    """One-time, per-module parameter packing (cache the result; do NOT call
    per forward).  Inputs use PyTorch layouts:
       w1 (Cexp, Cin), ws (Cout, Cin)   -- 1x1 conv weights (kernel dims squeezed)
       wg (Cexp, Cexp//groups, 3, 3)    -- grouped 3x3 conv weight
       b1/bg/bs, gamma/beta             -- 1-D per-channel vectors
    """
    f32 = np.float32
    w1 = np.asarray(w1, f32)
    ws = np.asarray(ws, f32)
    wg = np.asarray(wg, f32)
    Cexp, Cin = w1.shape
    Cout = ws.shape[0]
    cpg = Cexp // groups
    Cpad = -(-Cexp // 16) * 16          # bf16 sublane-tile aligned per-tap stride

    # fused 1x1 weight: expansion rows, then skip-projection rows
    wf = np.concatenate([w1.reshape(Cexp, Cin), ws.reshape(Cout, Cin)], axis=0)
    bf = np.concatenate([np.asarray(b1, f32), np.asarray(bs, f32)]).reshape(-1, 1)

    # block-diagonal per-tap grouped-conv weight, padded to Cpad and stacked
    # along K:  wg_packed[o, tap*Cpad + c] = weight[o, c, tap]
    wg_dense = np.zeros((9, Cpad, Cpad), f32)               # (tap, out, in)
    for g in range(groups):
        blk = wg[g * cpg:(g + 1) * cpg]                     # (out_g, in_g, 3, 3)
        blk_t = np.transpose(blk, (2, 3, 0, 1)).reshape(9, cpg, cpg)
        wg_dense[:, g * cpg:(g + 1) * cpg, g * cpg:(g + 1) * cpg] = blk_t
    wg_packed = np.transpose(wg_dense, (1, 0, 2)).reshape(Cpad, 9 * Cpad)

    return dict(
        wf=jnp.asarray(wf),
        bf=jnp.asarray(bf),
        gamma=jnp.asarray(np.asarray(gamma, f32).reshape(-1, 1)),
        beta=jnp.asarray(np.asarray(beta, f32).reshape(-1, 1)),
        wg=jnp.asarray(wg_packed).astype(jnp.bfloat16),     # bf16 MXU operand
        bg=jnp.asarray(np.asarray(bg, f32).reshape(-1, 1)),
        dims=(Cexp, Cout, Cpad),
    )


def inverted_residual_block_2d(x_nchw, params, *, n_layers=1):
    """NCHW in / NCHW out.  `params` comes from pack_params() (call once, reuse)."""
    N, Cin, H, W = x_nchw.shape
    Cexp, Cout, Cpad = params["dims"]
    HW = H * W
    # Layout-preserving reshape -- no transpose in the per-call path.
    x3 = x_nchw.reshape(N, Cin, HW).astype(jnp.float32)

    kern = functools.partial(_inverted_residual_kernel, n_layers=n_layers, W=W)
    vmem = pl.BlockSpec(memory_space=pltpu.MemorySpace.VMEM)
    out = pl.pallas_call(
        kern,
        out_shape=jax.ShapeDtypeStruct((N, Cout, HW), jnp.float32),
        in_specs=[vmem] * 7,
        out_specs=vmem,
        scratch_shapes=[
            pltpu.VMEM((N, Cexp, HW), jnp.float32),               # pre-BN activations
            pltpu.VMEM((N, Cout, HW), jnp.float32),               # skip path
            pltpu.VMEM((Cpad, HW + 2 * _LANE_PAD), jnp.float32),  # zero-haloed shift buf
            pltpu.VMEM((9 * Cpad, HW), jnp.bfloat16),             # im2col patches
        ],
    )(x3, params["wf"], params["bf"], params["gamma"], params["beta"],
      params["wg"], params["bg"])
    return out.reshape(N, Cout, H, W)


def _reference_nchw(x, w1, b1, gamma, beta, wg, bg, ws, bs, groups, n_layers):
    """Pure-JAX high-precision reference, PyTorch parameter layouts, NCHW I/O."""
    hp = jax.lax.Precision.HIGHEST
    xh = jnp.transpose(x, (0, 2, 3, 1))                       # NHWC
    t = jnp.einsum('nhwc,kc->nhwk', xh, w1, precision=hp) + b1
    t = jnp.maximum(t, 0.0)
    mean = jnp.mean(t, axis=(0, 1, 2))
    var = jnp.var(t, axis=(0, 1, 2))                          # biased
    t = (t - mean) / jnp.sqrt(var + 1e-5) * gamma + beta
    wg_hwio = jnp.transpose(wg, (2, 3, 1, 0))                 # (3,3,cpg,Cexp)
    y = t
    for _ in range(n_layers):
        y = jax.lax.conv_general_dilated(
            y, wg_hwio, (1, 1), ((1, 1), (1, 1)),
            dimension_numbers=('NHWC', 'HWIO', 'NHWC'),
            feature_group_count=groups, precision=hp) + bg
    y = jnp.maximum(y, 0.0)
    skip = jnp.einsum('nhwc,kc->nhwk', xh, ws, precision=hp) + bs
    return jnp.transpose(y + skip, (0, 3, 1, 2))              # NCHW


if __name__ == "__main__":
    # Module hyper-parameters (out_channels = in_channels * expansion so the
    # residual add `x + skip(residual)` is well-formed, as the module requires).
    N, Cin, H, W = 2, 4, 16, 16
    expansion = 6
    Cexp = Cin * expansion          # 24
    Cout = Cexp                     # 24  (!= Cin -> skip is a 1x1 conv)
    groups = Cin                    # grouped 3x3 conv with groups=in_channels
    cpg = Cexp // groups            # 6
    n_layers = 1                    # n_intermediate_layers (shared weights)

    key = jax.random.PRNGKey(0)
    ks = jax.random.split(key, 9)
    x_nchw = jax.random.normal(ks[0], (N, Cin, H, W), jnp.float32)

    # Parameters in PyTorch layouts, deterministic init.
    w1 = jax.random.normal(ks[1], (Cexp, Cin), jnp.float32) * 0.3       # Conv2d(Cin,Cexp,1)
    b1 = jax.random.normal(ks[2], (Cexp,), jnp.float32) * 0.1
    gamma = 1.0 + 0.1 * jax.random.normal(ks[3], (Cexp,), jnp.float32)  # BatchNorm2d affine
    beta = 0.1 * jax.random.normal(ks[4], (Cexp,), jnp.float32)
    wg = jax.random.normal(ks[5], (Cexp, cpg, 3, 3), jnp.float32) * 0.2  # grouped conv weight
    bg = 0.1 * jax.random.normal(ks[6], (Cexp,), jnp.float32)
    ws = jax.random.normal(ks[7], (Cout, Cin), jnp.float32) * 0.3       # skip Conv2d(Cin,Cout,1)
    bs = 0.1 * jax.random.normal(ks[8], (Cout,), jnp.float32)

    # One-time parameter packing (cache this across forward calls).
    params = pack_params(w1, b1, gamma, beta, wg, bg, ws, bs, groups=groups)

    out = inverted_residual_block_2d(x_nchw, params, n_layers=n_layers)
    out = jax.block_until_ready(out)
    assert out.shape == (N, Cout, H, W)

    ref = _reference_nchw(x_nchw, w1, b1, gamma, beta, wg, bg, ws, bs,
                          groups, n_layers)
    # Tolerance covers the bf16 grouped-conv operands (f32 accumulation).
    np.testing.assert_allclose(np.asarray(out), np.asarray(ref),
                               rtol=2e-2, atol=3e-2)

    print("KERNEL_OK")
</pallas_src>

<mosaic_0001>
module attributes {stable_mosaic.version = 11 : i64} {
  func.func @_inverted_residual_kernel(%arg0: memref<2x4x256xf32, #tpu.memory_space<vmem>>, %arg1: memref<48x4xf32, #tpu.memory_space<vmem>>, %arg2: memref<48x1xf32, #tpu.memory_space<vmem>>, %arg3: memref<24x1xf32, #tpu.memory_space<vmem>>, %arg4: memref<24x1xf32, #tpu.memory_space<vmem>>, %arg5: memref<32x288xbf16, #tpu.memory_space<vmem>>, %arg6: memref<24x1xf32, #tpu.memory_space<vmem>>, %arg7: memref<2x24x256xf32, #tpu.memory_space<vmem>>, %arg8: memref<2x24x256xf32, #tpu.memory_space<vmem>>, %arg9: memref<2x24x256xf32, #tpu.memory_space<vmem>>, %arg10: memref<32x512xf32, #tpu.memory_space<vmem>>, %arg11: memref<288x256xbf16, #tpu.memory_space<vmem>>) attributes {dimension_semantics = [], scalar_prefetch = 0 : i64, scratch_operands = 4 : i64, tpu.core_type = #tpu.core_type<tc>} {
    %cst = arith.constant 0.000000e+00 : f32
    %0 = vector.broadcast %cst : f32 to vector<24x1xf32>
    %cst_0 = arith.constant 0.000000e+00 : f32
    %1 = vector.broadcast %cst_0 : f32 to vector<24x1xf32>
    %c0 = arith.constant 0 : index
    %c0_1 = arith.constant 0 : index
    %c0_2 = arith.constant 0 : index
    %2 = vector.load %arg0[%c0, %c0_1, %c0_2] : memref<2x4x256xf32, #tpu.memory_space<vmem>>, vector<1x4x256xf32>
    %3 = vector.shape_cast %2 : vector<1x4x256xf32> to vector<4x256xf32>
    %c0_3 = arith.constant 0 : index
    %c0_4 = arith.constant 0 : index
    %4 = vector.load %arg1[%c0_3, %c0_4] : memref<48x4xf32, #tpu.memory_space<vmem>>, vector<48x1xf32>
    %5 = vector.extract_strided_slice %3 {offsets = [0, 0], sizes = [1, 256], strides = [1, 1]} : vector<4x256xf32> to vector<1x256xf32>
    %6 = vector.broadcast %4 : vector<48x1xf32> to vector<48x256xf32>
    %7 = vector.broadcast %5 : vector<1x256xf32> to vector<48x256xf32>
    %8 = arith.mulf %6, %7 : vector<48x256xf32>
    %c0_5 = arith.constant 0 : index
    %c1 = arith.constant 1 : index
    %9 = vector.load %arg1[%c0_5, %c1] : memref<48x4xf32, #tpu.memory_space<vmem>>, vector<48x1xf32>
    %10 = vector.extract_strided_slice %3 {offsets = [1, 0], sizes = [1, 256], strides = [1, 1]} : vector<4x256xf32> to vector<1x256xf32>
    %11 = vector.broadcast %9 : vector<48x1xf32> to vector<48x256xf32>
    %12 = vector.broadcast %10 : vector<1x256xf32> to vector<48x256xf32>
    %13 = arith.mulf %11, %12 : vector<48x256xf32>
    %14 = arith.addf %8, %13 : vector<48x256xf32>
    %c0_6 = arith.constant 0 : index
    %c2 = arith.constant 2 : index
    %15 = vector.load %arg1[%c0_6, %c2] : memref<48x4xf32, #tpu.memory_space<vmem>>, vector<48x1xf32>
    %16 = vector.extract_strided_slice %3 {offsets = [2, 0], sizes = [1, 256], strides = [1, 1]} : vector<4x256xf32> to vector<1x256xf32>
    %17 = vector.broadcast %15 : vector<48x1xf32> to vector<48x256xf32>
    %18 = vector.broadcast %16 : vector<1x256xf32> to vector<48x256xf32>
    %19 = arith.mulf %17, %18 : vector<48x256xf32>
    %20 = arith.addf %14, %19 : vector<48x256xf32>
    %c0_7 = arith.constant 0 : index
    %c3 = arith.constant 3 : index
    %21 = vector.load %arg1[%c0_7, %c3] : memref<48x4xf32, #tpu.memory_space<vmem>>, vector<48x1xf32>
    %22 = vector.extract_strided_slice %3 {offsets = [3, 0], sizes = [1, 256], strides = [1, 1]} : vector<4x256xf32> to vector<1x256xf32>
    %23 = vector.broadcast %21 : vector<48x1xf32> to vector<48x256xf32>
    %24 = vector.broadcast %22 : vector<1x256xf32> to vector<48x256xf32>
    %25 = arith.mulf %23, %24 : vector<48x256xf32>
    %26 = arith.addf %20, %25 : vector<48x256xf32>
    %c0_8 = arith.constant 0 : index
    %c0_9 = arith.constant 0 : index
    %27 = vector.load %arg2[%c0_8, %c0_9] : memref<48x1xf32, #tpu.memory_space<vmem>>, vector<48x1xf32>
    %28 = vector.broadcast %27 : vector<48x1xf32> to vector<48x256xf32>
    %29 = arith.addf %26, %28 : vector<48x256xf32>
    %30 = vector.extract_strided_slice %29 {offsets = [0, 0], sizes = [24, 256], strides = [1, 1]} : vector<48x256xf32> to vector<24x256xf32>
    %cst_10 = arith.constant 0.000000e+00 : f32
    %31 = vector.broadcast %cst_10 : f32 to vector<24x256xf32>
    %32 = arith.maximumf %30, %31 : vector<24x256xf32>
    %c0_11 = arith.constant 0 : index
    %c0_12 = arith.constant 0 : index
    %c0_13 = arith.constant 0 : index
    %33 = vector.load %arg8[%c0_11, %c0_12, %c0_13] : memref<2x24x256xf32, #tpu.memory_space<vmem>>, vector<1x24x256xf32>
    %34 = vector.shape_cast %33 : vector<1x24x256xf32> to vector<24x256xf32>
    %35 = vector.shape_cast %32 : vector<24x256xf32> to vector<1x24x256xf32>
    tpu.vector_store %arg8[%c0_11, %c0_12, %c0_13], %35 {strides = array<i32>} : memref<2x24x256xf32, #tpu.memory_space<vmem>>, vector<1x24x256xf32>,
    %36 = vector.extract_strided_slice %29 {offsets = [24, 0], sizes = [24, 256], strides = [1, 1]} : vector<48x256xf32> to vector<24x256xf32>
    %c0_14 = arith.constant 0 : index
    %c0_15 = arith.constant 0 : index
    %c0_16 = arith.constant 0 : index
    %37 = vector.load %arg9[%c0_14, %c0_15, %c0_16] : memref<2x24x256xf32, #tpu.memory_space<vmem>>, vector<1x24x256xf32>
    %38 = vector.shape_cast %37 : vector<1x24x256xf32> to vector<24x256xf32>
    %39 = vector.shape_cast %36 : vector<24x256xf32> to vector<1x24x256xf32>
    tpu.vector_store %arg9[%c0_14, %c0_15, %c0_16], %39 {strides = array<i32>} : memref<2x24x256xf32, #tpu.memory_space<vmem>>, vector<1x24x256xf32>,
    %cst_17 = arith.constant dense<0.000000e+00> : vector<24xf32>
    %40 = vector.multi_reduction <add>, %32, %cst_17 [1] : vector<24x256xf32> to vector<24xf32>
    %41 = vector.shape_cast %40 : vector<24xf32> to vector<24x1xf32>
    %42 = arith.addf %0, %41 : vector<24x1xf32>
    %43 = arith.mulf %32, %32 : vector<24x256xf32>
    %cst_18 = arith.constant dense<0.000000e+00> : vector<24xf32>
    %44 = vector.multi_reduction <add>, %43, %cst_18 [1] : vector<24x256xf32> to vector<24xf32>
    %45 = vector.shape_cast %44 : vector<24xf32> to vector<24x1xf32>
    %46 = arith.addf %1, %45 : vector<24x1xf32>
    %c1_19 = arith.constant 1 : index
    %c0_20 = arith.constant 0 : index
    %c0_21 = arith.constant 0 : index
    %47 = vector.load %arg0[%c1_19, %c0_20, %c0_21] : memref<2x4x256xf32, #tpu.memory_space<vmem>>, vector<1x4x256xf32>
    %48 = vector.shape_cast %47 : vector<1x4x256xf32> to vector<4x256xf32>
    %c0_22 = arith.constant 0 : index
    %c0_23 = arith.constant 0 : index
    %49 = vector.load %arg1[%c0_22, %c0_23] : memref<48x4xf32, #tpu.memory_space<vmem>>, vector<48x1xf32>
    %50 = vector.extract_strided_slice %48 {offsets = [0, 0], sizes = [1, 256], strides = [1, 1]} : vector<4x256xf32> to vector<1x256xf32>
    %51 = vector.broadcast %49 : vector<48x1xf32> to vector<48x256xf32>
    %52 = vector.broadcast %50 : vector<1x256xf32> to vector<48x256xf32>
    %53 = arith.mulf %51, %52 : vector<48x256xf32>
    %c0_24 = arith.constant 0 : index
    %c1_25 = arith.constant 1 : index
    %54 = vector.load %arg1[%c0_24, %c1_25] : memref<48x4xf32, #tpu.memory_space<vmem>>, vector<48x1xf32>
    %55 = vector.extract_strided_slice %48 {offsets = [1, 0], sizes = [1, 256], strides = [1, 1]} : vector<4x256xf32> to vector<1x256xf32>
    %56 = vector.broadcast %54 : vector<48x1xf32> to vector<48x256xf32>
    %57 = vector.broadcast %55 : vector<1x256xf32> to vector<48x256xf32>
    %58 = arith.mulf %56, %57 : vector<48x256xf32>
    %59 = arith.addf %53, %58 : vector<48x256xf32>
    %c0_26 = arith.constant 0 : index
    %c2_27 = arith.constant 2 : index
    %60 = vector.load %arg1[%c0_26, %c2_27] : memref<48x4xf32, #tpu.memory_space<vmem>>, vector<48x1xf32>
    %61 = vector.extract_strided_slice %48 {offsets = [2, 0], sizes = [1, 256], strides = [1, 1]} : vector<4x256xf32> to vector<1x256xf32>
    %62 = vector.broadcast %60 : vector<48x1xf32> to vector<48x256xf32>
    %63 = vector.broadcast %61 : vector<1x256xf32> to vector<48x256xf32>
    %64 = arith.mulf %62, %63 : vector<48x256xf32>
    %65 = arith.addf %59, %64 : vector<48x256xf32>
    %c0_28 = arith.constant 0 : index
    %c3_29 = arith.constant 3 : index
    %66 = vector.load %arg1[%c0_28, %c3_29] : memref<48x4xf32, #tpu.memory_space<vmem>>, vector<48x1xf32>
    %67 = vector.extract_strided_slice %48 {offsets = [3, 0], sizes = [1, 256], strides = [1, 1]} : vector<4x256xf32> to vector<1x256xf32>
    %68 = vector.broadcast %66 : vector<48x1xf32> to vector<48x256xf32>
    %69 = vector.broadcast %67 : vector<1x256xf32> to vector<48x256xf32>
    %70 = arith.mulf %68, %69 : vector<48x256xf32>
    %71 = arith.addf %65, %70 : vector<48x256xf32>
    %c0_30 = arith.constant 0 : index
    %c0_31 = arith.constant 0 : index
    %72 = vector.load %arg2[%c0_30, %c0_31] : memref<48x1xf32, #tpu.memory_space<vmem>>, vector<48x1xf32>
    %73 = vector.broadcast %72 : vector<48x1xf32> to vector<48x256xf32>
    %74 = arith.addf %71, %73 : vector<48x256xf32>
    %75 = vector.extract_strided_slice %74 {offsets = [0, 0], sizes = [24, 256], strides = [1, 1]} : vector<48x256xf32> to vector<24x256xf32>
    %cst_32 = arith.constant 0.000000e+00 : f32
    %76 = vector.broadcast %cst_32 : f32 to vector<24x256xf32>
    %77 = arith.maximumf %75, %76 : vector<24x256xf32>
    %c1_33 = arith.constant 1 : index
    %c0_34 = arith.constant 0 : index
    %c0_35 = arith.constant 0 : index
    %78 = vector.load %arg8[%c1_33, %c0_34, %c0_35] : memref<2x24x256xf32, #tpu.memory_space<vmem>>, vector<1x24x256xf32>
    %79 = vector.shape_cast %78 : vector<1x24x256xf32> to vector<24x256xf32>
    %80 = vector.shape_cast %77 : vector<24x256xf32> to vector<1x24x256xf32>
    tpu.vector_store %arg8[%c1_33, %c0_34, %c0_35], %80 {strides = array<i32>} : memref<2x24x256xf32, #tpu.memory_space<vmem>>, vector<1x24x256xf32>,
    %81 = vector.extract_strided_slice %74 {offsets = [24, 0], sizes = [24, 256], strides = [1, 1]} : vector<48x256xf32> to vector<24x256xf32>
    %c1_36 = arith.constant 1 : index
    %c0_37 = arith.constant 0 : index
    %c0_38 = arith.constant 0 : index
    %82 = vector.load %arg9[%c1_36, %c0_37, %c0_38] : memref<2x24x256xf32, #tpu.memory_space<vmem>>, vector<1x24x256xf32>
    %83 = vector.shape_cast %82 : vector<1x24x256xf32> to vector<24x256xf32>
    %84 = vector.shape_cast %81 : vector<24x256xf32> to vector<1x24x256xf32>
    tpu.vector_store %arg9[%c1_36, %c0_37, %c0_38], %84 {strides = array<i32>} : memref<2x24x256xf32, #tpu.memory_space<vmem>>, vector<1x24x256xf32>,
    %cst_39 = arith.constant dense<0.000000e+00> : vector<24xf32>
    %85 = vector.multi_reduction <add>, %77, %cst_39 [1] : vector<24x256xf32> to vector<24xf32>
    %86 = vector.shape_cast %85 : vector<24xf32> to vector<24x1xf32>
    %87 = arith.addf %42, %86 : vector<24x1xf32>
    %88 = arith.mulf %77, %77 : vector<24x256xf32>
    %cst_40 = arith.constant dense<0.000000e+00> : vector<24xf32>
    %89 = vector.multi_reduction <add>, %88, %cst_40 [1] : vector<24x256xf32> to vector<24xf32>
    %90 = vector.shape_cast %89 : vector<24xf32> to vector<24x1xf32>
    %91 = arith.addf %46, %90 : vector<24x1xf32>
    %cst_41 = arith.constant 0.001953125 : f32
    %92 = vector.broadcast %cst_41 : f32 to vector<24x1xf32>
    %93 = arith.mulf %87, %92 : vector<24x1xf32>
    %cst_42 = arith.constant 0.001953125 : f32
    %94 = vector.broadcast %cst_42 : f32 to vector<24x1xf32>
    %95 = arith.mulf %91, %94 : vector<24x1xf32>
    %96 = arith.mulf %93, %93 : vector<24x1xf32>
    %97 = arith.subf %95, %96 : vector<24x1xf32>
    %cst_43 = arith.constant 0.000000e+00 : f32
    %98 = vector.broadcast %cst_43 : f32 to vector<24x1xf32>
    %99 = arith.maximumf %97, %98 : vector<24x1xf32>
    %c0_44 = arith.constant 0 : index
    %c0_45 = arith.constant 0 : index
    %100 = vector.load %arg3[%c0_44, %c0_45] : memref<24x1xf32, #tpu.memory_space<vmem>>, vector<24x1xf32>
    %cst_46 = arith.constant 9.99999974E-6 : f32
    %101 = vector.broadcast %cst_46 : f32 to vector<24x1xf32>
    %102 = arith.addf %99, %101 : vector<24x1xf32>
    %103 = math.rsqrt %102 : vector<24x1xf32>
    %104 = arith.mulf %100, %103 : vector<24x1xf32>
    %c0_47 = arith.constant 0 : index
    %c0_48 = arith.constant 0 : index
    %105 = vector.load %arg4[%c0_47, %c0_48] : memref<24x1xf32, #tpu.memory_space<vmem>>, vector<24x1xf32>
    %106 = arith.mulf %93, %104 : vector<24x1xf32>
    %107 = arith.subf %105, %106 : vector<24x1xf32>
    %108 = tpu.iota {dimensions = array<i32: 1>} : vector<1x256xi32>
    %c16_i32 = arith.constant 16 : i32
    %c0_i32 = arith.constant 0 : i32
    %109 = arith.cmpi eq, %c16_i32, %c0_i32 : i32
    %c1_i32 = arith.constant 1 : i32
    %110 = arith.select %109, %c1_i32, %c16_i32 : i32
    %111 = vector.broadcast %110 : i32 to vector<1x256xi32>
    %112 = arith.remsi %108, %111 : vector<1x256xi32>
    %c0_i32_49 = arith.constant 0 : i32
    %113 = vector.broadcast %c0_i32_49 : i32 to vector<1x256xi32>
    %114 = arith.cmpi ne, %112, %113 : vector<1x256xi32>
    %c0_i32_50 = arith.constant 0 : i32
    %115 = vector.broadcast %c0_i32_50 : i32 to vector<1x256xi32>
    %116 = arith.cmpi slt, %112, %115 : vector<1x256xi32>
    %c0_i32_51 = arith.constant 0 : i32
    %117 = arith.cmpi slt, %110, %c0_i32_51 : i32
    %118 = vector.broadcast %117 : i1 to vector<1x256xi1>
    %119 = vector.broadcast %118 : vector<1x256xi1> to vector<1x256xi1>
    %120 = arith.xori %116, %119 : vector<1x256xi1>
    %121 = arith.andi %120, %114 : vector<1x256xi1>
    %122 = vector.broadcast %110 : i32 to vector<1x256xi32>
    %123 = arith.addi %112, %122 : vector<1x256xi32>
    %124 = arith.select %121, %123, %112 : vector<1x256xi1>, vector<1x256xi32>
    %c1_i32_52 = arith.constant 1 : i32
    %125 = vector.broadcast %c1_i32_52 : i32 to vector<1x256xi32>
    %126 = arith.cmpi sge, %124, %125 : vector<1x256xi32>
    %127 = arith.extui %126 : vector<1x256xi1> to vector<1x256xi32>
    %128 = arith.sitofp %127 : vector<1x256xi32> to vector<1x256xf32>
    %c15_i32 = arith.constant 15 : i32
    %129 = vector.broadcast %c15_i32 : i32 to vector<1x256xi32>
    %130 = arith.cmpi slt, %124, %129 : vector<1x256xi32>
    %131 = arith.extui %130 : vector<1x256xi1> to vector<1x256xi32>
    %132 = arith.sitofp %131 : vector<1x256xi32> to vector<1x256xf32>
    %cst_53 = arith.constant 0.000000e+00 : f32
    %133 = vector.broadcast %cst_53 : f32 to vector<32x512xf32>
    %c0_54 = arith.constant 0 : index
    %c0_55 = arith.constant 0 : index
    %134 = vector.load %arg10[%c0_54, %c0_55] : memref<32x512xf32, #tpu.memory_space<vmem>>, vector<32x512xf32>
    tpu.vector_store %arg10[%c0_54, %c0_55], %133 {strides = array<i32>} : memref<32x512xf32, #tpu.memory_space<vmem>>, vector<32x512xf32>,
    %c0_56 = arith.constant 0 : index
    %c0_57 = arith.constant 0 : index
    %c0_58 = arith.constant 0 : index
    %135 = vector.load %arg8[%c0_56, %c0_57, %c0_58] : memref<2x24x256xf32, #tpu.memory_space<vmem>>, vector<1x24x256xf32>
    %136 = vector.shape_cast %135 : vector<1x24x256xf32> to vector<24x256xf32>
    %137 = vector.broadcast %104 : vector<24x1xf32> to vector<24x256xf32>
    %138 = arith.mulf %136, %137 : vector<24x256xf32>
    %139 = vector.broadcast %107 : vector<24x1xf32> to vector<24x256xf32>
    %140 = arith.addf %138, %139 : vector<24x256xf32>
    %c0_59 = arith.constant 0 : index
    %c128 = arith.constant 128 : index
    %141 = vector.load %arg10[%c0_59, %c128] : memref<32x512xf32, #tpu.memory_space<vmem>>, vector<24x256xf32>
    tpu.vector_store %arg10[%c0_59, %c128], %140 {strides = array<i32>} : memref<32x512xf32, #tpu.memory_space<vmem>>, vector<24x256xf32>,
    %c0_60 = arith.constant 0 : index
    %c111 = arith.constant 111 : index
    %142 = vector.load %arg10[%c0_60, %c111] : memref<32x512xf32, #tpu.memory_space<vmem>>, vector<32x256xf32>
    %143 = vector.broadcast %128 : vector<1x256xf32> to vector<32x256xf32>
    %144 = arith.mulf %142, %143 : vector<32x256xf32>
    %145 = arith.truncf %144 : vector<32x256xf32> to vector<32x256xbf16>
    %c0_61 = arith.constant 0 : index
    %c0_62 = arith.constant 0 : index
    %146 = vector.load %arg11[%c0_61, %c0_62] : memref<288x256xbf16, #tpu.memory_space<vmem>>, vector<32x256xbf16>
    tpu.vector_store %arg11[%c0_61, %c0_62], %145 {strides = array<i32>} : memref<288x256xbf16, #tpu.memory_space<vmem>>, vector<32x256xbf16>,
    %c0_63 = arith.constant 0 : index
    %c112 = arith.constant 112 : index
    %147 = vector.load %arg10[%c0_63, %c112] : memref<32x512xf32, #tpu.memory_space<vmem>>, vector<32x256xf32>
    %148 = arith.truncf %147 : vector<32x256xf32> to vector<32x256xbf16>
    %c32 = arith.constant 32 : index
    %c0_64 = arith.constant 0 : index
    %149 = vector.load %arg11[%c32, %c0_64] : memref<288x256xbf16, #tpu.memory_space<vmem>>, vector<32x256xbf16>
    tpu.vector_store %arg11[%c32, %c0_64], %148 {strides = array<i32>} : memref<288x256xbf16, #tpu.memory_space<vmem>>, vector<32x256xbf16>,
    %c0_65 = arith.constant 0 : index
    %c113 = arith.constant 113 : index
    %150 = vector.load %arg10[%c0_65, %c113] : memref<32x512xf32, #tpu.memory_space<vmem>>, vector<32x256xf32>
    %151 = vector.broadcast %132 : vector<1x256xf32> to vector<32x256xf32>
    %152 = arith.mulf %150, %151 : vector<32x256xf32>
    %153 = arith.truncf %152 : vector<32x256xf32> to vector<32x256xbf16>
    %c64 = arith.constant 64 : index
    %c0_66 = arith.constant 0 : index
    %154 = vector.load %arg11[%c64, %c0_66] : memref<288x256xbf16, #tpu.memory_space<vmem>>, vector<32x256xbf16>
    tpu.vector_store %arg11[%c64, %c0_66], %153 {strides = array<i32>} : memref<288x256xbf16, #tpu.memory_space<vmem>>, vector<32x256xbf16>,
    %c0_67 = arith.constant 0 : index
    %c127 = arith.constant 127 : index
    %155 = vector.load %arg10[%c0_67, %c127] : memref<32x512xf32, #tpu.memory_space<vmem>>, vector<32x256xf32>
    %156 = vector.broadcast %128 : vector<1x256xf32> to vector<32x256xf32>
    %157 = arith.mulf %155, %156 : vector<32x256xf32>
    %158 = arith.truncf %157 : vector<32x256xf32> to vector<32x256xbf16>
    %c96 = arith.constant 96 : index
    %c0_68 = arith.constant 0 : index
    %159 = vector.load %arg11[%c96, %c0_68] : memref<288x256xbf16, #tpu.memory_space<vmem>>, vector<32x256xbf16>
    tpu.vector_store %arg11[%c96, %c0_68], %158 {strides = array<i32>} : memref<288x256xbf16, #tpu.memory_space<vmem>>, vector<32x256xbf16>,
    %c0_69 = arith.constant 0 : index
    %c128_70 = arith.constant 128 : index
    %160 = vector.load %arg10[%c0_69, %c128_70] : memref<32x512xf32, #tpu.memory_space<vmem>>, vector<32x256xf32>
    %161 = arith.truncf %160 : vector<32x256xf32> to vector<32x256xbf16>
    %c128_71 = arith.constant 128 : index
    %c0_72 = arith.constant 0 : index
    %162 = vector.load %arg11[%c128_71, %c0_72] : memref<288x256xbf16, #tpu.memory_space<vmem>>, vector<32x256xbf16>
    tpu.vector_store %arg11[%c128_71, %c0_72], %161 {strides = array<i32>} : memref<288x256xbf16, #tpu.memory_space<vmem>>, vector<32x256xbf16>,
    %c0_73 = arith.constant 0 : index
    %c129 = arith.constant 129 : index
    %163 = vector.load %arg10[%c0_73, %c129] : memref<32x512xf32, #tpu.memory_space<vmem>>, vector<32x256xf32>
    %164 = vector.broadcast %132 : vector<1x256xf32> to vector<32x256xf32>
    %165 = arith.mulf %163, %164 : vector<32x256xf32>
    %166 = arith.truncf %165 : vector<32x256xf32> to vector<32x256xbf16>
    %c160 = arith.constant 160 : index
    %c0_74 = arith.constant 0 : index
    %167 = vector.load %arg11[%c160, %c0_74] : memref<288x256xbf16, #tpu.memory_space<vmem>>, vector<32x256xbf16>
    tpu.vector_store %arg11[%c160, %c0_74], %166 {strides = array<i32>} : memref<288x256xbf16, #tpu.memory_space<vmem>>, vector<32x256xbf16>,
    %c0_75 = arith.constant 0 : index
    %c143 = arith.constant 143 : index
    %168 = vector.load %arg10[%c0_75, %c143] : memref<32x512xf32, #tpu.memory_space<vmem>>, vector<32x256xf32>
    %169 = vector.broadcast %128 : vector<1x256xf32> to vector<32x256xf32>
    %170 = arith.mulf %168, %169 : vector<32x256xf32>
    %171 = arith.truncf %170 : vector<32x256xf32> to vector<32x256xbf16>
    %c192 = arith.constant 192 : index
    %c0_76 = arith.constant 0 : index
    %172 = vector.load %arg11[%c192, %c0_76] : memref<288x256xbf16, #tpu.memory_space<vmem>>, vector<32x256xbf16>
    tpu.vector_store %arg11[%c192, %c0_76], %171 {strides = array<i32>} : memref<288x256xbf16, #tpu.memory_space<vmem>>, vector<32x256xbf16>,
    %c0_77 = arith.constant 0 : index
    %c144 = arith.constant 144 : index
    %173 = vector.load %arg10[%c0_77, %c144] : memref<32x512xf32, #tpu.memory_space<vmem>>, vector<32x256xf32>
    %174 = arith.truncf %173 : vector<32x256xf32> to vector<32x256xbf16>
    %c224 = arith.constant 224 : index
    %c0_78 = arith.constant 0 : index
    %175 = vector.load %arg11[%c224, %c0_78] : memref<288x256xbf16, #tpu.memory_space<vmem>>, vector<32x256xbf16>
    tpu.vector_store %arg11[%c224, %c0_78], %174 {strides = array<i32>} : memref<288x256xbf16, #tpu.memory_space<vmem>>, vector<32x256xbf16>,
    %c0_79 = arith.constant 0 : index
    %c145 = arith.constant 145 : index
    %176 = vector.load %arg10[%c0_79, %c145] : memref<32x512xf32, #tpu.memory_space<vmem>>, vector<32x256xf32>
    %177 = vector.broadcast %132 : vector<1x256xf32> to vector<32x256xf32>
    %178 = arith.mulf %176, %177 : vector<32x256xf32>
    %179 = arith.truncf %178 : vector<32x256xf32> to vector<32x256xbf16>
    %c256 = arith.constant 256 : index
    %c0_80 = arith.constant 0 : index
    %180 = vector.load %arg11[%c256, %c0_80] : memref<288x256xbf16, #tpu.memory_space<vmem>>, vector<32x256xbf16>
    tpu.vector_store %arg11[%c256, %c0_80], %179 {strides = array<i32>} : memref<288x256xbf16, #tpu.memory_space<vmem>>, vector<32x256xbf16>,
    %c0_81 = arith.constant 0 : index
    %c0_82 = arith.constant 0 : index
    %181 = vector.load %arg5[%c0_81, %c0_82] : memref<32x288xbf16, #tpu.memory_space<vmem>>, vector<32x288xbf16>
    %c0_83 = arith.constant 0 : index
    %c0_84 = arith.constant 0 : index
    %182 = vector.load %arg11[%c0_83, %c0_84] : memref<288x256xbf16, #tpu.memory_space<vmem>>, vector<288x256xbf16>
    %cst_85 = arith.constant dense<0.000000e+00> : vector<32x256xf32>
    %183 = tpu.matmul %181, %182, %cst_85 {dimension_numbers = #tpu.dot_dimension_numbers<[1], [0], [0], [1], [0, 0, 1, 1], [], []>} : vector<32x288xbf16>, vector<288x256xbf16>, vector<32x256xf32> -> vector<32x256xf32>
    %184 = vector.extract_strided_slice %183 {offsets = [0, 0], sizes = [24, 256], strides = [1, 1]} : vector<32x256xf32> to vector<24x256xf32>
    %c0_86 = arith.constant 0 : index
    %c0_87 = arith.constant 0 : index
    %185 = vector.load %arg6[%c0_86, %c0_87] : memref<24x1xf32, #tpu.memory_space<vmem>>, vector<24x1xf32>
    %186 = vector.broadcast %185 : vector<24x1xf32> to vector<24x256xf32>
    %187 = arith.addf %184, %186 : vector<24x256xf32>
    %cst_88 = arith.constant 0.000000e+00 : f32
    %188 = vector.broadcast %cst_88 : f32 to vector<24x256xf32>
    %189 = arith.maximumf %187, %188 : vector<24x256xf32>
    %c0_89 = arith.constant 0 : index
    %c0_90 = arith.constant 0 : index
    %c0_91 = arith.constant 0 : index
    %190 = vector.load %arg9[%c0_89, %c0_90, %c0_91] : memref<2x24x256xf32, #tpu.memory_space<vmem>>, vector<1x24x256xf32>
    %191 = vector.shape_cast %190 : vector<1x24x256xf32> to vector<24x256xf32>
    %192 = arith.addf %189, %191 : vector<24x256xf32>
    %c0_92 = arith.constant 0 : index
    %c0_93 = arith.constant 0 : index
    %c0_94 = arith.constant 0 : index
    %193 = vector.load %arg7[%c0_92, %c0_93, %c0_94] : memref<2x24x256xf32, #tpu.memory_space<vmem>>, vector<1x24x256xf32>
    %194 = vector.shape_cast %193 : vector<1x24x256xf32> to vector<24x256xf32>
    %195 = vector.shape_cast %192 : vector<24x256xf32> to vector<1x24x256xf32>
    tpu.vector_store %arg7[%c0_92, %c0_93, %c0_94], %195 {strides = array<i32>} : memref<2x24x256xf32, #tpu.memory_space<vmem>>, vector<1x24x256xf32>,
    %c1_95 = arith.constant 1 : index
    %c0_96 = arith.constant 0 : index
    %c0_97 = arith.constant 0 : index
    %196 = vector.load %arg8[%c1_95, %c0_96, %c0_97] : memref<2x24x256xf32, #tpu.memory_space<vmem>>, vector<1x24x256xf32>
    %197 = vector.shape_cast %196 : vector<1x24x256xf32> to vector<24x256xf32>
    %198 = vector.broadcast %104 : vector<24x1xf32> to vector<24x256xf32>
    %199 = arith.mulf %197, %198 : vector<24x256xf32>
    %200 = vector.broadcast %107 : vector<24x1xf32> to vector<24x256xf32>
    %201 = arith.addf %199, %200 : vector<24x256xf32>
    %c0_98 = arith.constant 0 : index
    %c128_99 = arith.constant 128 : index
    %202 = vector.load %arg10[%c0_98, %c128_99] : memref<32x512xf32, #tpu.memory_space<vmem>>, vector<24x256xf32>
    tpu.vector_store %arg10[%c0_98, %c128_99], %201 {strides = array<i32>} : memref<32x512xf32, #tpu.memory_space<vmem>>, vector<24x256xf32>,
    %c0_100 = arith.constant 0 : index
    %c111_101 = arith.constant 111 : index
    %203 = vector.load %arg10[%c0_100, %c111_101] : memref<32x512xf32, #tpu.memory_space<vmem>>, vector<32x256xf32>
    %204 = vector.broadcast %128 : vector<1x256xf32> to vector<32x256xf32>
    %205 = arith.mulf %203, %204 : vector<32x256xf32>
    %206 = arith.truncf %205 : vector<32x256xf32> to vector<32x256xbf16>
    %c0_102 = arith.constant 0 : index
    %c0_103 = arith.constant 0 : index
    %207 = vector.load %arg11[%c0_102, %c0_103] : memref<288x256xbf16, #tpu.memory_space<vmem>>, vector<32x256xbf16>
    tpu.vector_store %arg11[%c0_102, %c0_103], %206 {strides = array<i32>} : memref<288x256xbf16, #tpu.memory_space<vmem>>, vector<32x256xbf16>,
    %c0_104 = arith.constant 0 : index
    %c112_105 = arith.constant 112 : index
    %208 = vector.load %arg10[%c0_104, %c112_105] : memref<32x512xf32, #tpu.memory_space<vmem>>, vector<32x256xf32>
    %209 = arith.truncf %208 : vector<32x256xf32> to vector<32x256xbf16>
    %c32_106 = arith.constant 32 : index
    %c0_107 = arith.constant 0 : index
    %210 = vector.load %arg11[%c32_106, %c0_107] : memref<288x256xbf16, #tpu.memory_space<vmem>>, vector<32x256xbf16>
    tpu.vector_store %arg11[%c32_106, %c0_107], %209 {strides = array<i32>} : memref<288x256xbf16, #tpu.memory_space<vmem>>, vector<32x256xbf16>,
    %c0_108 = arith.constant 0 : index
    %c113_109 = arith.constant 113 : index
    %211 = vector.load %arg10[%c0_108, %c113_109] : memref<32x512xf32, #tpu.memory_space<vmem>>, vector<32x256xf32>
    %212 = vector.broadcast %132 : vector<1x256xf32> to vector<32x256xf32>
    %213 = arith.mulf %211, %212 : vector<32x256xf32>
    %214 = arith.truncf %213 : vector<32x256xf32> to vector<32x256xbf16>
    %c64_110 = arith.constant 64 : index
    %c0_111 = arith.constant 0 : index
    %215 = vector.load %arg11[%c64_110, %c0_111] : memref<288x256xbf16, #tpu.memory_space<vmem>>, vector<32x256xbf16>
    tpu.vector_store %arg11[%c64_110, %c0_111], %214 {strides = array<i32>} : memref<288x256xbf16, #tpu.memory_space<vmem>>, vector<32x256xbf16>,
    %c0_112 = arith.constant 0 : index
    %c127_113 = arith.constant 127 : index
    %216 = vector.load %arg10[%c0_112, %c127_113] : memref<32x512xf32, #tpu.memory_space<vmem>>, vector<32x256xf32>
    %217 = vector.broadcast %128 : vector<1x256xf32> to vector<32x256xf32>
    %218 = arith.mulf %216, %217 : vector<32x256xf32>
    %219 = arith.truncf %218 : vector<32x256xf32> to vector<32x256xbf16>
    %c96_114 = arith.constant 96 : index
    %c0_115 = arith.constant 0 : index
    %220 = vector.load %arg11[%c96_114, %c0_115] : memref<288x256xbf16, #tpu.memory_space<vmem>>, vector<32x256xbf16>
    tpu.vector_store %arg11[%c96_114, %c0_115], %219 {strides = array<i32>} : memref<288x256xbf16, #tpu.memory_space<vmem>>, vector<32x256xbf16>,
    %c0_116 = arith.constant 0 : index
    %c128_117 = arith.constant 128 : index
    %221 = vector.load %arg10[%c0_116, %c128_117] : memref<32x512xf32, #tpu.memory_space<vmem>>, vector<32x256xf32>
    %222 = arith.truncf %221 : vector<32x256xf32> to vector<32x256xbf16>
    %c128_118 = arith.constant 128 : index
    %c0_119 = arith.constant 0 : index
    %223 = vector.load %arg11[%c128_118, %c0_119] : memref<288x256xbf16, #tpu.memory_space<vmem>>, vector<32x256xbf16>
    tpu.vector_store %arg11[%c128_118, %c0_119], %222 {strides = array<i32>} : memref<288x256xbf16, #tpu.memory_space<vmem>>, vector<32x256xbf16>,
    %c0_120 = arith.constant 0 : index
    %c129_121 = arith.constant 129 : index
    %224 = vector.load %arg10[%c0_120, %c129_121] : memref<32x512xf32, #tpu.memory_space<vmem>>, vector<32x256xf32>
    %225 = vector.broadcast %132 : vector<1x256xf32> to vector<32x256xf32>
    %226 = arith.mulf %224, %225 : vector<32x256xf32>
    %227 = arith.truncf %226 : vector<32x256xf32> to vector<32x256xbf16>
    %c160_122 = arith.constant 160 : index
    %c0_123 = arith.constant 0 : index
    %228 = vector.load %arg11[%c160_122, %c0_123] : memref<288x256xbf16, #tpu.memory_space<vmem>>, vector<32x256xbf16>
    tpu.vector_store %arg11[%c160_122, %c0_123], %227 {strides = array<i32>} : memref<288x256xbf16, #tpu.memory_space<vmem>>, vector<32x256xbf16>,
    %c0_124 = arith.constant 0 : index
    %c143_125 = arith.constant 143 : index
    %229 = vector.load %arg10[%c0_124, %c143_125] : memref<32x512xf32, #tpu.memory_space<vmem>>, vector<32x256xf32>
    %230 = vector.broadcast %128 : vector<1x256xf32> to vector<32x256xf32>
    %231 = arith.mulf %229, %230 : vector<32x256xf32>
    %232 = arith.truncf %231 : vector<32x256xf32> to vector<32x256xbf16>
    %c192_126 = arith.constant 192 : index
    %c0_127 = arith.constant 0 : index
    %233 = vector.load %arg11[%c192_126, %c0_127] : memref<288x256xbf16, #tpu.memory_space<vmem>>, vector<32x256xbf16>
    tpu.vector_store %arg11[%c192_126, %c0_127], %232 {strides = array<i32>} : memref<288x256xbf16, #tpu.memory_space<vmem>>, vector<32x256xbf16>,
    %c0_128 = arith.constant 0 : index
    %c144_129 = arith.constant 144 : index
    %234 = vector.load %arg10[%c0_128, %c144_129] : memref<32x512xf32, #tpu.memory_space<vmem>>, vector<32x256xf32>
    %235 = arith.truncf %234 : vector<32x256xf32> to vector<32x256xbf16>
    %c224_130 = arith.constant 224 : index
    %c0_131 = arith.constant 0 : index
    %236 = vector.load %arg11[%c224_130, %c0_131] : memref<288x256xbf16, #tpu.memory_space<vmem>>, vector<32x256xbf16>
    tpu.vector_store %arg11[%c224_130, %c0_131], %235 {strides = array<i32>} : memref<288x256xbf16, #tpu.memory_space<vmem>>, vector<32x256xbf16>,
    %c0_132 = arith.constant 0 : index
    %c145_133 = arith.constant 145 : index
    %237 = vector.load %arg10[%c0_132, %c145_133] : memref<32x512xf32, #tpu.memory_space<vmem>>, vector<32x256xf32>
    %238 = vector.broadcast %132 : vector<1x256xf32> to vector<32x256xf32>
    %239 = arith.mulf %237, %238 : vector<32x256xf32>
    %240 = arith.truncf %239 : vector<32x256xf32> to vector<32x256xbf16>
    %c256_134 = arith.constant 256 : index
    %c0_135 = arith.constant 0 : index
    %241 = vector.load %arg11[%c256_134, %c0_135] : memref<288x256xbf16, #tpu.memory_space<vmem>>, vector<32x256xbf16>
    tpu.vector_store %arg11[%c256_134, %c0_135], %240 {strides = array<i32>} : memref<288x256xbf16, #tpu.memory_space<vmem>>, vector<32x256xbf16>,
    %c0_136 = arith.constant 0 : index
    %c0_137 = arith.constant 0 : index
    %242 = vector.load %arg5[%c0_136, %c0_137] : memref<32x288xbf16, #tpu.memory_space<vmem>>, vector<32x288xbf16>
    %c0_138 = arith.constant 0 : index
    %c0_139 = arith.constant 0 : index
    %243 = vector.load %arg11[%c0_138, %c0_139] : memref<288x256xbf16, #tpu.memory_space<vmem>>, vector<288x256xbf16>
    %cst_140 = arith.constant dense<0.000000e+00> : vector<32x256xf32>
    %244 = tpu.matmul %242, %243, %cst_140 {dimension_numbers = #tpu.dot_dimension_numbers<[1], [0], [0], [1], [0, 0, 1, 1], [], []>} : vector<32x288xbf16>, vector<288x256xbf16>, vector<32x256xf32> -> vector<32x256xf32>
    %245 = vector.extract_strided_slice %244 {offsets = [0, 0], sizes = [24, 256], strides = [1, 1]} : vector<32x256xf32> to vector<24x256xf32>
    %c0_141 = arith.constant 0 : index
    %c0_142 = arith.constant 0 : index
    %246 = vector.load %arg6[%c0_141, %c0_142] : memref<24x1xf32, #tpu.memory_space<vmem>>, vector<24x1xf32>
    %247 = vector.broadcast %246 : vector<24x1xf32> to vector<24x256xf32>
    %248 = arith.addf %245, %247 : vector<24x256xf32>
    %cst_143 = arith.constant 0.000000e+00 : f32
    %249 = vector.broadcast %cst_143 : f32 to vector<24x256xf32>
    %250 = arith.maximumf %248, %249 : vector<24x256xf32>
    %c1_144 = arith.constant 1 : index
    %c0_145 = arith.constant 0 : index
    %c0_146 = arith.constant 0 : index
    %251 = vector.load %arg9[%c1_144, %c0_145, %c0_146] : memref<2x24x256xf32, #tpu.memory_space<vmem>>, vector<1x24x256xf32>
    %252 = vector.shape_cast %251 : vector<1x24x256xf32> to vector<24x256xf32>
    %253 = arith.addf %250, %252 : vector<24x256xf32>
    %c1_147 = arith.constant 1 : index
    %c0_148 = arith.constant 0 : index
    %c0_149 = arith.constant 0 : index
    %254 = vector.load %arg7[%c1_147, %c0_148, %c0_149] : memref<2x24x256xf32, #tpu.memory_space<vmem>>, vector<1x24x256xf32>
    %255 = vector.shape_cast %254 : vector<1x24x256xf32> to vector<24x256xf32>
    %256 = vector.shape_cast %253 : vector<24x256xf32> to vector<1x24x256xf32>
    tpu.vector_store %arg7[%c1_147, %c0_148, %c0_149], %256 {strides = array<i32>} : memref<2x24x256xf32, #tpu.memory_space<vmem>>, vector<1x24x256xf32>,
    return
  }
}

</mosaic_0001>

<llo_original>
// kernel: tpu_custom_call.1
$region0: #{tpu_custom_call.1}
  #allocation0 [shape = 'u32[]', space=smem, size = 0x4, offset = 0x4, fixed_abs, tag = 'smem constant byte address 0x4 - core index']
  #allocation1 [shape = 'u32[144,128]{1,0:T(1,128)}', space=vmem, size = 0x12000, scoped, tag = 'internal scratch']
  #allocation2 [shape = 'f32[2,24,256]{2,1,0:T(8,128)}', space=vmem, size = 0xc000, scoped, tag = 'scratch operand']
  #allocation3 [shape = 'f32[2,24,256]{2,1,0:T(8,128)}', space=vmem, size = 0xc000, scoped, tag = 'scratch operand']
  #allocation4 [shape = 'f32[32,512]{1,0:T(8,128)}', space=vmem, size = 0x10000, scoped, tag = 'scratch operand']
  #allocation5 [shape = 'bf16[288,256]{1,0:T(8,128)(2,1)}', space=vmem, size = 0x24000, scoped, tag = 'scratch operand']
  %s0 = inlined_call_operand.vmem [shape: f32[2,4,256], index: 0, kind: input, shape index: {}]
  %s1 = inlined_call_operand.vmem [shape: f32[48,4], index: 1, kind: input, shape index: {}]
  %s2 = inlined_call_operand.vmem [shape: f32[48,1], index: 2, kind: input, shape index: {}]
  %s3 = inlined_call_operand.vmem [shape: f32[24,1], index: 3, kind: input, shape index: {}]
  %s4 = inlined_call_operand.vmem [shape: f32[24,1], index: 4, kind: input, shape index: {}]
  %s5 = inlined_call_operand.vmem [shape: bf16[32,288], index: 5, kind: input, shape index: {}]
  %s6 = inlined_call_operand.vmem [shape: f32[24,1], index: 6, kind: input, shape index: {}]
  %s7 = inlined_call_operand.hbm [shape: f32[2,24,256], index: 7, kind: output, shape index: {}]
  %s8 = sld [smem:[#allocation0]]
  $region38: #{tpu_custom_call.1} parent=0
    _
  %s10 = ssub.s32 1, %s8
  %s11 = scalar_select 0, %s10, %s8
  $region1: #{tpu_custom_call.1} parent=0
    #allocation6 [shape = 'u8[49152]{0}', space=vmem, size = 0xc000, scoped, tag = 'output window, operand 0, single buffered']
    #allocation7 [shape = 's32[1]{0}', space=sflag, size = 0x4, scoped, tag = 'scoped memory for tpu_custom_call.1']
    %12 = vsyncpa [#allocation7], 0
    // Predicated region
    $region2: #{tpu_custom_call.1} parent=1 // pred_check
      _
    $region3: #{tpu_custom_call.1} parent=1 // pred_check_branch
      %14 = sbr.rel (0) target = $region5
    $region4: #{tpu_custom_call.1} parent=1 // pred_region
      _
    $region5: #{tpu_custom_call.1} parent=1 // pred_fallthru
      _
    // Predicated region
    $region6: #{tpu_custom_call.1} parent=1 // pred_check
      _
    $region7: #{tpu_custom_call.1} parent=1 // pred_check_branch
      %16 = sbr.rel (0) target = $region9
    $region8: #{tpu_custom_call.1} parent=1 // pred_region
      _
    $region9: #{tpu_custom_call.1} parent=1 // pred_fallthru
      _
    // Predicated region
    $region10: #{tpu_custom_call.1} parent=1 // pred_check
      _
    $region11: #{tpu_custom_call.1} parent=1 // pred_check_branch
      %18 = sbr.rel (0) target = $region13
    $region12: #{tpu_custom_call.1} parent=1 // pred_region
      _
    $region13: #{tpu_custom_call.1} parent=1 // pred_fallthru
      _
    // Predicated region
    $region14: #{tpu_custom_call.1} parent=1 // pred_check
      _
    $region15: #{tpu_custom_call.1} parent=1 // pred_check_branch
      %20 = sbr.rel (0) target = $region17
    $region16: #{tpu_custom_call.1} parent=1 // pred_region
      _
    $region17: #{tpu_custom_call.1} parent=1 // pred_fallthru
      _
    // Predicated region
    $region18: #{tpu_custom_call.1} parent=1 // pred_check
      _
    $region19: #{tpu_custom_call.1} parent=1 // pred_check_branch
      %22 = sbr.rel (0) target = $region21
    $region20: #{tpu_custom_call.1} parent=1 // pred_region
      _
    $region21: #{tpu_custom_call.1} parent=1 // pred_fallthru
      _
    // Predicated region
    $region22: #{tpu_custom_call.1} parent=1 // pred_check
      _
    $region23: #{tpu_custom_call.1} parent=1 // pred_check_branch
      %24 = sbr.rel (0) target = $region25
    $region24: #{tpu_custom_call.1} parent=1 // pred_region
      _
    $region25: #{tpu_custom_call.1} parent=1 // pred_fallthru
      _
    // Predicated region
    $region26: #{tpu_custom_call.1} parent=1 // pred_check
      _
    $region27: #{tpu_custom_call.1} parent=1 // pred_check_branch
      %26 = sbr.rel (0) target = $region29
    $region28: #{tpu_custom_call.1} parent=1 // pred_region
      _
    $region29: #{tpu_custom_call.1} parent=1 // pred_fallthru
      _
    %v28 = vld [vmem:[%s0] sm:$0xff]
    %v29 = vld [vmem:[%s1] sm:$0xff]
    %v30 = vld [vmem:[%s1 + $0x8] sm:$0xff]
    %v31 = vld [vmem:[%s1 + $0x10] sm:$0xff]
    %v32 = vld [vmem:[%s1 + $0x18] sm:$0xff]
    %v33 = vld [vmem:[%s1 + $0x20] sm:$0xff]
    %v34 = vld [vmem:[%s1 + $0x28] sm:$0xff]
    %36 = vset.pattern.permute.xlu0 0
    %37 = vperm.xlu0 %36, %v29
    %v38 = vpop.permute.xlu0 %37
    %41 = vset.pattern.permute.xlu0 0
    %42 = vperm.xlu0 %41, %v30
    %v43 = vpop.permute.xlu0 %42
    %46 = vset.pattern.permute.xlu0 0
    %47 = vperm.xlu0 %46, %v31
    %v48 = vpop.permute.xlu0 %47
    %51 = vset.pattern.permute.xlu0 0
    %52 = vperm.xlu0 %51, %v32
    %v53 = vpop.permute.xlu0 %52
    %56 = vset.pattern.permute.xlu0 0
    %57 = vperm.xlu0 %56, %v33
    %v58 = vpop.permute.xlu0 %57
    %61 = vset.pattern.permute.xlu0 0
    %62 = vperm.xlu0 %61, %v34
    %v63 = vpop.permute.xlu0 %62
    %v66 = vlaneseq
    %v67 = vshrl.u32 %v66, 7
    %v68 = vsub.s32 0, %v67
    %v69 = vrot.slane %v28, %v68
    %v70 = vlaneseq
    %v71 = vshrl.u32 %v70, 7
    %v72 = vsub.s32 4, %v71
    %v73 = vrot.slane %v28, %v72
    %v76 = vlaneseq
    %v77 = vshrl.u32 %v76, 7
    %v78 = vsub.s32 0, %v77
    %v79 = vrot.slane %v69, %v78
    %v80 = vlaneseq
    %v81 = vshrl.u32 %v80, 7
    %v82 = vsub.s32 0, %v81
    %v83 = vrot.slane %v73, %v82
    %v84 = vmul.f32 %v38, %v79
    %v85 = vmul.f32 %v38, %v83
    %v86 = vmul.f32 %v43, %v79
    %v87 = vmul.f32 %v43, %v83
    %v88 = vmul.f32 %v48, %v79
    %v89 = vmul.f32 %v48, %v83
    %v90 = vmul.f32 %v53, %v79
    %v91 = vmul.f32 %v53, %v83
    %v92 = vmul.f32 %v58, %v79
    %v93 = vmul.f32 %v58, %v83
    %v94 = vmul.f32 %v63, %v79
    %v95 = vmul.f32 %v63, %v83
    %96 = vset.pattern.permute.xlu0 1
    %97 = vperm.xlu0 %96, %v29
    %v98 = vpop.permute.xlu0 %97
    %100 = vset.pattern.permute.xlu0 1
    %101 = vperm.xlu0 %100, %v30
    %v102 = vpop.permute.xlu0 %101
    %104 = vset.pattern.permute.xlu0 1
    %105 = vperm.xlu0 %104, %v31
    %v106 = vpop.permute.xlu0 %105
    %108 = vset.pattern.permute.xlu0 1
    %109 = vperm.xlu0 %108, %v32
    %v110 = vpop.permute.xlu0 %109
    %112 = vset.pattern.permute.xlu0 1
    %113 = vperm.xlu0 %112, %v33
    %v114 = vpop.permute.xlu0 %113
    %116 = vset.pattern.permute.xlu0 1
    %117 = vperm.xlu0 %116, %v34
    %v118 = vpop.permute.xlu0 %117
    %v120 = vlaneseq
    %v121 = vshrl.u32 %v120, 7
    %v122 = vsub.s32 1, %v121
    %v123 = vrot.slane %v28, %v122
    %v124 = vlaneseq
    %v125 = vshrl.u32 %v124, 7
    %v126 = vsub.s32 5, %v125
    %v127 = vrot.slane %v28, %v126
    %v130 = vlaneseq
    %v131 = vshrl.u32 %v130, 7
    %v132 = vsub.s32 1, %v131
    %v133 = vrot.slane %v123, %v132
    %v134 = vlaneseq
    %v135 = vshrl.u32 %v134, 7
    %v136 = vsub.s32 1, %v135
    %v137 = vrot.slane %v127, %v136
    %v138 = vmul.f32 %v98, %v133
    %v139 = vmul.f32 %v98, %v137
    %v140 = vmul.f32 %v102, %v133
    %v141 = vmul.f32 %v102, %v137
    %v142 = vmul.f32 %v106, %v133
    %v143 = vmul.f32 %v106, %v137
    %v144 = vmul.f32 %v110, %v133
    %v145 = vmul.f32 %v110, %v137
    %v146 = vmul.f32 %v114, %v133
    %v147 = vmul.f32 %v114, %v137
    %v148 = vmul.f32 %v118, %v133
    %v149 = vmul.f32 %v118, %v137
    %v150 = vadd.f32 %v84, %v138
    %v151 = vadd.f32 %v85, %v139
    %v152 = vadd.f32 %v86, %v140
    %v153 = vadd.f32 %v87, %v141
    %v154 = vadd.f32 %v88, %v142
    %v155 = vadd.f32 %v89, %v143
    %v156 = vadd.f32 %v90, %v144
    %v157 = vadd.f32 %v91, %v145
    %v158 = vadd.f32 %v92, %v146
    %v159 = vadd.f32 %v93, %v147
    %v160 = vadd.f32 %v94, %v148
    %v161 = vadd.f32 %v95, %v149
    %162 = vset.pattern.permute.xlu0 2
    %163 = vperm.xlu0 %162, %v29
    %v164 = vpop.permute.xlu0 %163
    %166 = vset.pattern.permute.xlu0 2
    %167 = vperm.xlu0 %166, %v30
    %v168 = vpop.permute.xlu0 %167
    %170 = vset.pattern.permute.xlu0 2
    %171 = vperm.xlu0 %170, %v31
    %v172 = vpop.permute.xlu0 %171
    %174 = vset.pattern.permute.xlu0 2
    %175 = vperm.xlu0 %174, %v32
    %v176 = vpop.permute.xlu0 %175
    %178 = vset.pattern.permute.xlu0 2
    %179 = vperm.xlu0 %178, %v33
    %v180 = vpop.permute.xlu0 %179
    %182 = vset.pattern.permute.xlu0 2
    %183 = vperm.xlu0 %182, %v34
    %v184 = vpop.permute.xlu0 %183
    %v186 = vlaneseq
    %v187 = vshrl.u32 %v186, 7
    %v188 = vsub.s32 2, %v187
    %v189 = vrot.slane %v28, %v188
    %v190 = vlaneseq
    %v191 = vshrl.u32 %v190, 7
    %v192 = vsub.s32 6, %v191
    %v193 = vrot.slane %v28, %v192
    %v196 = vlaneseq
    %v197 = vshrl.u32 %v196, 7
    %v198 = vsub.s32 2, %v197
    %v199 = vrot.slane %v189, %v198
    %v200 = vlaneseq
    %v201 = vshrl.u32 %v200, 7
    %v202 = vsub.s32 2, %v201
    %v203 = vrot.slane %v193, %v202
    %v204 = vmul.f32 %v164, %v199
    %v205 = vmul.f32 %v164, %v203
    %v206 = vmul.f32 %v168, %v199
    %v207 = vmul.f32 %v168, %v203
    %v208 = vmul.f32 %v172, %v199
    %v209 = vmul.f32 %v172, %v203
    %v210 = vmul.f32 %v176, %v199
    %v211 = vmul.f32 %v176, %v203
    %v212 = vmul.f32 %v180, %v199
    %v213 = vmul.f32 %v180, %v203
    %v214 = vmul.f32 %v184, %v199
    %v215 = vmul.f32 %v184, %v203
    %v216 = vadd.f32 %v150, %v204
    %v217 = vadd.f32 %v151, %v205
    %v218 = vadd.f32 %v152, %v206
    %v219 = vadd.f32 %v153, %v207
    %v220 = vadd.f32 %v154, %v208
    %v221 = vadd.f32 %v155, %v209
    %v222 = vadd.f32 %v156, %v210
    %v223 = vadd.f32 %v157, %v211
    %v224 = vadd.f32 %v158, %v212
    %v225 = vadd.f32 %v159, %v213
    %v226 = vadd.f32 %v160, %v214
    %v227 = vadd.f32 %v161, %v215
    %228 = vset.pattern.permute.xlu0 3
    %229 = vperm.xlu0 %228, %v29
    %v230 = vpop.permute.xlu0 %229
    %232 = vset.pattern.permute.xlu0 3
    %233 = vperm.xlu0 %232, %v30
    %v234 = vpop.permute.xlu0 %233
    %236 = vset.pattern.permute.xlu0 3
    %237 = vperm.xlu0 %236, %v31
    %v238 = vpop.permute.xlu0 %237
    %240 = vset.pattern.permute.xlu0 3
    %241 = vperm.xlu0 %240, %v32
    %v242 = vpop.permute.xlu0 %241
    %244 = vset.pattern.permute.xlu0 3
    %245 = vperm.xlu0 %244, %v33
    %v246 = vpop.permute.xlu0 %245
    %248 = vset.pattern.permute.xlu0 3
    %249 = vperm.xlu0 %248, %v34
    %v250 = vpop.permute.xlu0 %249
    %v252 = vlaneseq
    %v253 = vshrl.u32 %v252, 7
    %v254 = vsub.s32 3, %v253
    %v255 = vrot.slane %v28, %v254
    %v256 = vlaneseq
    %v257 = vshrl.u32 %v256, 7
    %v258 = vsub.s32 7, %v257
    %v259 = vrot.slane %v28, %v258
    %v262 = vlaneseq
    %v263 = vshrl.u32 %v262, 7
    %v264 = vsub.s32 3, %v263
    %v265 = vrot.slane %v255, %v264
    %v266 = vlaneseq
    %v267 = vshrl.u32 %v266, 7
    %v268 = vsub.s32 3, %v267
    %v269 = vrot.slane %v259, %v268
    %v270 = vmul.f32 %v230, %v265
    %v271 = vmul.f32 %v230, %v269
    %v272 = vmul.f32 %v234, %v265
    %v273 = vmul.f32 %v234, %v269
    %v274 = vmul.f32 %v238, %v265
    %v275 = vmul.f32 %v238, %v269
    %v276 = vmul.f32 %v242, %v265
    %v277 = vmul.f32 %v242, %v269
    %v278 = vmul.f32 %v246, %v265
    %v279 = vmul.f32 %v246, %v269
    %v280 = vmul.f32 %v250, %v265
    %v281 = vmul.f32 %v250, %v269
    %v282 = vadd.f32 %v216, %v270
    %v283 = vadd.f32 %v217, %v271
    %v284 = vadd.f32 %v218, %v272
    %v285 = vadd.f32 %v219, %v273
    %v286 = vadd.f32 %v220, %v274
    %v287 = vadd.f32 %v221, %v275
    %v288 = vadd.f32 %v222, %v276
    %v289 = vadd.f32 %v223, %v277
    %v290 = vadd.f32 %v224, %v278
    %v291 = vadd.f32 %v225, %v279
    %v292 = vadd.f32 %v226, %v280
    %v293 = vadd.f32 %v227, %v281
    %v294 = vld [vmem:[%s2] sm:$0xff]
    %v295 = vld [vmem:[%s2 + $0x8] sm:$0xff]
    %v296 = vld [vmem:[%s2 + $0x10] sm:$0xff]
    %v297 = vld [vmem:[%s2 + $0x18] sm:$0xff]
    %v298 = vld [vmem:[%s2 + $0x20] sm:$0xff]
    %v299 = vld [vmem:[%s2 + $0x28] sm:$0xff]
    %301 = vset.pattern.permute.xlu0 0
    %302 = vperm.xlu0 %301, %v294
    %v303 = vpop.permute.xlu0 %302
    %306 = vset.pattern.permute.xlu0 0
    %307 = vperm.xlu0 %306, %v295
    %v308 = vpop.permute.xlu0 %307
    %311 = vset.pattern.permute.xlu0 0
    %312 = vperm.xlu0 %311, %v296
    %v313 = vpop.permute.xlu0 %312
    %316 = vset.pattern.permute.xlu0 0
    %317 = vperm.xlu0 %316, %v297
    %v318 = vpop.permute.xlu0 %317
    %321 = vset.pattern.permute.xlu0 0
    %322 = vperm.xlu0 %321, %v298
    %v323 = vpop.permute.xlu0 %322
    %326 = vset.pattern.permute.xlu0 0
    %327 = vperm.xlu0 %326, %v299
    %v328 = vpop.permute.xlu0 %327
    %v330 = vadd.f32 %v282, %v303
    %v331 = vadd.f32 %v283, %v303
    %v332 = vadd.f32 %v284, %v308
    %v333 = vadd.f32 %v285, %v308
    %v334 = vadd.f32 %v286, %v313
    %v335 = vadd.f32 %v287, %v313
    %v336 = vadd.f32 %v288, %v318
    %v337 = vadd.f32 %v289, %v318
    %v338 = vadd.f32 %v290, %v323
    %v339 = vadd.f32 %v291, %v323
    %v340 = vadd.f32 %v292, %v328
    %v341 = vadd.f32 %v293, %v328
    %v342 = vmax.f32 %v330, 0.0
    %v343 = vmax.f32 %v331, 0.0
    %v344 = vmax.f32 %v332, 0.0
    %v345 = vmax.f32 %v333, 0.0
    %v346 = vmax.f32 %v334, 0.0
    %v347 = vmax.f32 %v335, 0.0
    %348 = vst [vmem:[#allocation2] sm:$0xff] %v342
    %349 = vst [vmem:[#allocation2 + $0x8] sm:$0xff] %v343
    %350 = vst [vmem:[#allocation2 + $0x10] sm:$0xff] %v344
    %351 = vst [vmem:[#allocation2 + $0x18] sm:$0xff] %v345
    %352 = vst [vmem:[#allocation2 + $0x20] sm:$0xff] %v346
    %353 = vst [vmem:[#allocation2 + $0x28] sm:$0xff] %v347
    %354 = vst [vmem:[#allocation3] sm:$0xff] %v336
    %355 = vst [vmem:[#allocation3 + $0x8] sm:$0xff] %v337
    %356 = vst [vmem:[#allocation3 + $0x10] sm:$0xff] %v338
    %357 = vst [vmem:[#allocation3 + $0x18] sm:$0xff] %v339
    %358 = vst [vmem:[#allocation3 + $0x20] sm:$0xff] %v340
    %359 = vst [vmem:[#allocation3 + $0x28] sm:$0xff] %v341
    %v360 = vadd.f32 %v342, %v343
    %361 = vadd.xlane.f32.xlu0 %v360
    %v362 = vpop.xlane.xlu0 %361
    %v363 = vadd.f32 %v344, %v345
    %364 = vadd.xlane.f32.xlu0 %v363
    %v365 = vpop.xlane.xlu0 %364
    %v366 = vadd.f32 %v346, %v347
    %367 = vadd.xlane.f32.xlu0 %v366
    %v368 = vpop.xlane.xlu0 %367
    %v369 = vadd.f32 %v362, 0.0
    %v370 = vadd.f32 %v365, 0.0
    %v371 = vadd.f32 %v368, 0.0
    %v372 = vmul.f32 %v342, %v342
    %v373 = vmul.f32 %v343, %v343
    %v374 = vmul.f32 %v344, %v344
    %v375 = vmul.f32 %v345, %v345
    %v376 = vmul.f32 %v346, %v346
    %v377 = vmul.f32 %v347, %v347
    %v378 = vadd.f32 %v372, %v373
    %379 = vadd.xlane.f32.xlu0 %v378
    %v380 = vpop.xlane.xlu0 %379
    %v381 = vadd.f32 %v374, %v375
    %382 = vadd.xlane.f32.xlu0 %v381
    %v383 = vpop.xlane.xlu0 %382
    %v384 = vadd.f32 %v376, %v377
    %385 = vadd.xlane.f32.xlu0 %v384
    %v386 = vpop.xlane.xlu0 %385
    %v387 = vadd.f32 %v380, 0.0
    %v388 = vadd.f32 %v383, 0.0
    %v389 = vadd.f32 %v386, 0.0
    %s390 = scalar_lea.vmem %s0, 8
    %v391 = vld [vmem:[%s390] sm:$0xff]
    %v392 = vld [vmem:[%s1] sm:$0xff]
    %v393 = vld [vmem:[%s1 + $0x8] sm:$0xff]
    %v394 = vld [vmem:[%s1 + $0x10] sm:$0xff]
    %v395 = vld [vmem:[%s1 + $0x18] sm:$0xff]
    %v396 = vld [vmem:[%s1 + $0x20] sm:$0xff]
    %v397 = vld [vmem:[%s1 + $0x28] sm:$0xff]
    %399 = vset.pattern.permute.xlu0 0
    %400 = vperm.xlu0 %399, %v392
    %v401 = vpop.permute.xlu0 %400
    %404 = vset.pattern.permute.xlu0 0
    %405 = vperm.xlu0 %404, %v393
    %v406 = vpop.permute.xlu0 %405
    %409 = vset.pattern.permute.xlu0 0
    %410 = vperm.xlu0 %409, %v394
    %v411 = vpop.permute.xlu0 %410
    %414 = vset.pattern.permute.xlu0 0
    %415 = vperm.xlu0 %414, %v395
    %v416 = vpop.permute.xlu0 %415
    %419 = vset.pattern.permute.xlu0 0
    %420 = vperm.xlu0 %419, %v396
    %v421 = vpop.permute.xlu0 %420
    %424 = vset.pattern.permute.xlu0 0
    %425 = vperm.xlu0 %424, %v397
    %v426 = vpop.permute.xlu0 %425
    %v429 = vlaneseq
    %v430 = vshrl.u32 %v429, 7
    %v431 = vsub.s32 0, %v430
    %v432 = vrot.slane %v391, %v431
    %v433 = vlaneseq
    %v434 = vshrl.u32 %v433, 7
    %v435 = vsub.s32 4, %v434
    %v436 = vrot.slane %v391, %v435
    %v439 = vlaneseq
    %v440 = vshrl.u32 %v439, 7
    %v441 = vsub.s32 0, %v440
    %v442 = vrot.slane %v432, %v441
    %v443 = vlaneseq
    %v444 = vshrl.u32 %v443, 7
    %v445 = vsub.s32 0, %v444
    %v446 = vrot.slane %v436, %v445
    %v447 = vmul.f32 %v401, %v442
    %v448 = vmul.f32 %v401, %v446
    %v449 = vmul.f32 %v406, %v442
    %v450 = vmul.f32 %v406, %v446
    %v451 = vmul.f32 %v411, %v442
    %v452 = vmul.f32 %v411, %v446
    %v453 = vmul.f32 %v416, %v442
    %v454 = vmul.f32 %v416, %v446
    %v455 = vmul.f32 %v421, %v442
    %v456 = vmul.f32 %v421, %v446
    %v457 = vmul.f32 %v426, %v442
    %v458 = vmul.f32 %v426, %v446
    %459 = vset.pattern.permute.xlu0 1
    %460 = vperm.xlu0 %459, %v392
    %v461 = vpop.permute.xlu0 %460
    %463 = vset.pattern.permute.xlu0 1
    %464 = vperm.xlu0 %463, %v393
    %v465 = vpop.permute.xlu0 %464
    %467 = vset.pattern.permute.xlu0 1
    %468 = vperm.xlu0 %467, %v394
    %v469 = vpop.permute.xlu0 %468
    %471 = vset.pattern.permute.xlu0 1
    %472 = vperm.xlu0 %471, %v395
    %v473 = vpop.permute.xlu0 %472
    %475 = vset.pattern.permute.xlu0 1
    %476 = vperm.xlu0 %475, %v396
    %v477 = vpop.permute.xlu0 %476
    %479 = vset.pattern.permute.xlu0 1
    %480 = vperm.xlu0 %479, %v397
    %v481 = vpop.permute.xlu0 %480
    %v483 = vlaneseq
    %v484 = vshrl.u32 %v483, 7
    %v485 = vsub.s32 1, %v484
    %v486 = vrot.slane %v391, %v485
    %v487 = vlaneseq
    %v488 = vshrl.u32 %v487, 7
    %v489 = vsub.s32 5, %v488
    %v490 = vrot.slane %v391, %v489
    %v493 = vlaneseq
    %v494 = vshrl.u32 %v493, 7
    %v495 = vsub.s32 1, %v494
    %v496 = vrot.slane %v486, %v495
    %v497 = vlaneseq
    %v498 = vshrl.u32 %v497, 7
    %v499 = vsub.s32 1, %v498
    %v500 = vrot.slane %v490, %v499
    %v501 = vmul.f32 %v461, %v496
    %v502 = vmul.f32 %v461, %v500
    %v503 = vmul.f32 %v465, %v496
    %v504 = vmul.f32 %v465, %v500
    %v505 = vmul.f32 %v469, %v496
    %v506 = vmul.f32 %v469, %v500
    %v507 = vmul.f32 %v473, %v496
    %v508 = vmul.f32 %v473, %v500
    %v509 = vmul.f32 %v477, %v496
    %v510 = vmul.f32 %v477, %v500
    %v511 = vmul.f32 %v481, %v496
    %v512 = vmul.f32 %v481, %v500
    %v513 = vadd.f32 %v447, %v501
    %v514 = vadd.f32 %v448, %v502
    %v515 = vadd.f32 %v449, %v503
    %v516 = vadd.f32 %v450, %v504
    %v517 = vadd.f32 %v451, %v505
    %v518 = vadd.f32 %v452, %v506
    %v519 = vadd.f32 %v453, %v507
    %v520 = vadd.f32 %v454, %v508
    %v521 = vadd.f32 %v455, %v509
    %v522 = vadd.f32 %v456, %v510
    %v523 = vadd.f32 %v457, %v511
    %v524 = vadd.f32 %v458, %v512
    %525 = vset.pattern.permute.xlu0 2
    %526 = vperm.xlu0 %525, %v392
    %v527 = vpop.permute.xlu0 %526
    %529 = vset.pattern.permute.xlu0 2
    %530 = vperm.xlu0 %529, %v393
    %v531 = vpop.permute.xlu0 %530
    %533 = vset.pattern.permute.xlu0 2
    %534 = vperm.xlu0 %533, %v394
    %v535 = vpop.permute.xlu0 %534
    %537 = vset.pattern.permute.xlu0 2
    %538 = vperm.xlu0 %537, %v395
    %v539 = vpop.permute.xlu0 %538
    %541 = vset.pattern.permute.xlu0 2
    %542 = vperm.xlu0 %541, %v396
    %v543 = vpop.permute.xlu0 %542
    %545 = vset.pattern.permute.xlu0 2
    %546 = vperm.xlu0 %545, %v397
    %v547 = vpop.permute.xlu0 %546
    %v549 = vlaneseq
    %v550 = vshrl.u32 %v549, 7
    %v551 = vsub.s32 2, %v550
    %v552 = vrot.slane %v391, %v551
    %v553 = vlaneseq
    %v554 = vshrl.u32 %v553, 7
    %v555 = vsub.s32 6, %v554
    %v556 = vrot.slane %v391, %v555
    %v559 = vlaneseq
    %v560 = vshrl.u32 %v559, 7
    %v561 = vsub.s32 2, %v560
    %v562 = vrot.slane %v552, %v561
    %v563 = vlaneseq
    %v564 = vshrl.u32 %v563, 7
    %v565 = vsub.s32 2, %v564
    %v566 = vrot.slane %v556, %v565
    %v567 = vmul.f32 %v527, %v562
    %v568 = vmul.f32 %v527, %v566
    %v569 = vmul.f32 %v531, %v562
    %v570 = vmul.f32 %v531, %v566
    %v571 = vmul.f32 %v535, %v562
    %v572 = vmul.f32 %v535, %v566
    %v573 = vmul.f32 %v539, %v562
    %v574 = vmul.f32 %v539, %v566
    %v575 = vmul.f32 %v543, %v562
    %v576 = vmul.f32 %v543, %v566
    %v577 = vmul.f32 %v547, %v562
    %v578 = vmul.f32 %v547, %v566
    %v579 = vadd.f32 %v513, %v567
    %v580 = vadd.f32 %v514, %v568
    %v581 = vadd.f32 %v515, %v569
    %v582 = vadd.f32 %v516, %v570
    %v583 = vadd.f32 %v517, %v571
    %v584 = vadd.f32 %v518, %v572
    %v585 = vadd.f32 %v519, %v573
    %v586 = vadd.f32 %v520, %v574
    %v587 = vadd.f32 %v521, %v575
    %v588 = vadd.f32 %v522, %v576
    %v589 = vadd.f32 %v523, %v577
    %v590 = vadd.f32 %v524, %v578
    %591 = vset.pattern.permute.xlu0 3
    %592 = vperm.xlu0 %591, %v392
    %v593 = vpop.permute.xlu0 %592
    %595 = vset.pattern.permute.xlu0 3
    %596 = vperm.xlu0 %595, %v393
    %v597 = vpop.permute.xlu0 %596
    %599 = vset.pattern.permute.xlu0 3
    %600 = vperm.xlu0 %599, %v394
    %v601 = vpop.permute.xlu0 %600
    %603 = vset.pattern.permute.xlu0 3
    %604 = vperm.xlu0 %603, %v395
    %v605 = vpop.permute.xlu0 %604
    %607 = vset.pattern.permute.xlu0 3
    %608 = vperm.xlu0 %607, %v396
    %v609 = vpop.permute.xlu0 %608
    %611 = vset.pattern.permute.xlu0 3
    %612 = vperm.xlu0 %611, %v397
    %v613 = vpop.permute.xlu0 %612
    %v615 = vlaneseq
    %v616 = vshrl.u32 %v615, 7
    %v617 = vsub.s32 3, %v616
    %v618 = vrot.slane %v391, %v617
    %v619 = vlaneseq
    %v620 = vshrl.u32 %v619, 7
    %v621 = vsub.s32 7, %v620
    %v622 = vrot.slane %v391, %v621
    %v625 = vlaneseq
    %v626 = vshrl.u32 %v625, 7
    %v627 = vsub.s32 3, %v626
    %v628 = vrot.slane %v618, %v627
    %v629 = vlaneseq
    %v630 = vshrl.u32 %v629, 7
    %v631 = vsub.s32 3, %v630
    %v632 = vrot.slane %v622, %v631
    %v633 = vmul.f32 %v593, %v628
    %v634 = vmul.f32 %v593, %v632
    %v635 = vmul.f32 %v597, %v628
    %v636 = vmul.f32 %v597, %v632
    %v637 = vmul.f32 %v601, %v628
    %v638 = vmul.f32 %v601, %v632
    %v639 = vmul.f32 %v605, %v628
    %v640 = vmul.f32 %v605, %v632
    %v641 = vmul.f32 %v609, %v628
    %v642 = vmul.f32 %v609, %v632
    %v643 = vmul.f32 %v613, %v628
    %v644 = vmul.f32 %v613, %v632
    %v645 = vadd.f32 %v579, %v633
    %v646 = vadd.f32 %v580, %v634
    %v647 = vadd.f32 %v581, %v635
    %v648 = vadd.f32 %v582, %v636
    %v649 = vadd.f32 %v583, %v637
    %v650 = vadd.f32 %v584, %v638
    %v651 = vadd.f32 %v585, %v639
    %v652 = vadd.f32 %v586, %v640
    %v653 = vadd.f32 %v587, %v641
    %v654 = vadd.f32 %v588, %v642
    %v655 = vadd.f32 %v589, %v643
    %v656 = vadd.f32 %v590, %v644
    %v657 = vld [vmem:[%s2] sm:$0xff]
    %v658 = vld [vmem:[%s2 + $0x8] sm:$0xff]
    %v659 = vld [vmem:[%s2 + $0x10] sm:$0xff]
    %v660 = vld [vmem:[%s2 + $0x18] sm:$0xff]
    %v661 = vld [vmem:[%s2 + $0x20] sm:$0xff]
    %v662 = vld [vmem:[%s2 + $0x28] sm:$0xff]
    %664 = vset.pattern.permute.xlu0 0
    %665 = vperm.xlu0 %664, %v657
    %v666 = vpop.permute.xlu0 %665
    %669 = vset.pattern.permute.xlu0 0
    %670 = vperm.xlu0 %669, %v658
    %v671 = vpop.permute.xlu0 %670
    %674 = vset.pattern.permute.xlu0 0
    %675 = vperm.xlu0 %674, %v659
    %v676 = vpop.permute.xlu0 %675
    %679 = vset.pattern.permute.xlu0 0
    %680 = vperm.xlu0 %679, %v660
    %v681 = vpop.permute.xlu0 %680
    %684 = vset.pattern.permute.xlu0 0
    %685 = vperm.xlu0 %684, %v661
    %v686 = vpop.permute.xlu0 %685
    %689 = vset.pattern.permute.xlu0 0
    %690 = vperm.xlu0 %689, %v662
    %v691 = vpop.permute.xlu0 %690
    %v693 = vadd.f32 %v645, %v666
    %v694 = vadd.f32 %v646, %v666
    %v695 = vadd.f32 %v647, %v671
    %v696 = vadd.f32 %v648, %v671
    %v697 = vadd.f32 %v649, %v676
    %v698 = vadd.f32 %v650, %v676
    %v699 = vadd.f32 %v651, %v681
    %v700 = vadd.f32 %v652, %v681
    %v701 = vadd.f32 %v653, %v686
    %v702 = vadd.f32 %v654, %v686
    %v703 = vadd.f32 %v655, %v691
    %v704 = vadd.f32 %v656, %v691
    %v705 = vmax.f32 %v693, 0.0
    %v706 = vmax.f32 %v694, 0.0
    %v707 = vmax.f32 %v695, 0.0
    %v708 = vmax.f32 %v696, 0.0
    %v709 = vmax.f32 %v697, 0.0
    %v710 = vmax.f32 %v698, 0.0
    %s711 = scalar_lea.vmem [#allocation2], 48
    %712 = vst [vmem:[%s711] sm:$0xff] %v705
    %713 = vst [vmem:[%s711 + $0x8] sm:$0xff] %v706
    %714 = vst [vmem:[%s711 + $0x10] sm:$0xff] %v707
    %715 = vst [vmem:[%s711 + $0x18] sm:$0xff] %v708
    %716 = vst [vmem:[%s711 + $0x20] sm:$0xff] %v709
    %717 = vst [vmem:[%s711 + $0x28] sm:$0xff] %v710
    %s718 = scalar_lea.vmem [#allocation3], 48
    %719 = vst [vmem:[%s718] sm:$0xff] %v699
    %720 = vst [vmem:[%s718 + $0x8] sm:$0xff] %v700
    %721 = vst [vmem:[%s718 + $0x10] sm:$0xff] %v701
    %722 = vst [vmem:[%s718 + $0x18] sm:$0xff] %v702
    %723 = vst [vmem:[%s718 + $0x20] sm:$0xff] %v703
    %724 = vst [vmem:[%s718 + $0x28] sm:$0xff] %v704
    %v725 = vadd.f32 %v705, %v706
    %726 = vadd.xlane.f32.xlu0 %v725
    %v727 = vpop.xlane.xlu0 %726
    %v728 = vadd.f32 %v707, %v708
    %729 = vadd.xlane.f32.xlu0 %v728
    %v730 = vpop.xlane.xlu0 %729
    %v731 = vadd.f32 %v709, %v710
    %732 = vadd.xlane.f32.xlu0 %v731
    %v733 = vpop.xlane.xlu0 %732
    %v734 = vadd.f32 %v369, %v727
    %v735 = vadd.f32 %v370, %v730
    %v736 = vadd.f32 %v371, %v733
    %v737 = vmul.f32 %v705, %v705
    %v738 = vmul.f32 %v706, %v706
    %v739 = vmul.f32 %v707, %v707
    %v740 = vmul.f32 %v708, %v708
    %v741 = vmul.f32 %v709, %v709
    %v742 = vmul.f32 %v710, %v710
    %v743 = vadd.f32 %v737, %v738
    %744 = vadd.xlane.f32.xlu0 %v743
    %v745 = vpop.xlane.xlu0 %744
    %v746 = vadd.f32 %v739, %v740
    %747 = vadd.xlane.f32.xlu0 %v746
    %v748 = vpop.xlane.xlu0 %747
    %v749 = vadd.f32 %v741, %v742
    %750 = vadd.xlane.f32.xlu0 %v749
    %v751 = vpop.xlane.xlu0 %750
    %v752 = vadd.f32 %v387, %v745
    %v753 = vadd.f32 %v388, %v748
    %v754 = vadd.f32 %v389, %v751
    %v755 = vmul.f32 %v734, 0.001953125
    %v756 = vmul.f32 %v735, 0.001953125
    %v757 = vmul.f32 %v736, 0.001953125
    %v758 = vmul.f32 %v752, 0.001953125
    %v759 = vmul.f32 %v753, 0.001953125
    %v760 = vmul.f32 %v754, 0.001953125
    %v761 = vmul.f32 %v755, %v755
    %v762 = vmul.f32 %v756, %v756
    %v763 = vmul.f32 %v757, %v757
    %v764 = vsub.f32 %v758, %v761
    %v765 = vsub.f32 %v759, %v762
    %v766 = vsub.f32 %v760, %v763
    %v767 = vmax.f32 %v764, 0.0
    %v768 = vmax.f32 %v765, 0.0
    %v769 = vmax.f32 %v766, 0.0
    %v770 = vld [vmem:[%s3] sm:$0xff]
    %v771 = vld [vmem:[%s3 + $0x8] sm:$0xff]
    %v772 = vld [vmem:[%s3 + $0x10] sm:$0xff]
    %v773 = vadd.f32 %v767, 1e-05
    %v774 = vadd.f32 %v768, 1e-05
    %v775 = vadd.f32 %v769, 1e-05
    %v776 = vrsqrt.pop %v773
    %v777 = vrsqrt.pop %v774
    %v778 = vrsqrt.pop %v775
    %v779 = vmul.f32 %v770, %v776
    %v780 = vmul.f32 %v771, %v777
    %v781 = vmul.f32 %v772, %v778
    %v782 = vld [vmem:[%s4] sm:$0xff]
    %v783 = vld [vmem:[%s4 + $0x8] sm:$0xff]
    %v784 = vld [vmem:[%s4 + $0x10] sm:$0xff]
    %v785 = vmul.f32 %v755, %v779
    %v786 = vmul.f32 %v756, %v780
    %v787 = vmul.f32 %v757, %v781
    %v788 = vsub.f32 %v782, %v785
    %v789 = vsub.f32 %v783, %v786
    %v790 = vsub.f32 %v784, %v787
    %v791 = vlaneseq
    %v792 = vand.u32 %v791, 127
    %v793 = vadd.s32 %v792, 128
    %vm794 = vcmp.lt.s32.totalorder %v792, 0
    %v795 = vsub.s32 0, %v792
    %v796 = vsel %vm794, %v795, %v792
    %v797 = vshrl.u32 %v796, 4
    %v798 = vand.u32 %v796, 15
    %v799 = vsub.s32 0, %v798
    %v800 = vsel %vm794, %v799, %v798
    %vm801 = vcmp.lt.s32.totalorder %v793, 0
    %v802 = vsub.s32 0, %v793
    %v803 = vsel %vm801, %v802, %v793
    %v804 = vshrl.u32 %v803, 4
    %v805 = vand.u32 %v803, 15
    %v806 = vsub.s32 0, %v805
    %v807 = vsel %vm801, %v806, %v805
    %vm808 = vcmp.ne.s32.totalorder %v800, 0
    %vm809 = vcmp.ne.s32.totalorder %v807, 0
    %vm810 = vcmp.lt.s32.totalorder %v800, 0
    %vm811 = vcmp.lt.s32.totalorder %v807, 0
    %vm812 = vmand %vm810, %vm808
    %vm813 = vmand %vm811, %vm809
    %v814 = vadd.s32 %v800, 16
    %v815 = vadd.s32 %v807, 16
    %v816 = vsel %vm812, %v814, %v800
    %v817 = vsel %vm813, %v815, %v807
    %vm818 = vcmp.ge.s32.totalorder %v816, 1
    %vm819 = vcmp.ge.s32.totalorder %v817, 1
    %v820 = vsel %vm818, 1, 0
    %v821 = vsel %vm819, 1, 0
    %v822 = vcvt.s32.f32 %v820
    %v823 = vcvt.s32.f32 %v821
    %vm824 = vcmp.lt.s32.totalorder %v816, 15
    %vm825 = vcmp.lt.s32.totalorder %v817, 15
    %v826 = vsel %vm824, 1, 0
    %v827 = vsel %vm825, 1, 0
    %v828 = vcvt.s32.f32 %v826
    %v829 = vcvt.s32.f32 %v827
    %830 = vst [vmem:[#allocation4] sm:$0xff] 0.0
    %831 = vst [vmem:[#allocation4 + $0x8] sm:$0xff] 0.0
    %832 = vst [vmem:[#allocation4 + $0x10] sm:$0xff] 0.0
    %833 = vst [vmem:[#allocation4 + $0x18] sm:$0xff] 0.0
    %834 = vst [vmem:[#allocation4 + $0x20] sm:$0xff] 0.0
    %835 = vst [vmem:[#allocation4 + $0x28] sm:$0xff] 0.0
    %836 = vst [vmem:[#allocation4 + $0x30] sm:$0xff] 0.0
    %837 = vst [vmem:[#allocation4 + $0x38] sm:$0xff] 0.0
    %838 = vst [vmem:[#allocation4 + $0x40] sm:$0xff] 0.0
    %839 = vst [vmem:[#allocation4 + $0x48] sm:$0xff] 0.0
    %840 = vst [vmem:[#allocation4 + $0x50] sm:$0xff] 0.0
    %841 = vst [vmem:[#allocation4 + $0x58] sm:$0xff] 0.0
    %842 = vst [vmem:[#allocation4 + $0x60] sm:$0xff] 0.0
    %843 = vst [vmem:[#allocation4 + $0x68] sm:$0xff] 0.0
    %844 = vst [vmem:[#allocation4 + $0x70] sm:$0xff] 0.0
    %845 = vst [vmem:[#allocation4 + $0x78] sm:$0xff] 0.0
    %v846 = vld [vmem:[#allocation2] sm:$0xff]
    %v847 = vld [vmem:[#allocation2 + $0x8] sm:$0xff]
    %v848 = vld [vmem:[#allocation2 + $0x10] sm:$0xff]
    %v849 = vld [vmem:[#allocation2 + $0x18] sm:$0xff]
    %v850 = vld [vmem:[#allocation2 + $0x20] sm:$0xff]
    %v851 = vld [vmem:[#allocation2 + $0x28] sm:$0xff]
    %853 = vset.pattern.permute.xlu0 0
    %854 = vperm.xlu0 %853, %v779
    %v855 = vpop.permute.xlu0 %854
    %858 = vset.pattern.permute.xlu0 0
    %859 = vperm.xlu0 %858, %v780
    %v860 = vpop.permute.xlu0 %859
    %863 = vset.pattern.permute.xlu0 0
    %864 = vperm.xlu0 %863, %v781
    %v865 = vpop.permute.xlu0 %864
    %v867 = vmul.f32 %v846, %v855
    %v868 = vmul.f32 %v847, %v855
    %v869 = vmul.f32 %v848, %v860
    %v870 = vmul.f32 %v849, %v860
    %v871 = vmul.f32 %v850, %v865
    %v872 = vmul.f32 %v851, %v865
    %874 = vset.pattern.permute.xlu0 0
    %875 = vperm.xlu0 %874, %v788
    %v876 = vpop.permute.xlu0 %875
    %879 = vset.pattern.permute.xlu0 0
    %880 = vperm.xlu0 %879, %v789
    %v881 = vpop.permute.xlu0 %880
    %884 = vset.pattern.permute.xlu0 0
    %885 = vperm.xlu0 %884, %v790
    %v886 = vpop.permute.xlu0 %885
    %v888 = vadd.f32 %v867, %v876
    %v889 = vadd.f32 %v868, %v876
    %v890 = vadd.f32 %v869, %v881
    %v891 = vadd.f32 %v870, %v881
    %v892 = vadd.f32 %v871, %v886
    %v893 = vadd.f32 %v872, %v886
    %894 = vst [vmem:[#allocation4 + $0x8] sm:$0xff] %v888
    %895 = vst [vmem:[#allocation4 + $0x10] sm:$0xff] %v889
    %896 = vst [vmem:[#allocation4 + $0x28] sm:$0xff] %v890
    %897 = vst [vmem:[#allocation4 + $0x30] sm:$0xff] %v891
    %898 = vst [vmem:[#allocation4 + $0x48] sm:$0xff] %v892
    %899 = vst [vmem:[#allocation4 + $0x50] sm:$0xff] %v893
    %v900 = vld [vmem:[#allocation4] sm:$0xff]
    %v901 = vld [vmem:[#allocation4 + $0x8] sm:$0xff]
    %v902 = vld [vmem:[#allocation4 + $0x10] sm:$0xff]
    %v903 = vld [vmem:[#allocation4 + $0x20] sm:$0xff]
    %v904 = vld [vmem:[#allocation4 + $0x28] sm:$0xff]
    %v905 = vld [vmem:[#allocation4 + $0x30] sm:$0xff]
    %v906 = vld [vmem:[#allocation4 + $0x40] sm:$0xff]
    %v907 = vld [vmem:[#allocation4 + $0x48] sm:$0xff]
    %v908 = vld [vmem:[#allocation4 + $0x50] sm:$0xff]
    %v909 = vld [vmem:[#allocation4 + $0x60] sm:$0xff]
    %v910 = vld [vmem:[#allocation4 + $0x68] sm:$0xff]
    %v911 = vld [vmem:[#allocation4 + $0x70] sm:$0xff]
    %914 = vrot.lane.b32.xlu0 %v822, 111
    %v915 = vpop.permute.xlu0 %914
    %916 = vrot.lane.b32.xlu0 %v823, 111
    %v917 = vpop.permute.xlu0 %916
    %vm918 = vcmask 908288
    %v919 = vsel %vm918, %v915, %v917
    %v923 = vmul.f32 %v900, %v915
    %v924 = vmul.f32 %v901, %v919
    %v925 = vmul.f32 %v902, %v917
    %v926 = vmul.f32 %v903, %v915
    %v927 = vmul.f32 %v904, %v919
    %v928 = vmul.f32 %v905, %v917
    %v929 = vmul.f32 %v906, %v915
    %v930 = vmul.f32 %v907, %v919
    %v931 = vmul.f32 %v908, %v917
    %v932 = vmul.f32 %v909, %v915
    %v933 = vmul.f32 %v910, %v919
    %v934 = vmul.f32 %v911, %v917
    %v935 = vpack.c.bf16 %v926, %v923
    %v936 = vpack.c.bf16 %v927, %v924
    %v937 = vpack.c.bf16 %v928, %v925
    %v938 = vpack.c.bf16 %v932, %v929
    %v939 = vpack.c.bf16 %v933, %v930
    %v940 = vpack.c.bf16 %v934, %v931
    %v947 = vunpack.c.l.b16 %v935
    %v948 = vunpack.c.l.b16 %v936
    %v949 = vunpack.c.l.b16 %v937
    %v950 = vunpack.c.h.b16 %v935
    %v951 = vunpack.c.h.b16 %v936
    %v952 = vunpack.c.h.b16 %v937
    %v953 = vunpack.c.l.b16 %v938
    %v954 = vunpack.c.l.b16 %v939
    %v955 = vunpack.c.l.b16 %v940
    %v956 = vunpack.c.h.b16 %v938
    %v957 = vunpack.c.h.b16 %v939
    %v958 = vunpack.c.h.b16 %v940
    %v959 = vpack.c.b16 %v948, %v947
    %v960 = vpack.c.b16 %v949, %v949
    %v961 = vpack.c.b16 %v951, %v950
    %v962 = vpack.c.b16 %v952, %v952
    %v963 = vpack.c.b16 %v954, %v953
    %v964 = vpack.c.b16 %v955, %v955
    %v965 = vpack.c.b16 %v957, %v956
    %v966 = vpack.c.b16 %v958, %v958
    %967 = vrot.lane.b32.xlu0 %v959, 17
    %v968 = vpop.permute.xlu0 %967
    %969 = vrot.lane.b32.xlu0 %v960, 17
    %v970 = vpop.permute.xlu0 %969
    %971 = vrot.lane.b32.xlu0 %v961, 17
    %v972 = vpop.permute.xlu0 %971
    %973 = vrot.lane.b32.xlu0 %v962, 17
    %v974 = vpop.permute.xlu0 %973
    %975 = vrot.lane.b32.xlu0 %v963, 17
    %v976 = vpop.permute.xlu0 %975
    %977 = vrot.lane.b32.xlu0 %v964, 17
    %v978 = vpop.permute.xlu0 %977
    %979 = vrot.lane.b32.xlu0 %v965, 17
    %v980 = vpop.permute.xlu0 %979
    %981 = vrot.lane.b32.xlu0 %v966, 17
    %v982 = vpop.permute.xlu0 %981
    %v983 = vrot.slane %v968, 4
    %v984 = vrot.slane %v970, 4
    %v985 = vrot.slane %v972, 4
    %v986 = vrot.slane %v974, 4
    %v987 = vrot.slane %v976, 4
    %v988 = vrot.slane %v978, 4
    %v989 = vrot.slane %v980, 4
    %v990 = vrot.slane %v982, 4
    %vm991 = vcmask 1043456
    %v992 = vsel %vm991, %v983, %v984
    %vm993 = vcmask 138240
    %v994 = vsel %vm993, %v968, %v992
    %v995 = vsel %vm991, %v985, %v986
    %v996 = vsel %vm993, %v972, %v995
    %v997 = vsel %vm991, %v987, %v988
    %v998 = vsel %vm993, %v976, %v997
    %v999 = vsel %vm991, %v989, %v990
    %v1000 = vsel %vm993, %v980, %v999
    %1005 = vst [vmem:[#allocation5] sm:$0xff] %v994
    %1006 = vst [vmem:[#allocation5 + $0x8] sm:$0xff] %v996
    %1007 = vst [vmem:[#allocation5 + $0x10] sm:$0xff] %v998
    %1008 = vst [vmem:[#allocation5 + $0x18] sm:$0xff] %v1000
    %v1009 = vld [vmem:[#allocation4] sm:$0xff]
    %v1010 = vld [vmem:[#allocation4 + $0x8] sm:$0xff]
    %v1011 = vld [vmem:[#allocation4 + $0x10] sm:$0xff]
    %v1012 = vld [vmem:[#allocation4 + $0x20] sm:$0xff]
    %v1013 = vld [vmem:[#allocation4 + $0x28] sm:$0xff]
    %v1014 = vld [vmem:[#allocation4 + $0x30] sm:$0xff]
    %v1015 = vld [vmem:[#allocation4 + $0x40] sm:$0xff]
    %v1016 = vld [vmem:[#allocation4 + $0x48] sm:$0xff]
    %v1017 = vld [vmem:[#allocation4 + $0x50] sm:$0xff]
    %v1018 = vld [vmem:[#allocation4 + $0x60] sm:$0xff]
    %v1019 = vld [vmem:[#allocation4 + $0x68] sm:$0xff]
    %v1020 = vld [vmem:[#allocation4 + $0x70] sm:$0xff]
    %v1021 = vpack.c.bf16 %v1012, %v1009
    %v1022 = vpack.c.bf16 %v1013, %v1010
    %v1023 = vpack.c.bf16 %v1014, %v1011
    %v1024 = vpack.c.bf16 %v1018, %v1015
    %v1025 = vpack.c.bf16 %v1019, %v1016
    %v1026 = vpack.c.bf16 %v1020, %v1017
    %v1033 = vunpack.c.l.b16 %v1021
    %v1034 = vunpack.c.l.b16 %v1022
    %v1035 = vunpack.c.l.b16 %v1023
    %v1036 = vunpack.c.h.b16 %v1021
    %v1037 = vunpack.c.h.b16 %v1022
    %v1038 = vunpack.c.h.b16 %v1023
    %v1039 = vunpack.c.l.b16 %v1024
    %v1040 = vunpack.c.l.b16 %v1025
    %v1041 = vunpack.c.l.b16 %v1026
    %v1042 = vunpack.c.h.b16 %v1024
    %v1043 = vunpack.c.h.b16 %v1025
    %v1044 = vunpack.c.h.b16 %v1026
    %v1045 = vpack.c.b16 %v1034, %v1033
    %v1046 = vpack.c.b16 %v1035, %v1035
    %v1047 = vpack.c.b16 %v1037, %v1036
    %v1048 = vpack.c.b16 %v1038, %v1038
    %v1049 = vpack.c.b16 %v1040, %v1039
    %v1050 = vpack.c.b16 %v1041, %v1041
    %v1051 = vpack.c.b16 %v1043, %v1042
    %v1052 = vpack.c.b16 %v1044, %v1044
    %1053 = vrot.lane.b32.xlu0 %v1045, 16
    %v1054 = vpop.permute.xlu0 %1053
    %1055 = vrot.lane.b32.xlu0 %v1046, 16
    %v1056 = vpop.permute.xlu0 %1055
    %1057 = vrot.lane.b32.xlu0 %v1047, 16
    %v1058 = vpop.permute.xlu0 %1057
    %1059 = vrot.lane.b32.xlu0 %v1048, 16
    %v1060 = vpop.permute.xlu0 %1059
    %1061 = vrot.lane.b32.xlu0 %v1049, 16
    %v1062 = vpop.permute.xlu0 %1061
    %1063 = vrot.lane.b32.xlu0 %v1050, 16
    %v1064 = vpop.permute.xlu0 %1063
    %1065 = vrot.lane.b32.xlu0 %v1051, 16
    %v1066 = vpop.permute.xlu0 %1065
    %1067 = vrot.lane.b32.xlu0 %v1052, 16
    %v1068 = vpop.permute.xlu0 %1067
    %v1069 = vrot.slane %v1054, 4
    %v1070 = vrot.slane %v1056, 4
    %v1071 = vrot.slane %v1058, 4
    %v1072 = vrot.slane %v1060, 4
    %v1073 = vrot.slane %v1062, 4
    %v1074 = vrot.slane %v1064, 4
    %v1075 = vrot.slane %v1066, 4
    %v1076 = vrot.slane %v1068, 4
    %v1077 = vsel %vm991, %v1069, %v1070
    %vm1078 = vcmask 130048
    %v1079 = vsel %vm1078, %v1054, %v1077
    %v1080 = vsel %vm991, %v1071, %v1072
    %v1081 = vsel %vm1078, %v1058, %v1080
    %v1082 = vsel %vm991, %v1073, %v1074
    %v1083 = vsel %vm1078, %v1062, %v1082
    %v1084 = vsel %vm991, %v1075, %v1076
    %v1085 = vsel %vm1078, %v1066, %v1084
    %1090 = vst [vmem:[#allocation5 + $0x20] sm:$0xff] %v1079
    %1091 = vst [vmem:[#allocation5 + $0x28] sm:$0xff] %v1081
    %1092 = vst [vmem:[#allocation5 + $0x30] sm:$0xff] %v1083
    %1093 = vst [vmem:[#allocation5 + $0x38] sm:$0xff] %v1085
    %v1094 = vld [vmem:[#allocation4] sm:$0xff]
    %v1095 = vld [vmem:[#allocation4 + $0x8] sm:$0xff]
    %v1096 = vld [vmem:[#allocation4 + $0x10] sm:$0xff]
    %v1097 = vld [vmem:[#allocation4 + $0x20] sm:$0xff]
    %v1098 = vld [vmem:[#allocation4 + $0x28] sm:$0xff]
    %v1099 = vld [vmem:[#allocation4 + $0x30] sm:$0xff]
    %v1100 = vld [vmem:[#allocation4 + $0x40] sm:$0xff]
    %v1101 = vld [vmem:[#allocation4 + $0x48] sm:$0xff]
    %v1102 = vld [vmem:[#allocation4 + $0x50] sm:$0xff]
    %v1103 = vld [vmem:[#allocation4 + $0x60] sm:$0xff]
    %v1104 = vld [vmem:[#allocation4 + $0x68] sm:$0xff]
    %v1105 = vld [vmem:[#allocation4 + $0x70] sm:$0xff]
    %1108 = vrot.lane.b32.xlu0 %v828, 113
    %v1109 = vpop.permute.xlu0 %1108
    %1110 = vrot.lane.b32.xlu0 %v829, 113
    %v1111 = vpop.permute.xlu0 %1110
    %vm1112 = vcmask 924672
    %v1113 = vsel %vm1112, %v1109, %v1111
    %v1117 = vmul.f32 %v1094, %v1109
    %v1118 = vmul.f32 %v1095, %v1113
    %v1119 = vmul.f32 %v1096, %v1111
    %v1120 = vmul.f32 %v1097, %v1109
    %v1121 = vmul.f32 %v1098, %v1113
    %v1122 = vmul.f32 %v1099, %v1111
    %v1123 = vmul.f32 %v1100, %v1109
    %v1124 = vmul.f32 %v1101, %v1113
    %v1125 = vmul.f32 %v1102, %v1111
    %v1126 = vmul.f32 %v1103, %v1109
    %v1127 = vmul.f32 %v1104, %v1113
    %v1128 = vmul.f32 %v1105, %v1111
    %v1129 = vpack.c.bf16 %v1120, %v1117
    %v1130 = vpack.c.bf16 %v1121, %v1118
    %v1131 = vpack.c.bf16 %v1122, %v1119
    %v1132 = vpack.c.bf16 %v1126, %v1123
    %v1133 = vpack.c.bf16 %v1127, %v1124
    %v1134 = vpack.c.bf16 %v1128, %v1125
    %v1141 = vunpack.c.l.b16 %v1129
    %v1142 = vunpack.c.l.b16 %v1130
    %v1143 = vunpack.c.l.b16 %v1131
    %v1144 = vunpack.c.h.b16 %v1129
    %v1145 = vunpack.c.h.b16 %v1130
    %v1146 = vunpack.c.h.b16 %v1131
    %v1147 = vunpack.c.l.b16 %v1132
    %v1148 = vunpack.c.l.b16 %v1133
    %v1149 = vunpack.c.l.b16 %v1134
    %v1150 = vunpack.c.h.b16 %v1132
    %v1151 = vunpack.c.h.b16 %v1133
    %v1152 = vunpack.c.h.b16 %v1134
    %v1153 = vpack.c.b16 %v1142, %v1141
    %v1154 = vpack.c.b16 %v1143, %v1143
    %v1155 = vpack.c.b16 %v1145, %v1144
    %v1156 = vpack.c.b16 %v1146, %v1146
    %v1157 = vpack.c.b16 %v1148, %v1147
    %v1158 = vpack.c.b16 %v1149, %v1149
    %v1159 = vpack.c.b16 %v1151, %v1150
    %v1160 = vpack.c.b16 %v1152, %v1152
    %1161 = vrot.lane.b32.xlu0 %v1153, 15
    %v1162 = vpop.permute.xlu0 %1161
    %1163 = vrot.lane.b32.xlu0 %v1154, 15
    %v1164 = vpop.permute.xlu0 %1163
    %1165 = vrot.lane.b32.xlu0 %v1155, 15
    %v1166 = vpop.permute.xlu0 %1165
    %1167 = vrot.lane.b32.xlu0 %v1156, 15
    %v1168 = vpop.permute.xlu0 %1167
    %1169 = vrot.lane.b32.xlu0 %v1157, 15
    %v1170 = vpop.permute.xlu0 %1169
    %1171 = vrot.lane.b32.xlu0 %v1158, 15
    %v1172 = vpop.permute.xlu0 %1171
    %1173 = vrot.lane.b32.xlu0 %v1159, 15
    %v1174 = vpop.permute.xlu0 %1173
    %1175 = vrot.lane.b32.xlu0 %v1160, 15
    %v1176 = vpop.permute.xlu0 %1175
    %v1177 = vrot.slane %v1162, 4
    %v1178 = vrot.slane %v1164, 4
    %v1179 = vrot.slane %v1166, 4
    %v1180 = vrot.slane %v1168, 4
    %v1181 = vrot.slane %v1170, 4
    %v1182 = vrot.slane %v1172, 4
    %v1183 = vrot.slane %v1174, 4
    %v1184 = vrot.slane %v1176, 4
    %v1185 = vsel %vm991, %v1177, %v1178
    %vm1186 = vcmask 121856
    %v1187 = vsel %vm1186, %v1162, %v1185
    %v1188 = vsel %vm991, %v1179, %v1180
    %v1189 = vsel %vm1186, %v1166, %v1188
    %v1190 = vsel %vm991, %v1181, %v1182
    %v1191 = vsel %vm1186, %v1170, %v1190
    %v1192 = vsel %vm991, %v1183, %v1184
    %v1193 = vsel %vm1186, %v1174, %v1192
    %1198 = vst [vmem:[#allocation5 + $0x40] sm:$0xff] %v1187
    %1199 = vst [vmem:[#allocation5 + $0x48] sm:$0xff] %v1189
    %1200 = vst [vmem:[#allocation5 + $0x50] sm:$0xff] %v1191
    %1201 = vst [vmem:[#allocation5 + $0x58] sm:$0xff] %v1193
    %v1202 = vld [vmem:[#allocation4] sm:$0xff]
    %v1203 = vld [vmem:[#allocation4 + $0x8] sm:$0xff]
    %v1204 = vld [vmem:[#allocation4 + $0x10] sm:$0xff]
    %v1205 = vld [vmem:[#allocation4 + $0x20] sm:$0xff]
    %v1206 = vld [vmem:[#allocation4 + $0x28] sm:$0xff]
    %v1207 = vld [vmem:[#allocation4 + $0x30] sm:$0xff]
    %v1208 = vld [vmem:[#allocation4 + $0x40] sm:$0xff]
    %v1209 = vld [vmem:[#allocation4 + $0x48] sm:$0xff]
    %v1210 = vld [vmem:[#allocation4 + $0x50] sm:$0xff]
    %v1211 = vld [vmem:[#allocation4 + $0x60] sm:$0xff]
    %v1212 = vld [vmem:[#allocation4 + $0x68] sm:$0xff]
    %v1213 = vld [vmem:[#allocation4 + $0x70] sm:$0xff]
    %1214 = vrot.lane.b32.xlu0 %v822, 127
    %v1215 = vpop.permute.xlu0 %1214
    %1216 = vrot.lane.b32.xlu0 %v823, 127
    %v1217 = vpop.permute.xlu0 %1216
    %vm1218 = vcmask 1039360
    %v1219 = vsel %vm1218, %v1215, %v1217
    %v1223 = vmul.f32 %v1202, %v1215
    %v1224 = vmul.f32 %v1203, %v1219
    %v1225 = vmul.f32 %v1204, %v1217
    %v1226 = vmul.f32 %v1205, %v1215
    %v1227 = vmul.f32 %v1206, %v1219
    %v1228 = vmul.f32 %v1207, %v1217
    %v1229 = vmul.f32 %v1208, %v1215
    %v1230 = vmul.f32 %v1209, %v1219
    %v1231 = vmul.f32 %v1210, %v1217
    %v1232 = vmul.f32 %v1211, %v1215
    %v1233 = vmul.f32 %v1212, %v1219
    %v1234 = vmul.f32 %v1213, %v1217
    %v1235 = vpack.c.bf16 %v1226, %v1223
    %v1236 = vpack.c.bf16 %v1227, %v1224
    %v1237 = vpack.c.bf16 %v1228, %v1225
    %v1238 = vpack.c.bf16 %v1232, %v1229
    %v1239 = vpack.c.bf16 %v1233, %v1230
    %v1240 = vpack.c.bf16 %v1234, %v1231
    %v1247 = vunpack.c.l.b16 %v1235
    %v1248 = vunpack.c.l.b16 %v1236
    %v1249 = vunpack.c.l.b16 %v1237
    %v1250 = vunpack.c.h.b16 %v1235
    %v1251 = vunpack.c.h.b16 %v1236
    %v1252 = vunpack.c.h.b16 %v1237
    %v1253 = vunpack.c.l.b16 %v1238
    %v1254 = vunpack.c.l.b16 %v1239
    %v1255 = vunpack.c.l.b16 %v1240
    %v1256 = vunpack.c.h.b16 %v1238
    %v1257 = vunpack.c.h.b16 %v1239
    %v1258 = vunpack.c.h.b16 %v1240
    %v1259 = vpack.c.b16 %v1248, %v1247
    %v1260 = vpack.c.b16 %v1249, %v1249
    %v1261 = vpack.c.b16 %v1251, %v1250
    %v1262 = vpack.c.b16 %v1252, %v1252
    %v1263 = vpack.c.b16 %v1254, %v1253
    %v1264 = vpack.c.b16 %v1255, %v1255
    %v1265 = vpack.c.b16 %v1257, %v1256
    %v1266 = vpack.c.b16 %v1258, %v1258
    %1267 = vrot.lane.b32.xlu0 %v1259, 1
    %v1268 = vpop.permute.xlu0 %1267
    %1269 = vrot.lane.b32.xlu0 %v1260, 1
    %v1270 = vpop.permute.xlu0 %1269
    %1271 = vrot.lane.b32.xlu0 %v1261, 1
    %v1272 = vpop.permute.xlu0 %1271
    %1273 = vrot.lane.b32.xlu0 %v1262, 1
    %v1274 = vpop.permute.xlu0 %1273
    %1275 = vrot.lane.b32.xlu0 %v1263, 1
    %v1276 = vpop.permute.xlu0 %1275
    %1277 = vrot.lane.b32.xlu0 %v1264, 1
    %v1278 = vpop.permute.xlu0 %1277
    %1279 = vrot.lane.b32.xlu0 %v1265, 1
    %v1280 = vpop.permute.xlu0 %1279
    %1281 = vrot.lane.b32.xlu0 %v1266, 1
    %v1282 = vpop.permute.xlu0 %1281
    %v1283 = vrot.slane %v1268, 4
    %v1284 = vrot.slane %v1270, 4
    %v1285 = vrot.slane %v1272, 4
    %v1286 = vrot.slane %v1274, 4
    %v1287 = vrot.slane %v1276, 4
    %v1288 = vrot.slane %v1278, 4
    %v1289 = vrot.slane %v1280, 4
    %v1290 = vrot.slane %v1282, 4
    %v1291 = vsel %vm991, %v1283, %v1284
    %vm1292 = vcmask 7168
    %v1293 = vsel %vm1292, %v1268, %v1291
    %v1294 = vsel %vm991, %v1285, %v1286
    %v1295 = vsel %vm1292, %v1272, %v1294
    %v1296 = vsel %vm991, %v1287, %v1288
    %v1297 = vsel %vm1292, %v1276, %v1296
    %v1298 = vsel %vm991, %v1289, %v1290
    %v1299 = vsel %vm1292, %v1280, %v1298
    %1304 = vst [vmem:[#allocation5 + $0x60] sm:$0xff] %v1293
    %1305 = vst [vmem:[#allocation5 + $0x68] sm:$0xff] %v1295
    %1306 = vst [vmem:[#allocation5 + $0x70] sm:$0xff] %v1297
    %1307 = vst [vmem:[#allocation5 + $0x78] sm:$0xff] %v1299
    %v1308 = vld [vmem:[#allocation4 + $0x8] sm:$0xff]
    %v1309 = vld [vmem:[#allocation4 + $0x10] sm:$0xff]
    %v1310 = vld [vmem:[#allocation4 + $0x28] sm:$0xff]
    %v1311 = vld [vmem:[#allocation4 + $0x30] sm:$0xff]
    %v1312 = vld [vmem:[#allocation4 + $0x48] sm:$0xff]
    %v1313 = vld [vmem:[#allocation4 + $0x50] sm:$0xff]
    %v1314 = vld [vmem:[#allocation4 + $0x68] sm:$0xff]
    %v1315 = vld [vmem:[#allocation4 + $0x70] sm:$0xff]
    %v1316 = vpack.c.bf16 %v1310, %v1308
    %v1317 = vpack.c.bf16 %v1311, %v1309
    %v1318 = vpack.c.bf16 %v1314, %v1312
    %v1319 = vpack.c.bf16 %v1315, %v1313
    %v1324 = vunpack.c.l.b16 %v1316
    %v1325 = vunpack.c.l.b16 %v1317
    %v1326 = vunpack.c.h.b16 %v1316
    %v1327 = vunpack.c.h.b16 %v1317
    %v1328 = vunpack.c.l.b16 %v1318
    %v1329 = vunpack.c.l.b16 %v1319
    %v1330 = vunpack.c.h.b16 %v1318
    %v1331 = vunpack.c.h.b16 %v1319
    %v1332 = vpack.c.b16 %v1325, %v1324
    %v1333 = vpack.c.b16 %v1327, %v1326
    %v1334 = vpack.c.b16 %v1329, %v1328
    %v1335 = vpack.c.b16 %v1331, %v1330
    %1340 = vst [vmem:[#allocation5 + $0x80] sm:$0xff] %v1332
    %1341 = vst [vmem:[#allocation5 + $0x88] sm:$0xff] %v1333
    %1342 = vst [vmem:[#allocation5 + $0x90] sm:$0xff] %v1334
    %1343 = vst [vmem:[#allocation5 + $0x98] sm:$0xff] %v1335
    %v1344 = vld [vmem:[#allocation4 + $0x8] sm:$0xff]
    %v1345 = vld [vmem:[#allocation4 + $0x10] sm:$0xff]
    %v1346 = vld [vmem:[#allocation4 + $0x18] sm:$0xff]
    %v1347 = vld [vmem:[#allocation4 + $0x28] sm:$0xff]
    %v1348 = vld [vmem:[#allocation4 + $0x30] sm:$0xff]
    %v1349 = vld [vmem:[#allocation4 + $0x38] sm:$0xff]
    %v1350 = vld [vmem:[#allocation4 + $0x48] sm:$0xff]
    %v1351 = vld [vmem:[#allocation4 + $0x50] sm:$0xff]
    %v1352 = vld [vmem:[#allocation4 + $0x58] sm:$0xff]
    %v1353 = vld [vmem:[#allocation4 + $0x68] sm:$0xff]
    %v1354 = vld [vmem:[#allocation4 + $0x70] sm:$0xff]
    %v1355 = vld [vmem:[#allocation4 + $0x78] sm:$0xff]
    %1356 = vrot.lane.b32.xlu0 %v828, 1
    %v1357 = vpop.permute.xlu0 %1356
    %1358 = vrot.lane.b32.xlu0 %v829, 1
    %v1359 = vpop.permute.xlu0 %1358
    %vm1360 = vcmask 7168
    %v1361 = vsel %vm1360, %v1357, %v1359
    %v1365 = vmul.f32 %v1344, %v1357
    %v1366 = vmul.f32 %v1345, %v1361
    %v1367 = vmul.f32 %v1346, %v1359
    %v1368 = vmul.f32 %v1347, %v1357
    %v1369 = vmul.f32 %v1348, %v1361
    %v1370 = vmul.f32 %v1349, %v1359
    %v1371 = vmul.f32 %v1350, %v1357
    %v1372 = vmul.f32 %v1351, %v1361
    %v1373 = vmul.f32 %v1352, %v1359
    %v1374 = vmul.f32 %v1353, %v1357
    %v1375 = vmul.f32 %v1354, %v1361
    %v1376 = vmul.f32 %v1355, %v1359
    %v1377 = vpack.c.bf16 %v1368, %v1365
    %v1378 = vpack.c.bf16 %v1369, %v1366
    %v1379 = vpack.c.bf16 %v1370, %v1367
    %v1380 = vpack.c.bf16 %v1374, %v1371
    %v1381 = vpack.c.bf16 %v1375, %v1372
    %v1382 = vpack.c.bf16 %v1376, %v1373
    %v1389 = vunpack.c.l.b16 %v1377
    %v1390 = vunpack.c.l.b16 %v1378
    %v1391 = vunpack.c.l.b16 %v1379
    %v1392 = vunpack.c.h.b16 %v1377
    %v1393 = vunpack.c.h.b16 %v1378
    %v1394 = vunpack.c.h.b16 %v1379
    %v1395 = vunpack.c.l.b16 %v1380
    %v1396 = vunpack.c.l.b16 %v1381
    %v1397 = vunpack.c.l.b16 %v1382
    %v1398 = vunpack.c.h.b16 %v1380
    %v1399 = vunpack.c.h.b16 %v1381
    %v1400 = vunpack.c.h.b16 %v1382
    %v1401 = vpack.c.b16 %v1390, %v1389
    %v1402 = vpack.c.b16 %v1391, %v1391
    %v1403 = vpack.c.b16 %v1393, %v1392
    %v1404 = vpack.c.b16 %v1394, %v1394
    %v1405 = vpack.c.b16 %v1396, %v1395
    %v1406 = vpack.c.b16 %v1397, %v1397
    %v1407 = vpack.c.b16 %v1399, %v1398
    %v1408 = vpack.c.b16 %v1400, %v1400
    %1409 = vrot.lane.b32.xlu0 %v1401, 127
    %v1410 = vpop.permute.xlu0 %1409
    %1411 = vrot.lane.b32.xlu0 %v1402, 127
    %v1412 = vpop.permute.xlu0 %1411
    %1413 = vrot.lane.b32.xlu0 %v1403, 127
    %v1414 = vpop.permute.xlu0 %1413
    %1415 = vrot.lane.b32.xlu0 %v1404, 127
    %v1416 = vpop.permute.xlu0 %1415
    %1417 = vrot.lane.b32.xlu0 %v1405, 127
    %v1418 = vpop.permute.xlu0 %1417
    %1419 = vrot.lane.b32.xlu0 %v1406, 127
    %v1420 = vpop.permute.xlu0 %1419
    %1421 = vrot.lane.b32.xlu0 %v1407, 127
    %v1422 = vpop.permute.xlu0 %1421
    %1423 = vrot.lane.b32.xlu0 %v1408, 127
    %v1424 = vpop.permute.xlu0 %1423
    %v1425 = vrot.slane %v1410, 4
    %v1426 = vrot.slane %v1412, 4
    %v1427 = vrot.slane %v1414, 4
    %v1428 = vrot.slane %v1416, 4
    %v1429 = vrot.slane %v1418, 4
    %v1430 = vrot.slane %v1420, 4
    %v1431 = vrot.slane %v1422, 4
    %v1432 = vrot.slane %v1424, 4
    %v1433 = vsel %vm991, %v1425, %v1426
    %vm1434 = vcmask 1039360
    %v1435 = vsel %vm1434, %v1410, %v1433
    %v1436 = vsel %vm991, %v1427, %v1428
    %v1437 = vsel %vm1434, %v1414, %v1436
    %v1438 = vsel %vm991, %v1429, %v1430
    %v1439 = vsel %vm1434, %v1418, %v1438
    %v1440 = vsel %vm991, %v1431, %v1432
    %v1441 = vsel %vm1434, %v1422, %v1440
    %1446 = vst [vmem:[#allocation5 + $0xa0] sm:$0xff] %v1435
    %1447 = vst [vmem:[#allocation5 + $0xa8] sm:$0xff] %v1437
    %1448 = vst [vmem:[#allocation5 + $0xb0] sm:$0xff] %v1439
    %1449 = vst [vmem:[#allocation5 + $0xb8] sm:$0xff] %v1441
    %v1450 = vld [vmem:[#allocation4 + $0x8] sm:$0xff]
    %v1451 = vld [vmem:[#allocation4 + $0x10] sm:$0xff]
    %v1452 = vld [vmem:[#allocation4 + $0x18] sm:$0xff]
    %v1453 = vld [vmem:[#allocation4 + $0x28] sm:$0xff]
    %v1454 = vld [vmem:[#allocation4 + $0x30] sm:$0xff]
    %v1455 = vld [vmem:[#allocation4 + $0x38] sm:$0xff]
    %v1456 = vld [vmem:[#allocation4 + $0x48] sm:$0xff]
    %v1457 = vld [vmem:[#allocation4 + $0x50] sm:$0xff]
    %v1458 = vld [vmem:[#allocation4 + $0x58] sm:$0xff]
    %v1459 = vld [vmem:[#allocation4 + $0x68] sm:$0xff]
    %v1460 = vld [vmem:[#allocation4 + $0x70] sm:$0xff]
    %v1461 = vld [vmem:[#allocation4 + $0x78] sm:$0xff]
    %1462 = vrot.lane.b32.xlu0 %v822, 15
    %v1463 = vpop.permute.xlu0 %1462
    %1464 = vrot.lane.b32.xlu0 %v823, 15
    %v1465 = vpop.permute.xlu0 %1464
    %vm1466 = vcmask 121856
    %v1467 = vsel %vm1466, %v1463, %v1465
    %v1471 = vmul.f32 %v1450, %v1463
    %v1472 = vmul.f32 %v1451, %v1467
    %v1473 = vmul.f32 %v1452, %v1465
    %v1474 = vmul.f32 %v1453, %v1463
    %v1475 = vmul.f32 %v1454, %v1467
    %v1476 = vmul.f32 %v1455, %v1465
    %v1477 = vmul.f32 %v1456, %v1463
    %v1478 = vmul.f32 %v1457, %v1467
    %v1479 = vmul.f32 %v1458, %v1465
    %v1480 = vmul.f32 %v1459, %v1463
    %v1481 = vmul.f32 %v1460, %v1467
    %v1482 = vmul.f32 %v1461, %v1465
    %v1483 = vpack.c.bf16 %v1474, %v1471
    %v1484 = vpack.c.bf16 %v1475, %v1472
    %v1485 = vpack.c.bf16 %v1476, %v1473
    %v1486 = vpack.c.bf16 %v1480, %v1477
    %v1487 = vpack.c.bf16 %v1481, %v1478
    %v1488 = vpack.c.bf16 %v1482, %v1479
    %v1495 = vunpack.c.l.b16 %v1483
    %v1496 = vunpack.c.l.b16 %v1484
    %v1497 = vunpack.c.l.b16 %v1485
    %v1498 = vunpack.c.h.b16 %v1483
    %v1499 = vunpack.c.h.b16 %v1484
    %v1500 = vunpack.c.h.b16 %v1485
    %v1501 = vunpack.c.l.b16 %v1486
    %v1502 = vunpack.c.l.b16 %v1487
    %v1503 = vunpack.c.l.b16 %v1488
    %v1504 = vunpack.c.h.b16 %v1486
    %v1505 = vunpack.c.h.b16 %v1487
    %v1506 = vunpack.c.h.b16 %v1488
    %v1507 = vpack.c.b16 %v1496, %v1495
    %v1508 = vpack.c.b16 %v1497, %v1497
    %v1509 = vpack.c.b16 %v1499, %v1498
    %v1510 = vpack.c.b16 %v1500, %v1500
    %v1511 = vpack.c.b16 %v1502, %v1501
    %v1512 = vpack.c.b16 %v1503, %v1503
    %v1513 = vpack.c.b16 %v1505, %v1504
    %v1514 = vpack.c.b16 %v1506, %v1506
    %1515 = vrot.lane.b32.xlu0 %v1507, 113
    %v1516 = vpop.permute.xlu0 %1515
    %1517 = vrot.lane.b32.xlu0 %v1508, 113
    %v1518 = vpop.permute.xlu0 %1517
    %1519 = vrot.lane.b32.xlu0 %v1509, 113
    %v1520 = vpop.permute.xlu0 %1519
    %1521 = vrot.lane.b32.xlu0 %v1510, 113
    %v1522 = vpop.permute.xlu0 %1521
    %1523 = vrot.lane.b32.xlu0 %v1511, 113
    %v1524 = vpop.permute.xlu0 %1523
    %1525 = vrot.lane.b32.xlu0 %v1512, 113
    %v1526 = vpop.permute.xlu0 %1525
    %1527 = vrot.lane.b32.xlu0 %v1513, 113
    %v1528 = vpop.permute.xlu0 %1527
    %1529 = vrot.lane.b32.xlu0 %v1514, 113
    %v1530 = vpop.permute.xlu0 %1529
    %v1531 = vrot.slane %v1516, 4
    %v1532 = vrot.slane %v1518, 4
    %v1533 = vrot.slane %v1520, 4
    %v1534 = vrot.slane %v1522, 4
    %v1535 = vrot.slane %v1524, 4
    %v1536 = vrot.slane %v1526, 4
    %v1537 = vrot.slane %v1528, 4
    %v1538 = vrot.slane %v1530, 4
    %v1539 = vsel %vm991, %v1531, %v1532
    %vm1540 = vcmask 924672
    %v1541 = vsel %vm1540, %v1516, %v1539
    %v1542 = vsel %vm991, %v1533, %v1534
    %v1543 = vsel %vm1540, %v1520, %v1542
    %v1544 = vsel %vm991, %v1535, %v1536
    %v1545 = vsel %vm1540, %v1524, %v1544
    %v1546 = vsel %vm991, %v1537, %v1538
    %v1547 = vsel %vm1540, %v1528, %v1546
    %1552 = vst [vmem:[#allocation5 + $0xc0] sm:$0xff] %v1541
    %1553 = vst [vmem:[#allocation5 + $0xc8] sm:$0xff] %v1543
    %1554 = vst [vmem:[#allocation5 + $0xd0] sm:$0xff] %v1545
    %1555 = vst [vmem:[#allocation5 + $0xd8] sm:$0xff] %v1547
    %v1556 = vld [vmem:[#allocation4 + $0x8] sm:$0xff]
    %v1557 = vld [vmem:[#allocation4 + $0x10] sm:$0xff]
    %v1558 = vld [vmem:[#allocation4 + $0x18] sm:$0xff]
    %v1559 = vld [vmem:[#allocation4 + $0x28] sm:$0xff]
    %v1560 = vld [vmem:[#allocation4 + $0x30] sm:$0xff]
    %v1561 = vld [vmem:[#allocation4 + $0x38] sm:$0xff]
    %v1562 = vld [vmem:[#allocation4 + $0x48] sm:$0xff]
    %v1563 = vld [vmem:[#allocation4 + $0x50] sm:$0xff]
    %v1564 = vld [vmem:[#allocation4 + $0x58] sm:$0xff]
    %v1565 = vld [vmem:[#allocation4 + $0x68] sm:$0xff]
    %v1566 = vld [vmem:[#allocation4 + $0x70] sm:$0xff]
    %v1567 = vld [vmem:[#allocation4 + $0x78] sm:$0xff]
    %v1568 = vpack.c.bf16 %v1559, %v1556
    %v1569 = vpack.c.bf16 %v1560, %v1557
    %v1570 = vpack.c.bf16 %v1561, %v1558
    %v1571 = vpack.c.bf16 %v1565, %v1562
    %v1572 = vpack.c.bf16 %v1566, %v1563
    %v1573 = vpack.c.bf16 %v1567, %v1564
    %v1580 = vunpack.c.l.b16 %v1568
    %v1581 = vunpack.c.l.b16 %v1569
    %v1582 = vunpack.c.l.b16 %v1570
    %v1583 = vunpack.c.h.b16 %v1568
    %v1584 = vunpack.c.h.b16 %v1569
    %v1585 = vunpack.c.h.b16 %v1570
    %v1586 = vunpack.c.l.b16 %v1571
    %v1587 = vunpack.c.l.b16 %v1572
    %v1588 = vunpack.c.l.b16 %v1573
    %v1589 = vunpack.c.h.b16 %v1571
    %v1590 = vunpack.c.h.b16 %v1572
    %v1591 = vunpack.c.h.b16 %v1573
    %v1592 = vpack.c.b16 %v1581, %v1580
    %v1593 = vpack.c.b16 %v1582, %v1582
    %v1594 = vpack.c.b16 %v1584, %v1583
    %v1595 = vpack.c.b16 %v1585, %v1585
    %v1596 = vpack.c.b16 %v1587, %v1586
    %v1597 = vpack.c.b16 %v1588, %v1588
    %v1598 = vpack.c.b16 %v1590, %v1589
    %v1599 = vpack.c.b16 %v1591, %v1591
    %1600 = vrot.lane.b32.xlu0 %v1592, 112
    %v1601 = vpop.permute.xlu0 %1600
    %1602 = vrot.lane.b32.xlu0 %v1593, 112
    %v1603 = vpop.permute.xlu0 %1602
    %1604 = vrot.lane.b32.xlu0 %v1594, 112
    %v1605 = vpop.permute.xlu0 %1604
    %1606 = vrot.lane.b32.xlu0 %v1595, 112
    %v1607 = vpop.permute.xlu0 %1606
    %1608 = vrot.lane.b32.xlu0 %v1596, 112
    %v1609 = vpop.permute.xlu0 %1608
    %1610 = vrot.lane.b32.xlu0 %v1597, 112
    %v1611 = vpop.permute.xlu0 %1610
    %1612 = vrot.lane.b32.xlu0 %v1598, 112
    %v1613 = vpop.permute.xlu0 %1612
    %1614 = vrot.lane.b32.xlu0 %v1599, 112
    %v1615 = vpop.permute.xlu0 %1614
    %v1616 = vrot.slane %v1601, 4
    %v1617 = vrot.slane %v1603, 4
    %v1618 = vrot.slane %v1605, 4
    %v1619 = vrot.slane %v1607, 4
    %v1620 = vrot.slane %v1609, 4
    %v1621 = vrot.slane %v1611, 4
    %v1622 = vrot.slane %v1613, 4
    %v1623 = vrot.slane %v1615, 4
    %v1624 = vsel %vm991, %v1616, %v1617
    %vm1625 = vcmask 916480
    %v1626 = vsel %vm1625, %v1601, %v1624
    %v1627 = vsel %vm991, %v1618, %v1619
    %v1628 = vsel %vm1625, %v1605, %v1627
    %v1629 = vsel %vm991, %v1620, %v1621
    %v1630 = vsel %vm1625, %v1609, %v1629
    %v1631 = vsel %vm991, %v1622, %v1623
    %v1632 = vsel %vm1625, %v1613, %v1631
    %1637 = vst [vmem:[#allocation5 + $0xe0] sm:$0xff] %v1626
    %1638 = vst [vmem:[#allocation5 + $0xe8] sm:$0xff] %v1628
    %1639 = vst [vmem:[#allocation5 + $0xf0] sm:$0xff] %v1630
    %1640 = vst [vmem:[#allocation5 + $0xf8] sm:$0xff] %v1632
    %v1641 = vld [vmem:[#allocation4 + $0x8] sm:$0xff]
    %v1642 = vld [vmem:[#allocation4 + $0x10] sm:$0xff]
    %v1643 = vld [vmem:[#allocation4 + $0x18] sm:$0xff]
    %v1644 = vld [vmem:[#allocation4 + $0x28] sm:$0xff]
    %v1645 = vld [vmem:[#allocation4 + $0x30] sm:$0xff]
    %v1646 = vld [vmem:[#allocation4 + $0x38] sm:$0xff]
    %v1647 = vld [vmem:[#allocation4 + $0x48] sm:$0xff]
    %v1648 = vld [vmem:[#allocation4 + $0x50] sm:$0xff]
    %v1649 = vld [vmem:[#allocation4 + $0x58] sm:$0xff]
    %v1650 = vld [vmem:[#allocation4 + $0x68] sm:$0xff]
    %v1651 = vld [vmem:[#allocation4 + $0x70] sm:$0xff]
    %v1652 = vld [vmem:[#allocation4 + $0x78] sm:$0xff]
    %1653 = vrot.lane.b32.xlu0 %v828, 17
    %v1654 = vpop.permute.xlu0 %1653
    %1655 = vrot.lane.b32.xlu0 %v829, 17
    %v1656 = vpop.permute.xlu0 %1655
    %vm1657 = vcmask 138240
    %v1658 = vsel %vm1657, %v1654, %v1656
    %v1662 = vmul.f32 %v1641, %v1654
    %v1663 = vmul.f32 %v1642, %v1658
    %v1664 = vmul.f32 %v1643, %v1656
    %v1665 = vmul.f32 %v1644, %v1654
    %v1666 = vmul.f32 %v1645, %v1658
    %v1667 = vmul.f32 %v1646, %v1656
    %v1668 = vmul.f32 %v1647, %v1654
    %v1669 = vmul.f32 %v1648, %v1658
    %v1670 = vmul.f32 %v1649, %v1656
    %v1671 = vmul.f32 %v1650, %v1654
    %v1672 = vmul.f32 %v1651, %v1658
    %v1673 = vmul.f32 %v1652, %v1656
    %v1674 = vpack.c.bf16 %v1665, %v1662
    %v1675 = vpack.c.bf16 %v1666, %v1663
    %v1676 = vpack.c.bf16 %v1667, %v1664
    %v1677 = vpack.c.bf16 %v1671, %v1668
    %v1678 = vpack.c.bf16 %v1672, %v1669
    %v1679 = vpack.c.bf16 %v1673, %v1670
    %v1686 = vunpack.c.l.b16 %v1674
    %v1687 = vunpack.c.l.b16 %v1675
    %v1688 = vunpack.c.l.b16 %v1676
    %v1689 = vunpack.c.h.b16 %v1674
    %v1690 = vunpack.c.h.b16 %v1675
    %v1691 = vunpack.c.h.b16 %v1676
    %v1692 = vunpack.c.l.b16 %v1677
    %v1693 = vunpack.c.l.b16 %v1678
    %v1694 = vunpack.c.l.b16 %v1679
    %v1695 = vunpack.c.h.b16 %v1677
    %v1696 = vunpack.c.h.b16 %v1678
    %v1697 = vunpack.c.h.b16 %v1679
    %v1698 = vpack.c.b16 %v1687, %v1686
    %v1699 = vpack.c.b16 %v1688, %v1688
    %v1700 = vpack.c.b16 %v1690, %v1689
    %v1701 = vpack.c.b16 %v1691, %v1691
    %v1702 = vpack.c.b16 %v1693, %v1692
    %v1703 = vpack.c.b16 %v1694, %v1694
    %v1704 = vpack.c.b16 %v1696, %v1695
    %v1705 = vpack.c.b16 %v1697, %v1697
    %1706 = vrot.lane.b32.xlu0 %v1698, 111
    %v1707 = vpop.permute.xlu0 %1706
    %1708 = vrot.lane.b32.xlu0 %v1699, 111
    %v1709 = vpop.permute.xlu0 %1708
    %1710 = vrot.lane.b32.xlu0 %v1700, 111
    %v1711 = vpop.permute.xlu0 %1710
    %1712 = vrot.lane.b32.xlu0 %v1701, 111
    %v1713 = vpop.permute.xlu0 %1712
    %1714 = vrot.lane.b32.xlu0 %v1702, 111
    %v1715 = vpop.permute.xlu0 %1714
    %1716 = vrot.lane.b32.xlu0 %v1703, 111
    %v1717 = vpop.permute.xlu0 %1716
    %1718 = vrot.lane.b32.xlu0 %v1704, 111
    %v1719 = vpop.permute.xlu0 %1718
    %1720 = vrot.lane.b32.xlu0 %v1705, 111
    %v1721 = vpop.permute.xlu0 %1720
    %v1722 = vrot.slane %v1707, 4
    %v1723 = vrot.slane %v1709, 4
    %v1724 = vrot.slane %v1711, 4
    %v1725 = vrot.slane %v1713, 4
    %v1726 = vrot.slane %v1715, 4
    %v1727 = vrot.slane %v1717, 4
    %v1728 = vrot.slane %v1719, 4
    %v1729 = vrot.slane %v1721, 4
    %v1730 = vsel %vm991, %v1722, %v1723
    %vm1731 = vcmask 908288
    %v1732 = vsel %vm1731, %v1707, %v1730
    %v1733 = vsel %vm991, %v1724, %v1725
    %v1734 = vsel %vm1731, %v1711, %v1733
    %v1735 = vsel %vm991, %v1726, %v1727
    %v1736 = vsel %vm1731, %v1715, %v1735
    %v1737 = vsel %vm991, %v1728, %v1729
    %v1738 = vsel %vm1731, %v1719, %v1737
    %1743 = vst [vmem:[#allocation5 + $0x100] sm:$0xff] %v1732
    %1744 = vst [vmem:[#allocation5 + $0x108] sm:$0xff] %v1734
    %1745 = vst [vmem:[#allocation5 + $0x110] sm:$0xff] %v1736
    %1746 = vst [vmem:[#allocation5 + $0x118] sm:$0xff] %v1738
    %v1747 = vld [vmem:[%s5] sm:$0xff]
    %v1748 = vld [vmem:[%s5 + $0x8] sm:$0xf]
    %v1749 = vld [vmem:[%s5 + $0xc] sm:$0xff]
    %v1750 = vld [vmem:[%s5 + $0x14] sm:$0xf]
    %v1751 = vld [vmem:[%s5 + $0x18] sm:$0xff]
    %v1752 = vld [vmem:[%s5 + $0x20] sm:$0xf]
    %v1753 = vld [vmem:[%s5 + $0x24] sm:$0xff]
    %v1754 = vld [vmem:[%s5 + $0x2c] sm:$0xf]
    %v1755 = vld [vmem:[#allocation5] sm:$0xff]
    %v1756 = vld [vmem:[#allocation5 + $0x8] sm:$0xff]
    %v1757 = vld [vmem:[#allocation5 + $0x10] sm:$0xff]
    %v1758 = vld [vmem:[#allocation5 + $0x18] sm:$0xff]
    %v1759 = vld [vmem:[#allocation5 + $0x20] sm:$0xff]
    %v1760 = vld [vmem:[#allocation5 + $0x28] sm:$0xff]
    %v1761 = vld [vmem:[#allocation5 + $0x30] sm:$0xff]
    %v1762 = vld [vmem:[#allocation5 + $0x38] sm:$0xff]
    %v1763 = vld [vmem:[#allocation5 + $0x40] sm:$0xff]
    %v1764 = vld [vmem:[#allocation5 + $0x48] sm:$0xff]
    %v1765 = vld [vmem:[#allocation5 + $0x50] sm:$0xff]
    %v1766 = vld [vmem:[#allocation5 + $0x58] sm:$0xff]
    %v1767 = vld [vmem:[#allocation5 + $0x60] sm:$0xff]
    %v1768 = vld [vmem:[#allocation5 + $0x68] sm:$0xff]
    %v1769 = vld [vmem:[#allocation5 + $0x70] sm:$0xff]
    %v1770 = vld [vmem:[#allocation5 + $0x78] sm:$0xff]
    %v1771 = vld [vmem:[#allocation5 + $0x80] sm:$0xff]
    %v1772 = vld [vmem:[#allocation5 + $0x88] sm:$0xff]
    %v1773 = vld [vmem:[#allocation5 + $0x90] sm:$0xff]
    %v1774 = vld [vmem:[#allocation5 + $0x98] sm:$0xff]
    %v1775 = vld [vmem:[#allocation5 + $0xa0] sm:$0xff]
    %v1776 = vld [vmem:[#allocation5 + $0xa8] sm:$0xff]
    %v1777 = vld [vmem:[#allocation5 + $0xb0] sm:$0xff]
    %v1778 = vld [vmem:[#allocation5 + $0xb8] sm:$0xff]
    %v1779 = vld [vmem:[#allocation5 + $0xc0] sm:$0xff]
    %v1780 = vld [vmem:[#allocation5 + $0xc8] sm:$0xff]
    %v1781 = vld [vmem:[#allocation5 + $0xd0] sm:$0xff]
    %v1782 = vld [vmem:[#allocation5 + $0xd8] sm:$0xff]
    %v1783 = vld [vmem:[#allocation5 + $0xe0] sm:$0xff]
    %v1784 = vld [vmem:[#allocation5 + $0xe8] sm:$0xff]
    %v1785 = vld [vmem:[#allocation5 + $0xf0] sm:$0xff]
    %v1786 = vld [vmem:[#allocation5 + $0xf8] sm:$0xff]
    %v1787 = vld [vmem:[#allocation5 + $0x100] sm:$0xff]
    %v1788 = vld [vmem:[#allocation5 + $0x108] sm:$0xff]
    %v1789 = vld [vmem:[#allocation5 + $0x110] sm:$0xff]
    %v1790 = vld [vmem:[#allocation5 + $0x118] sm:$0xff]
    %v1799 = vunpack.c.l.b16 %v1747
    %v1800 = vunpack.c.h.b16 %v1747
    %v1801 = vunpack.c.l.b16 %v1748
    %v1802 = vunpack.c.l.b16 %v1749
    %v1803 = vunpack.c.h.b16 %v1749
    %v1804 = vunpack.c.l.b16 %v1750
    %v1805 = vunpack.c.l.b16 %v1751
    %v1806 = vunpack.c.h.b16 %v1751
    %v1807 = vunpack.c.l.b16 %v1752
    %v1808 = vunpack.c.l.b16 %v1753
    %v1809 = vunpack.c.h.b16 %v1753
    %v1810 = vunpack.c.l.b16 %v1754
    %v1811 = vpack.c.b16 %v1802, %v1799
    %v1812 = vpack.c.b16 %v1803, %v1800
    %v1813 = vpack.c.b16 %v1804, %v1801
    %v1814 = vpack.c.b16 %v1808, %v1805
    %v1815 = vpack.c.b16 %v1809, %v1806
    %v1816 = vpack.c.b16 %v1810, %v1807
    %v1857 = vunpack.c.l.b16 %v1755
    %v1858 = vunpack.c.h.b16 %v1755
    %v1859 = vunpack.c.l.b16 %v1756
    %v1860 = vunpack.c.h.b16 %v1756
    %v1861 = vunpack.c.l.b16 %v1757
    %v1862 = vunpack.c.h.b16 %v1757
    %v1863 = vunpack.c.l.b16 %v1758
    %v1864 = vunpack.c.h.b16 %v1758
    %v1865 = vunpack.c.l.b16 %v1759
    %v1866 = vunpack.c.h.b16 %v1759
    %v1867 = vunpack.c.l.b16 %v1760
    %v1868 = vunpack.c.h.b16 %v1760
    %v1869 = vunpack.c.l.b16 %v1761
    %v1870 = vunpack.c.h.b16 %v1761
    %v1871 = vunpack.c.l.b16 %v1762
    %v1872 = vunpack.c.h.b16 %v1762
    %v1873 = vunpack.c.l.b16 %v1763
    %v1874 = vunpack.c.h.b16 %v1763
    %v1875 = vunpack.c.l.b16 %v1764
    %v1876 = vunpack.c.h.b16 %v1764
    %v1877 = vunpack.c.l.b16 %v1765
    %v1878 = vunpack.c.h.b16 %v1765
    %v1879 = vunpack.c.l.b16 %v1766
    %v1880 = vunpack.c.h.b16 %v1766
    %v1881 = vunpack.c.l.b16 %v1767
    %v1882 = vunpack.c.h.b16 %v1767
    %v1883 = vunpack.c.l.b16 %v1768
    %v1884 = vunpack.c.h.b16 %v1768
    %v1885 = vunpack.c.l.b16 %v1769
    %v1886 = vunpack.c.h.b16 %v1769
    %v1887 = vunpack.c.l.b16 %v1770
    %v1888 = vunpack.c.h.b16 %v1770
    %v1889 = vunpack.c.l.b16 %v1771
    %v1890 = vunpack.c.h.b16 %v1771
    %v1891 = vunpack.c.l.b16 %v1772
    %v1892 = vunpack.c.h.b16 %v1772
    %v1893 = vunpack.c.l.b16 %v1773
    %v1894 = vunpack.c.h.b16 %v1773
    %v1895 = vunpack.c.l.b16 %v1774
    %v1896 = vunpack.c.h.b16 %v1774
    %v1897 = vunpack.c.l.b16 %v1775
    %v1898 = vunpack.c.h.b16 %v1775
    %v1899 = vunpack.c.l.b16 %v1776
    %v1900 = vunpack.c.h.b16 %v1776
    %v1901 = vunpack.c.l.b16 %v1777
    %v1902 = vunpack.c.h.b16 %v1777
    %v1903 = vunpack.c.l.b16 %v1778
    %v1904 = vunpack.c.h.b16 %v1778
    %v1905 = vunpack.c.l.b16 %v1779
    %v1906 = vunpack.c.h.b16 %v1779
    %v1907 = vunpack.c.l.b16 %v1780
    %v1908 = vunpack.c.h.b16 %v1780
    %v1909 = vunpack.c.l.b16 %v1781
    %v1910 = vunpack.c.h.b16 %v1781
    %v1911 = vunpack.c.l.b16 %v1782
    %v1912 = vunpack.c.h.b16 %v1782
    %v1913 = vunpack.c.l.b16 %v1783
    %v1914 = vunpack.c.h.b16 %v1783
    %v1915 = vunpack.c.l.b16 %v1784
    %v1916 = vunpack.c.h.b16 %v1784
    %v1917 = vunpack.c.l.b16 %v1785
    %v1918 = vunpack.c.h.b16 %v1785
    %v1919 = vunpack.c.l.b16 %v1786
    %v1920 = vunpack.c.h.b16 %v1786
    %v1921 = vunpack.c.l.b16 %v1787
    %v1922 = vunpack.c.h.b16 %v1787
    %v1923 = vunpack.c.l.b16 %v1788
    %v1924 = vunpack.c.h.b16 %v1788
    %v1925 = vunpack.c.l.b16 %v1789
    %v1926 = vunpack.c.h.b16 %v1789
    %v1927 = vunpack.c.l.b16 %v1790
    %v1928 = vunpack.c.h.b16 %v1790
    %v1929 = vpack.c.b16 %v1859, %v1857
    %v1930 = vpack.c.b16 %v1860, %v1858
    %v1931 = vpack.c.b16 %v1863, %v1861
    %v1932 = vpack.c.b16 %v1864, %v1862
    %v1933 = vpack.c.b16 %v1867, %v1865
    %v1934 = vpack.c.b16 %v1868, %v1866
    %v1935 = vpack.c.b16 %v1871, %v1869
    %v1936 = vpack.c.b16 %v1872, %v1870
    %v1937 = vpack.c.b16 %v1875, %v1873
    %v1938 = vpack.c.b16 %v1876, %v1874
    %v1939 = vpack.c.b16 %v1879, %v1877
    %v1940 = vpack.c.b16 %v1880, %v1878
    %v1941 = vpack.c.b16 %v1883, %v1881
    %v1942 = vpack.c.b16 %v1884, %v1882
    %v1943 = vpack.c.b16 %v1887, %v1885
    %v1944 = vpack.c.b16 %v1888, %v1886
    %v1945 = vpack.c.b16 %v1891, %v1889
    %v1946 = vpack.c.b16 %v1892, %v1890
    %v1947 = vpack.c.b16 %v1895, %v1893
    %v1948 = vpack.c.b16 %v1896, %v1894
    %v1949 = vpack.c.b16 %v1899, %v1897
    %v1950 = vpack.c.b16 %v1900, %v1898
    %v1951 = vpack.c.b16 %v1903, %v1901
    %v1952 = vpack.c.b16 %v1904, %v1902
    %v1953 = vpack.c.b16 %v1907, %v1905
    %v1954 = vpack.c.b16 %v1908, %v1906
    %v1955 = vpack.c.b16 %v1911, %v1909
    %v1956 = vpack.c.b16 %v1912, %v1910
    %v1957 = vpack.c.b16 %v1915, %v1913
    %v1958 = vpack.c.b16 %v1916, %v1914
    %v1959 = vpack.c.b16 %v1919, %v1917
    %v1960 = vpack.c.b16 %v1920, %v1918
    %v1961 = vpack.c.b16 %v1923, %v1921
    %v1962 = vpack.c.b16 %v1924, %v1922
    %v1963 = vpack.c.b16 %v1927, %v1925
    %v1964 = vpack.c.b16 %v1928, %v1926
    %vm2001 = vcmask 261120
    %v2003 = vsel %vm2001, %v1813, 0
    %v2006 = vsel %vm2001, %v1816, 0
    %2008 = vmatprep.subr.bf16.mxu0 %v1944
    %2009 = vmatpush1.bf16.msra.mxu0 %v1943
    %2010 = vmatprep.subr.bf16.mxu0 %v1942
    %2011 = vmatpush1.bf16.msra.mxu0 %v1941
    %2012 = vmatprep.subr.bf16.mxu0 %v1940
    %2013 = vmatpush1.bf16.msra.mxu0 %v1939
    %2014 = vmatprep.subr.bf16.mxu0 %v1938
    %2015 = vmatpush1.bf16.msra.mxu0 %v1937
    %2016 = vmatprep.subr.bf16.mxu0 %v1936
    %2017 = vmatpush1.bf16.msra.mxu0 %v1935
    %2018 = vmatprep.subr.bf16.mxu0 %v1934
    %2019 = vmatpush1.bf16.msra.mxu0 %v1933
    %2020 = vmatprep.subr.bf16.mxu0 %v1932
    %2021 = vmatpush1.bf16.msra.mxu0 %v1931
    %2022 = vmatprep.subr.bf16.mxu0 %v1930
    %2023 = vmatpush1.bf16.msra.mxu0 %v1929
    %2024 = vmatprep.subr.bf16.mxu0 %v1960
    %2025 = vmatpush2.bf16.msra.mxu0 %v1959
    %2026 = vmatprep.subr.bf16.mxu0 %v1958
    %2027 = vmatpush2.bf16.msra.mxu0 %v1957
    %2028 = vmatprep.subr.bf16.mxu0 %v1956
    %2029 = vmatpush2.bf16.msra.mxu0 %v1955
    %2030 = vmatprep.subr.bf16.mxu0 %v1954
    %2031 = vmatpush2.bf16.msra.mxu0 %v1953
    %2032 = vmatprep.subr.bf16.mxu0 %v1952
    %2033 = vmatpush2.bf16.msra.mxu0 %v1951
    %2034 = vmatprep.subr.bf16.mxu0 %v1950
    %2035 = vmatpush2.bf16.msra.mxu0 %v1949
    %2036 = vmatprep.subr.bf16.mxu0 %v1948
    %2037 = vmatpush2.bf16.msra.mxu0 %v1947
    %2038 = vmatprep.subr.bf16.mxu0 %v1946
    %2039 = vmatpush2.bf16.msra.mxu0 %v1945
    %2040 = vmatprep.mubr.bf16.mxu0 %v1812
    %2041 = vmatmul.mubr.bf16.gmra.mxu0 %v1811
    %v2042 = vpop.f32.mrf.mxu0
    %v2043 = vadd.f32 0.0, %v2042
    %v2044 = vpop.f32.mrf.mxu0
    %v2045 = vadd.f32 0.0, %v2044
    %v2046 = vpop.f32.mrf.mxu0
    %v2047 = vadd.f32 0.0, %v2046
    %v2048 = vpop.f32.mrf.mxu0
    %v2049 = vadd.f32 0.0, %v2048
    %2050 = vmatprep.mubr.bf16.mxu0 %v1815
    %2051 = vmatmul.mubr.bf16.gmra.mxu0 %v1814
    %v2052 = vpop.f32.mrf.mxu0
    %v2053 = vadd.f32 0.0, %v2052
    %v2054 = vpop.f32.mrf.mxu0
    %v2055 = vadd.f32 0.0, %v2054
    %v2056 = vpop.f32.mrf.mxu0
    %v2057 = vpop.f32.mrf.mxu0
    %2058 = vdwg.mxu0
    %2059 = vmatprep.subr.bf16.mxu0 0
    %2060 = vmatpush1.bf16.msra.mxu0 0
    %2061 = vmatprep.subr.bf16.mxu0 0
    %2062 = vmatpush1.bf16.msra.mxu0 0
    %2063 = vmatprep.subr.bf16.mxu0 0
    %2064 = vmatpush1.bf16.msra.mxu0 0
    %2065 = vmatprep.subr.bf16.mxu0 0
    %2066 = vmatpush1.bf16.msra.mxu0 0
    %2067 = vmatprep.subr.bf16.mxu0 0
    %2068 = vmatpush1.bf16.msra.mxu0 0
    %2069 = vmatprep.subr.bf16.mxu0 0
    %2070 = vmatpush1.bf16.msra.mxu0 0
    %2071 = vmatprep.subr.bf16.mxu0 %v1964
    %2072 = vmatpush1.bf16.msra.mxu0 %v1963
    %2073 = vmatprep.subr.bf16.mxu0 %v1962
    %2074 = vmatpush1.bf16.msra.mxu0 %v1961
    %2075 = vmatprep.subr.bf16.mxu0 0
    %2076 = vmatpush2.bf16.msra.mxu0 0
    %2077 = vmatprep.subr.bf16.mxu0 0
    %2078 = vmatpush2.bf16.msra.mxu0 0
    %2079 = vmatprep.subr.bf16.mxu0 0
    %2080 = vmatpush2.bf16.msra.mxu0 0
    %2081 = vmatprep.subr.bf16.mxu0 0
    %2082 = vmatpush2.bf16.msra.mxu0 0
    %2083 = vmatprep.subr.bf16.mxu0 0
    %2084 = vmatpush2.bf16.msra.mxu0 0
    %2085 = vmatprep.subr.bf16.mxu0 0
    %2086 = vmatpush2.bf16.msra.mxu0 0
    %2087 = vmatprep.subr.bf16.mxu0 0
    %2088 = vmatpush2.bf16.msra.mxu0 0
    %2089 = vmatprep.subr.bf16.mxu0 0
    %2090 = vmatpush2.bf16.msra.mxu0 0
    %2091 = vmatprep.mubr.bf16.mxu0 0
    %2092 = vmatmul.mubr.bf16.gmra.mxu0 %v2003
    %v2093 = vpop.f32.mrf.mxu0
    %v2094 = vadd.f32 %v2043, %v2093
    %v2095 = vpop.f32.mrf.mxu0
    %v2096 = vadd.f32 %v2045, %v2095
    %v2097 = vpop.f32.mrf.mxu0
    %v2098 = vadd.f32 %v2047, %v2097
    %v2099 = vpop.f32.mrf.mxu0
    %v2100 = vadd.f32 %v2049, %v2099
    %2101 = vmatprep.mubr.bf16.mxu0 0
    %2102 = vmatmul.mubr.bf16.gmra.mxu0 %v2006
    %v2103 = vpop.f32.mrf.mxu0
    %v2104 = vadd.f32 %v2053, %v2103
    %v2105 = vpop.f32.mrf.mxu0
    %v2106 = vadd.f32 %v2055, %v2105
    %v2107 = vpop.f32.mrf.mxu0
    %v2108 = vpop.f32.mrf.mxu0
    %2109 = vdwg.mxu0
    %v2110 = vld [vmem:[%s6] sm:$0xff]
    %v2111 = vld [vmem:[%s6 + $0x8] sm:$0xff]
    %v2112 = vld [vmem:[%s6 + $0x10] sm:$0xff]
    %2114 = vset.pattern.permute.xlu0 0
    %2115 = vperm.xlu0 %2114, %v2110
    %v2116 = vpop.permute.xlu0 %2115
    %2119 = vset.pattern.permute.xlu0 0
    %2120 = vperm.xlu0 %2119, %v2111
    %v2121 = vpop.permute.xlu0 %2120
    %2124 = vset.pattern.permute.xlu0 0
    %2125 = vperm.xlu0 %2124, %v2112
    %v2126 = vpop.permute.xlu0 %2125
    %v2128 = vadd.f32 %v2094, %v2116
    %v2129 = vadd.f32 %v2096, %v2116
    %v2130 = vadd.f32 %v2098, %v2121
    %v2131 = vadd.f32 %v2100, %v2121
    %v2132 = vadd.f32 %v2104, %v2126
    %v2133 = vadd.f32 %v2106, %v2126
    %v2134 = vmax.f32 %v2128, 0.0
    %v2135 = vmax.f32 %v2129, 0.0
    %v2136 = vmax.f32 %v2130, 0.0
    %v2137 = vmax.f32 %v2131, 0.0
    %v2138 = vmax.f32 %v2132, 0.0
    %v2139 = vmax.f32 %v2133, 0.0
    %v2140 = vld [vmem:[#allocation3] sm:$0xff]
    %v2141 = vld [vmem:[#allocation3 + $0x8] sm:$0xff]
    %v2142 = vld [vmem:[#allocation3 + $0x10] sm:$0xff]
    %v2143 = vld [vmem:[#allocation3 + $0x18] sm:$0xff]
    %v2144 = vld [vmem:[#allocation3 + $0x20] sm:$0xff]
    %v2145 = vld [vmem:[#allocation3 + $0x28] sm:$0xff]
    %v2146 = vadd.f32 %v2134, %v2140
    %v2147 = vadd.f32 %v2135, %v2141
    %v2148 = vadd.f32 %v2136, %v2142
    %v2149 = vadd.f32 %v2137, %v2143
    %v2150 = vadd.f32 %v2138, %v2144
    %v2151 = vadd.f32 %v2139, %v2145
    %2152 = vst [vmem:[#allocation6] sm:$0xff] %v2146
    %2153 = vst [vmem:[#allocation6 + $0x8] sm:$0xff] %v2147
    %2154 = vst [vmem:[#allocation6 + $0x10] sm:$0xff] %v2148
    %2155 = vst [vmem:[#allocation6 + $0x18] sm:$0xff] %v2149
    %2156 = vst [vmem:[#allocation6 + $0x20] sm:$0xff] %v2150
    %2157 = vst [vmem:[#allocation6 + $0x28] sm:$0xff] %v2151
    %v2158 = vld [vmem:[%s711] sm:$0xff]
    %v2159 = vld [vmem:[%s711 + $0x8] sm:$0xff]
    %v2160 = vld [vmem:[%s711 + $0x10] sm:$0xff]
    %v2161 = vld [vmem:[%s711 + $0x18] sm:$0xff]
    %v2162 = vld [vmem:[%s711 + $0x20] sm:$0xff]
    %v2163 = vld [vmem:[%s711 + $0x28] sm:$0xff]
    %v2164 = vmul.f32 %v2158, %v855
    %v2165 = vmul.f32 %v2159, %v855
    %v2166 = vmul.f32 %v2160, %v860
    %v2167 = vmul.f32 %v2161, %v860
    %v2168 = vmul.f32 %v2162, %v865
    %v2169 = vmul.f32 %v2163, %v865
    %v2170 = vadd.f32 %v2164, %v876
    %v2171 = vadd.f32 %v2165, %v876
    %v2172 = vadd.f32 %v2166, %v881
    %v2173 = vadd.f32 %v2167, %v881
    %v2174 = vadd.f32 %v2168, %v886
    %v2175 = vadd.f32 %v2169, %v886
    %2176 = vst [vmem:[#allocation4 + $0x8] sm:$0xff] %v2170
    %2177 = vst [vmem:[#allocation4 + $0x10] sm:$0xff] %v2171
    %2178 = vst [vmem:[#allocation4 + $0x28] sm:$0xff] %v2172
    %2179 = vst [vmem:[#allocation4 + $0x30] sm:$0xff] %v2173
    %2180 = vst [vmem:[#allocation4 + $0x48] sm:$0xff] %v2174
    %2181 = vst [vmem:[#allocation4 + $0x50] sm:$0xff] %v2175
    %v2182 = vld [vmem:[#allocation4] sm:$0xff]
    %v2183 = vld [vmem:[#allocation4 + $0x8] sm:$0xff]
    %v2184 = vld [vmem:[#allocation4 + $0x10] sm:$0xff]
    %v2185 = vld [vmem:[#allocation4 + $0x20] sm:$0xff]
    %v2186 = vld [vmem:[#allocation4 + $0x28] sm:$0xff]
    %v2187 = vld [vmem:[#allocation4 + $0x30] sm:$0xff]
    %v2188 = vld [vmem:[#allocation4 + $0x40] sm:$0xff]
    %v2189 = vld [vmem:[#allocation4 + $0x48] sm:$0xff]
    %v2190 = vld [vmem:[#allocation4 + $0x50] sm:$0xff]
    %v2191 = vld [vmem:[#allocation4 + $0x60] sm:$0xff]
    %v2192 = vld [vmem:[#allocation4 + $0x68] sm:$0xff]
    %v2193 = vld [vmem:[#allocation4 + $0x70] sm:$0xff]
    %v2194 = vmul.f32 %v2182, %v915
    %v2195 = vmul.f32 %v2183, %v919
    %v2196 = vmul.f32 %v2184, %v917
    %v2197 = vmul.f32 %v2185, %v915
    %v2198 = vmul.f32 %v2186, %v919
    %v2199 = vmul.f32 %v2187, %v917
    %v2200 = vmul.f32 %v2188, %v915
    %v2201 = vmul.f32 %v2189, %v919
    %v2202 = vmul.f32 %v2190, %v917
    %v2203 = vmul.f32 %v2191, %v915
    %v2204 = vmul.f32 %v2192, %v919
    %v2205 = vmul.f32 %v2193, %v917
    %v2206 = vpack.c.bf16 %v2197, %v2194
    %v2207 = vpack.c.bf16 %v2198, %v2195
    %v2208 = vpack.c.bf16 %v2199, %v2196
    %v2209 = vpack.c.bf16 %v2203, %v2200
    %v2210 = vpack.c.bf16 %v2204, %v2201
    %v2211 = vpack.c.bf16 %v2205, %v2202
    %v2218 = vunpack.c.l.b16 %v2206
    %v2219 = vunpack.c.l.b16 %v2207
    %v2220 = vunpack.c.l.b16 %v2208
    %v2221 = vunpack.c.h.b16 %v2206
    %v2222 = vunpack.c.h.b16 %v2207
    %v2223 = vunpack.c.h.b16 %v2208
    %v2224 = vunpack.c.l.b16 %v2209
    %v2225 = vunpack.c.l.b16 %v2210
    %v2226 = vunpack.c.l.b16 %v2211
    %v2227 = vunpack.c.h.b16 %v2209
    %v2228 = vunpack.c.h.b16 %v2210
    %v2229 = vunpack.c.h.b16 %v2211
    %v2230 = vpack.c.b16 %v2219, %v2218
    %v2231 = vpack.c.b16 %v2220, %v2220
    %v2232 = vpack.c.b16 %v2222, %v2221
    %v2233 = vpack.c.b16 %v2223, %v2223
    %v2234 = vpack.c.b16 %v2225, %v2224
    %v2235 = vpack.c.b16 %v2226, %v2226
    %v2236 = vpack.c.b16 %v2228, %v2227
    %v2237 = vpack.c.b16 %v2229, %v2229
    %2238 = vrot.lane.b32.xlu0 %v2230, 17
    %v2239 = vpop.permute.xlu0 %2238
    %2240 = vrot.lane.b32.xlu0 %v2231, 17
    %v2241 = vpop.permute.xlu0 %2240
    %2242 = vrot.lane.b32.xlu0 %v2232, 17
    %v2243 = vpop.permute.xlu0 %2242
    %2244 = vrot.lane.b32.xlu0 %v2233, 17
    %v2245 = vpop.permute.xlu0 %2244
    %2246 = vrot.lane.b32.xlu0 %v2234, 17
    %v2247 = vpop.permute.xlu0 %2246
    %2248 = vrot.lane.b32.xlu0 %v2235, 17
    %v2249 = vpop.permute.xlu0 %2248
    %2250 = vrot.lane.b32.xlu0 %v2236, 17
    %v2251 = vpop.permute.xlu0 %2250
    %2252 = vrot.lane.b32.xlu0 %v2237, 17
    %v2253 = vpop.permute.xlu0 %2252
    %v2254 = vrot.slane %v2239, 4
    %v2255 = vrot.slane %v2241, 4
    %v2256 = vrot.slane %v2243, 4
    %v2257 = vrot.slane %v2245, 4
    %v2258 = vrot.slane %v2247, 4
    %v2259 = vrot.slane %v2249, 4
    %v2260 = vrot.slane %v2251, 4
    %v2261 = vrot.slane %v2253, 4
    %v2262 = vsel %vm991, %v2254, %v2255
    %v2263 = vsel %vm993, %v2239, %v2262
    %v2264 = vsel %vm991, %v2256, %v2257
    %v2265 = vsel %vm993, %v2243, %v2264
    %v2266 = vsel %vm991, %v2258, %v2259
    %v2267 = vsel %vm993, %v2247, %v2266
    %v2268 = vsel %vm991, %v2260, %v2261
    %v2269 = vsel %vm993, %v2251, %v2268
    %2274 = vst [vmem:[#allocation5] sm:$0xff] %v2263
    %2275 = vst [vmem:[#allocation5 + $0x8] sm:$0xff] %v2265
    %2276 = vst [vmem:[#allocation5 + $0x10] sm:$0xff] %v2267
    %2277 = vst [vmem:[#allocation5 + $0x18] sm:$0xff] %v2269
    %v2278 = vld [vmem:[#allocation4] sm:$0xff]
    %v2279 = vld [vmem:[#allocation4 + $0x8] sm:$0xff]
    %v2280 = vld [vmem:[#allocation4 + $0x10] sm:$0xff]
    %v2281 = vld [vmem:[#allocation4 + $0x20] sm:$0xff]
    %v2282 = vld [vmem:[#allocation4 + $0x28] sm:$0xff]
    %v2283 = vld [vmem:[#allocation4 + $0x30] sm:$0xff]
    %v2284 = vld [vmem:[#allocation4 + $0x40] sm:$0xff]
    %v2285 = vld [vmem:[#allocation4 + $0x48] sm:$0xff]
    %v2286 = vld [vmem:[#allocation4 + $0x50] sm:$0xff]
    %v2287 = vld [vmem:[#allocation4 + $0x60] sm:$0xff]
    %v2288 = vld [vmem:[#allocation4 + $0x68] sm:$0xff]
    %v2289 = vld [vmem:[#allocation4 + $0x70] sm:$0xff]
    %v2290 = vpack.c.bf16 %v2281, %v2278
    %v2291 = vpack.c.bf16 %v2282, %v2279
    %v2292 = vpack.c.bf16 %v2283, %v2280
    %v2293 = vpack.c.bf16 %v2287, %v2284
    %v2294 = vpack.c.bf16 %v2288, %v2285
    %v2295 = vpack.c.bf16 %v2289, %v2286
    %v2302 = vunpack.c.l.b16 %v2290
    %v2303 = vunpack.c.l.b16 %v2291
    %v2304 = vunpack.c.l.b16 %v2292
    %v2305 = vunpack.c.h.b16 %v2290
    %v2306 = vunpack.c.h.b16 %v2291
    %v2307 = vunpack.c.h.b16 %v2292
    %v2308 = vunpack.c.l.b16 %v2293
    %v2309 = vunpack.c.l.b16 %v2294
    %v2310 = vunpack.c.l.b16 %v2295
    %v2311 = vunpack.c.h.b16 %v2293
    %v2312 = vunpack.c.h.b16 %v2294
    %v2313 = vunpack.c.h.b16 %v2295
    %v2314 = vpack.c.b16 %v2303, %v2302
    %v2315 = vpack.c.b16 %v2304, %v2304
    %v2316 = vpack.c.b16 %v2306, %v2305
    %v2317 = vpack.c.b16 %v2307, %v2307
    %v2318 = vpack.c.b16 %v2309, %v2308
    %v2319 = vpack.c.b16 %v2310, %v2310
    %v2320 = vpack.c.b16 %v2312, %v2311
    %v2321 = vpack.c.b16 %v2313, %v2313
    %2322 = vrot.lane.b32.xlu0 %v2314, 16
    %v2323 = vpop.permute.xlu0 %2322
    %2324 = vrot.lane.b32.xlu0 %v2315, 16
    %v2325 = vpop.permute.xlu0 %2324
    %2326 = vrot.lane.b32.xlu0 %v2316, 16
    %v2327 = vpop.permute.xlu0 %2326
    %2328 = vrot.lane.b32.xlu0 %v2317, 16
    %v2329 = vpop.permute.xlu0 %2328
    %2330 = vrot.lane.b32.xlu0 %v2318, 16
    %v2331 = vpop.permute.xlu0 %2330
    %2332 = vrot.lane.b32.xlu0 %v2319, 16
    %v2333 = vpop.permute.xlu0 %2332
    %2334 = vrot.lane.b32.xlu0 %v2320, 16
    %v2335 = vpop.permute.xlu0 %2334
    %2336 = vrot.lane.b32.xlu0 %v2321, 16
    %v2337 = vpop.permute.xlu0 %2336
    %v2338 = vrot.slane %v2323, 4
    %v2339 = vrot.slane %v2325, 4
    %v2340 = vrot.slane %v2327, 4
    %v2341 = vrot.slane %v2329, 4
    %v2342 = vrot.slane %v2331, 4
    %v2343 = vrot.slane %v2333, 4
    %v2344 = vrot.slane %v2335, 4
    %v2345 = vrot.slane %v2337, 4
    %v2346 = vsel %vm991, %v2338, %v2339
    %v2347 = vsel %vm1078, %v2323, %v2346
    %v2348 = vsel %vm991, %v2340, %v2341
    %v2349 = vsel %vm1078, %v2327, %v2348
    %v2350 = vsel %vm991, %v2342, %v2343
    %v2351 = vsel %vm1078, %v2331, %v2350
    %v2352 = vsel %vm991, %v2344, %v2345
    %v2353 = vsel %vm1078, %v2335, %v2352
    %2358 = vst [vmem:[#allocation5 + $0x20] sm:$0xff] %v2347
    %2359 = vst [vmem:[#allocation5 + $0x28] sm:$0xff] %v2349
    %2360 = vst [vmem:[#allocation5 + $0x30] sm:$0xff] %v2351
    %2361 = vst [vmem:[#allocation5 + $0x38] sm:$0xff] %v2353
    %v2362 = vld [vmem:[#allocation4] sm:$0xff]
    %v2363 = vld [vmem:[#allocation4 + $0x8] sm:$0xff]
    %v2364 = vld [vmem:[#allocation4 + $0x10] sm:$0xff]
    %v2365 = vld [vmem:[#allocation4 + $0x20] sm:$0xff]
    %v2366 = vld [vmem:[#allocation4 + $0x28] sm:$0xff]
    %v2367 = vld [vmem:[#allocation4 + $0x30] sm:$0xff]
    %v2368 = vld [vmem:[#allocation4 + $0x40] sm:$0xff]
    %v2369 = vld [vmem:[#allocation4 + $0x48] sm:$0xff]
    %v2370 = vld [vmem:[#allocation4 + $0x50] sm:$0xff]
    %v2371 = vld [vmem:[#allocation4 + $0x60] sm:$0xff]
    %v2372 = vld [vmem:[#allocation4 + $0x68] sm:$0xff]
    %v2373 = vld [vmem:[#allocation4 + $0x70] sm:$0xff]
    %v2374 = vmul.f32 %v2362, %v1109
    %v2375 = vmul.f32 %v2363, %v1113
    %v2376 = vmul.f32 %v2364, %v1111
    %v2377 = vmul.f32 %v2365, %v1109
    %v2378 = vmul.f32 %v2366, %v1113
    %v2379 = vmul.f32 %v2367, %v1111
    %v2380 = vmul.f32 %v2368, %v1109
    %v2381 = vmul.f32 %v2369, %v1113
    %v2382 = vmul.f32 %v2370, %v1111
    %v2383 = vmul.f32 %v2371, %v1109
    %v2384 = vmul.f32 %v2372, %v1113
    %v2385 = vmul.f32 %v2373, %v1111
    %v2386 = vpack.c.bf16 %v2377, %v2374
    %v2387 = vpack.c.bf16 %v2378, %v2375
    %v2388 = vpack.c.bf16 %v2379, %v2376
    %v2389 = vpack.c.bf16 %v2383, %v2380
    %v2390 = vpack.c.bf16 %v2384, %v2381
    %v2391 = vpack.c.bf16 %v2385, %v2382
    %v2398 = vunpack.c.l.b16 %v2386
    %v2399 = vunpack.c.l.b16 %v2387
    %v2400 = vunpack.c.l.b16 %v2388
    %v2401 = vunpack.c.h.b16 %v2386
    %v2402 = vunpack.c.h.b16 %v2387
    %v2403 = vunpack.c.h.b16 %v2388
    %v2404 = vunpack.c.l.b16 %v2389
    %v2405 = vunpack.c.l.b16 %v2390
    %v2406 = vunpack.c.l.b16 %v2391
    %v2407 = vunpack.c.h.b16 %v2389
    %v2408 = vunpack.c.h.b16 %v2390
    %v2409 = vunpack.c.h.b16 %v2391
    %v2410 = vpack.c.b16 %v2399, %v2398
    %v2411 = vpack.c.b16 %v2400, %v2400
    %v2412 = vpack.c.b16 %v2402, %v2401
    %v2413 = vpack.c.b16 %v2403, %v2403
    %v2414 = vpack.c.b16 %v2405, %v2404
    %v2415 = vpack.c.b16 %v2406, %v2406
    %v2416 = vpack.c.b16 %v2408, %v2407
    %v2417 = vpack.c.b16 %v2409, %v2409
    %2418 = vrot.lane.b32.xlu0 %v2410, 15
    %v2419 = vpop.permute.xlu0 %2418
    %2420 = vrot.lane.b32.xlu0 %v2411, 15
    %v2421 = vpop.permute.xlu0 %2420
    %2422 = vrot.lane.b32.xlu0 %v2412, 15
    %v2423 = vpop.permute.xlu0 %2422
    %2424 = vrot.lane.b32.xlu0 %v2413, 15
    %v2425 = vpop.permute.xlu0 %2424
    %2426 = vrot.lane.b32.xlu0 %v2414, 15
    %v2427 = vpop.permute.xlu0 %2426
    %2428 = vrot.lane.b32.xlu0 %v2415, 15
    %v2429 = vpop.permute.xlu0 %2428
    %2430 = vrot.lane.b32.xlu0 %v2416, 15
    %v2431 = vpop.permute.xlu0 %2430
    %2432 = vrot.lane.b32.xlu0 %v2417, 15
    %v2433 = vpop.permute.xlu0 %2432
    %v2434 = vrot.slane %v2419, 4
    %v2435 = vrot.slane %v2421, 4
    %v2436 = vrot.slane %v2423, 4
    %v2437 = vrot.slane %v2425, 4
    %v2438 = vrot.slane %v2427, 4
    %v2439 = vrot.slane %v2429, 4
    %v2440 = vrot.slane %v2431, 4
    %v2441 = vrot.slane %v2433, 4
    %v2442 = vsel %vm991, %v2434, %v2435
    %v2443 = vsel %vm1186, %v2419, %v2442
    %v2444 = vsel %vm991, %v2436, %v2437
    %v2445 = vsel %vm1186, %v2423, %v2444
    %v2446 = vsel %vm991, %v2438, %v2439
    %v2447 = vsel %vm1186, %v2427, %v2446
    %v2448 = vsel %vm991, %v2440, %v2441
    %v2449 = vsel %vm1186, %v2431, %v2448
    %2454 = vst [vmem:[#allocation5 + $0x40] sm:$0xff] %v2443
    %2455 = vst [vmem:[#allocation5 + $0x48] sm:$0xff] %v2445
    %2456 = vst [vmem:[#allocation5 + $0x50] sm:$0xff] %v2447
    %2457 = vst [vmem:[#allocation5 + $0x58] sm:$0xff] %v2449
    %v2458 = vld [vmem:[#allocation4] sm:$0xff]
    %v2459 = vld [vmem:[#allocation4 + $0x8] sm:$0xff]
    %v2460 = vld [vmem:[#allocation4 + $0x10] sm:$0xff]
    %v2461 = vld [vmem:[#allocation4 + $0x20] sm:$0xff]
    %v2462 = vld [vmem:[#allocation4 + $0x28] sm:$0xff]
    %v2463 = vld [vmem:[#allocation4 + $0x30] sm:$0xff]
    %v2464 = vld [vmem:[#allocation4 + $0x40] sm:$0xff]
    %v2465 = vld [vmem:[#allocation4 + $0x48] sm:$0xff]
    %v2466 = vld [vmem:[#allocation4 + $0x50] sm:$0xff]
    %v2467 = vld [vmem:[#allocation4 + $0x60] sm:$0xff]
    %v2468 = vld [vmem:[#allocation4 + $0x68] sm:$0xff]
    %v2469 = vld [vmem:[#allocation4 + $0x70] sm:$0xff]
    %v2470 = vmul.f32 %v2458, %v1215
    %v2471 = vmul.f32 %v2459, %v1219
    %v2472 = vmul.f32 %v2460, %v1217
    %v2473 = vmul.f32 %v2461, %v1215
    %v2474 = vmul.f32 %v2462, %v1219
    %v2475 = vmul.f32 %v2463, %v1217
    %v2476 = vmul.f32 %v2464, %v1215
    %v2477 = vmul.f32 %v2465, %v1219
    %v2478 = vmul.f32 %v2466, %v1217
    %v2479 = vmul.f32 %v2467, %v1215
    %v2480 = vmul.f32 %v2468, %v1219
    %v2481 = vmul.f32 %v2469, %v1217
    %v2482 = vpack.c.bf16 %v2473, %v2470
    %v2483 = vpack.c.bf16 %v2474, %v2471
    %v2484 = vpack.c.bf16 %v2475, %v2472
    %v2485 = vpack.c.bf16 %v2479, %v2476
    %v2486 = vpack.c.bf16 %v2480, %v2477
    %v2487 = vpack.c.bf16 %v2481, %v2478
    %v2494 = vunpack.c.l.b16 %v2482
    %v2495 = vunpack.c.l.b16 %v2483
    %v2496 = vunpack.c.l.b16 %v2484
    %v2497 = vunpack.c.h.b16 %v2482
    %v2498 = vunpack.c.h.b16 %v2483
    %v2499 = vunpack.c.h.b16 %v2484
    %v2500 = vunpack.c.l.b16 %v2485
    %v2501 = vunpack.c.l.b16 %v2486
    %v2502 = vunpack.c.l.b16 %v2487
    %v2503 = vunpack.c.h.b16 %v2485
    %v2504 = vunpack.c.h.b16 %v2486
    %v2505 = vunpack.c.h.b16 %v2487
    %v2506 = vpack.c.b16 %v2495, %v2494
    %v2507 = vpack.c.b16 %v2496, %v2496
    %v2508 = vpack.c.b16 %v2498, %v2497
    %v2509 = vpack.c.b16 %v2499, %v2499
    %v2510 = vpack.c.b16 %v2501, %v2500
    %v2511 = vpack.c.b16 %v2502, %v2502
    %v2512 = vpack.c.b16 %v2504, %v2503
    %v2513 = vpack.c.b16 %v2505, %v2505
    %2514 = vrot.lane.b32.xlu0 %v2506, 1
    %v2515 = vpop.permute.xlu0 %2514
    %2516 = vrot.lane.b32.xlu0 %v2507, 1
    %v2517 = vpop.permute.xlu0 %2516
    %2518 = vrot.lane.b32.xlu0 %v2508, 1
    %v2519 = vpop.permute.xlu0 %2518
    %2520 = vrot.lane.b32.xlu0 %v2509, 1
    %v2521 = vpop.permute.xlu0 %2520
    %2522 = vrot.lane.b32.xlu0 %v2510, 1
    %v2523 = vpop.permute.xlu0 %2522
    %2524 = vrot.lane.b32.xlu0 %v2511, 1
    %v2525 = vpop.permute.xlu0 %2524
    %2526 = vrot.lane.b32.xlu0 %v2512, 1
    %v2527 = vpop.permute.xlu0 %2526
    %2528 = vrot.lane.b32.xlu0 %v2513, 1
    %v2529 = vpop.permute.xlu0 %2528
    %v2530 = vrot.slane %v2515, 4
    %v2531 = vrot.slane %v2517, 4
    %v2532 = vrot.slane %v2519, 4
    %v2533 = vrot.slane %v2521, 4
    %v2534 = vrot.slane %v2523, 4
    %v2535 = vrot.slane %v2525, 4
    %v2536 = vrot.slane %v2527, 4
    %v2537 = vrot.slane %v2529, 4
    %v2538 = vsel %vm991, %v2530, %v2531
    %v2539 = vsel %vm1292, %v2515, %v2538
    %v2540 = vsel %vm991, %v2532, %v2533
    %v2541 = vsel %vm1292, %v2519, %v2540
    %v2542 = vsel %vm991, %v2534, %v2535
    %v2543 = vsel %vm1292, %v2523, %v2542
    %v2544 = vsel %vm991, %v2536, %v2537
    %v2545 = vsel %vm1292, %v2527, %v2544
    %2550 = vst [vmem:[#allocation5 + $0x60] sm:$0xff] %v2539
    %2551 = vst [vmem:[#allocation5 + $0x68] sm:$0xff] %v2541
    %2552 = vst [vmem:[#allocation5 + $0x70] sm:$0xff] %v2543
    %2553 = vst [vmem:[#allocation5 + $0x78] sm:$0xff] %v2545
    %v2554 = vld [vmem:[#allocation4 + $0x8] sm:$0xff]
    %v2555 = vld [vmem:[#allocation4 + $0x10] sm:$0xff]
    %v2556 = vld [vmem:[#allocation4 + $0x28] sm:$0xff]
    %v2557 = vld [vmem:[#allocation4 + $0x30] sm:$0xff]
    %v2558 = vld [vmem:[#allocation4 + $0x48] sm:$0xff]
    %v2559 = vld [vmem:[#allocation4 + $0x50] sm:$0xff]
    %v2560 = vld [vmem:[#allocation4 + $0x68] sm:$0xff]
    %v2561 = vld [vmem:[#allocation4 + $0x70] sm:$0xff]
    %v2562 = vpack.c.bf16 %v2556, %v2554
    %v2563 = vpack.c.bf16 %v2557, %v2555
    %v2564 = vpack.c.bf16 %v2560, %v2558
    %v2565 = vpack.c.bf16 %v2561, %v2559
    %v2570 = vunpack.c.l.b16 %v2562
    %v2571 = vunpack.c.l.b16 %v2563
    %v2572 = vunpack.c.h.b16 %v2562
    %v2573 = vunpack.c.h.b16 %v2563
    %v2574 = vunpack.c.l.b16 %v2564
    %v2575 = vunpack.c.l.b16 %v2565
    %v2576 = vunpack.c.h.b16 %v2564
    %v2577 = vunpack.c.h.b16 %v2565
    %v2578 = vpack.c.b16 %v2571, %v2570
    %v2579 = vpack.c.b16 %v2573, %v2572
    %v2580 = vpack.c.b16 %v2575, %v2574
    %v2581 = vpack.c.b16 %v2577, %v2576
    %2586 = vst [vmem:[#allocation5 + $0x80] sm:$0xff] %v2578
    %2587 = vst [vmem:[#allocation5 + $0x88] sm:$0xff] %v2579
    %2588 = vst [vmem:[#allocation5 + $0x90] sm:$0xff] %v2580
    %2589 = vst [vmem:[#allocation5 + $0x98] sm:$0xff] %v2581
    %v2590 = vld [vmem:[#allocation4 + $0x8] sm:$0xff]
    %v2591 = vld [vmem:[#allocation4 + $0x10] sm:$0xff]
    %v2592 = vld [vmem:[#allocation4 + $0x18] sm:$0xff]
    %v2593 = vld [vmem:[#allocation4 + $0x28] sm:$0xff]
    %v2594 = vld [vmem:[#allocation4 + $0x30] sm:$0xff]
    %v2595 = vld [vmem:[#allocation4 + $0x38] sm:$0xff]
    %v2596 = vld [vmem:[#allocation4 + $0x48] sm:$0xff]
    %v2597 = vld [vmem:[#allocation4 + $0x50] sm:$0xff]
    %v2598 = vld [vmem:[#allocation4 + $0x58] sm:$0xff]
    %v2599 = vld [vmem:[#allocation4 + $0x68] sm:$0xff]
    %v2600 = vld [vmem:[#allocation4 + $0x70] sm:$0xff]
    %v2601 = vld [vmem:[#allocation4 + $0x78] sm:$0xff]
    %v2602 = vmul.f32 %v2590, %v1357
    %v2603 = vmul.f32 %v2591, %v1361
    %v2604 = vmul.f32 %v2592, %v1359
    %v2605 = vmul.f32 %v2593, %v1357
    %v2606 = vmul.f32 %v2594, %v1361
    %v2607 = vmul.f32 %v2595, %v1359
    %v2608 = vmul.f32 %v2596, %v1357
    %v2609 = vmul.f32 %v2597, %v1361
    %v2610 = vmul.f32 %v2598, %v1359
    %v2611 = vmul.f32 %v2599, %v1357
    %v2612 = vmul.f32 %v2600, %v1361
    %v2613 = vmul.f32 %v2601, %v1359
    %v2614 = vpack.c.bf16 %v2605, %v2602
    %v2615 = vpack.c.bf16 %v2606, %v2603
    %v2616 = vpack.c.bf16 %v2607, %v2604
    %v2617 = vpack.c.bf16 %v2611, %v2608
    %v2618 = vpack.c.bf16 %v2612, %v2609
    %v2619 = vpack.c.bf16 %v2613, %v2610
    %v2626 = vunpack.c.l.b16 %v2614
    %v2627 = vunpack.c.l.b16 %v2615
    %v2628 = vunpack.c.l.b16 %v2616
    %v2629 = vunpack.c.h.b16 %v2614
    %v2630 = vunpack.c.h.b16 %v2615
    %v2631 = vunpack.c.h.b16 %v2616
    %v2632 = vunpack.c.l.b16 %v2617
    %v2633 = vunpack.c.l.b16 %v2618
    %v2634 = vunpack.c.l.b16 %v2619
    %v2635 = vunpack.c.h.b16 %v2617
    %v2636 = vunpack.c.h.b16 %v2618
    %v2637 = vunpack.c.h.b16 %v2619
    %v2638 = vpack.c.b16 %v2627, %v2626
    %v2639 = vpack.c.b16 %v2628, %v2628
    %v2640 = vpack.c.b16 %v2630, %v2629
    %v2641 = vpack.c.b16 %v2631, %v2631
    %v2642 = vpack.c.b16 %v2633, %v2632
    %v2643 = vpack.c.b16 %v2634, %v2634
    %v2644 = vpack.c.b16 %v2636, %v2635
    %v2645 = vpack.c.b16 %v2637, %v2637
    %2646 = vrot.lane.b32.xlu0 %v2638, 127
    %v2647 = vpop.permute.xlu0 %2646
    %2648 = vrot.lane.b32.xlu0 %v2639, 127
    %v2649 = vpop.permute.xlu0 %2648
    %2650 = vrot.lane.b32.xlu0 %v2640, 127
    %v2651 = vpop.permute.xlu0 %2650
    %2652 = vrot.lane.b32.xlu0 %v2641, 127
    %v2653 = vpop.permute.xlu0 %2652
    %2654 = vrot.lane.b32.xlu0 %v2642, 127
    %v2655 = vpop.permute.xlu0 %2654
    %2656 = vrot.lane.b32.xlu0 %v2643, 127
    %v2657 = vpop.permute.xlu0 %2656
    %2658 = vrot.lane.b32.xlu0 %v2644, 127
    %v2659 = vpop.permute.xlu0 %2658
    %2660 = vrot.lane.b32.xlu0 %v2645, 127
    %v2661 = vpop.permute.xlu0 %2660
    %v2662 = vrot.slane %v2647, 4
    %v2663 = vrot.slane %v2649, 4
    %v2664 = vrot.slane %v2651, 4
    %v2665 = vrot.slane %v2653, 4
    %v2666 = vrot.slane %v2655, 4
    %v2667 = vrot.slane %v2657, 4
    %v2668 = vrot.slane %v2659, 4
    %v2669 = vrot.slane %v2661, 4
    %v2670 = vsel %vm991, %v2662, %v2663
    %v2671 = vsel %vm1434, %v2647, %v2670
    %v2672 = vsel %vm991, %v2664, %v2665
    %v2673 = vsel %vm1434, %v2651, %v2672
    %v2674 = vsel %vm991, %v2666, %v2667
    %v2675 = vsel %vm1434, %v2655, %v2674
    %v2676 = vsel %vm991, %v2668, %v2669
    %v2677 = vsel %vm1434, %v2659, %v2676
    %2682 = vst [vmem:[#allocation5 + $0xa0] sm:$0xff] %v2671
    %2683 = vst [vmem:[#allocation5 + $0xa8] sm:$0xff] %v2673
    %2684 = vst [vmem:[#allocation5 + $0xb0] sm:$0xff] %v2675
    %2685 = vst [vmem:[#allocation5 + $0xb8] sm:$0xff] %v2677
    %v2686 = vld [vmem:[#allocation4 + $0x8] sm:$0xff]
    %v2687 = vld [vmem:[#allocation4 + $0x10] sm:$0xff]
    %v2688 = vld [vmem:[#allocation4 + $0x18] sm:$0xff]
    %v2689 = vld [vmem:[#allocation4 + $0x28] sm:$0xff]
    %v2690 = vld [vmem:[#allocation4 + $0x30] sm:$0xff]
    %v2691 = vld [vmem:[#allocation4 + $0x38] sm:$0xff]
    %v2692 = vld [vmem:[#allocation4 + $0x48] sm:$0xff]
    %v2693 = vld [vmem:[#allocation4 + $0x50] sm:$0xff]
    %v2694 = vld [vmem:[#allocation4 + $0x58] sm:$0xff]
    %v2695 = vld [vmem:[#allocation4 + $0x68] sm:$0xff]
    %v2696 = vld [vmem:[#allocation4 + $0x70] sm:$0xff]
    %v2697 = vld [vmem:[#allocation4 + $0x78] sm:$0xff]
    %v2698 = vmul.f32 %v2686, %v1463
    %v2699 = vmul.f32 %v2687, %v1467
    %v2700 = vmul.f32 %v2688, %v1465
    %v2701 = vmul.f32 %v2689, %v1463
    %v2702 = vmul.f32 %v2690, %v1467
    %v2703 = vmul.f32 %v2691, %v1465
    %v2704 = vmul.f32 %v2692, %v1463
    %v2705 = vmul.f32 %v2693, %v1467
    %v2706 = vmul.f32 %v2694, %v1465
    %v2707 = vmul.f32 %v2695, %v1463
    %v2708 = vmul.f32 %v2696, %v1467
    %v2709 = vmul.f32 %v2697, %v1465
    %v2710 = vpack.c.bf16 %v2701, %v2698
    %v2711 = vpack.c.bf16 %v2702, %v2699
    %v2712 = vpack.c.bf16 %v2703, %v2700
    %v2713 = vpack.c.bf16 %v2707, %v2704
    %v2714 = vpack.c.bf16 %v2708, %v2705
    %v2715 = vpack.c.bf16 %v2709, %v2706
    %v2722 = vunpack.c.l.b16 %v2710
    %v2723 = vunpack.c.l.b16 %v2711
    %v2724 = vunpack.c.l.b16 %v2712
    %v2725 = vunpack.c.h.b16 %v2710
    %v2726 = vunpack.c.h.b16 %v2711
    %v2727 = vunpack.c.h.b16 %v2712
    %v2728 = vunpack.c.l.b16 %v2713
    %v2729 = vunpack.c.l.b16 %v2714
    %v2730 = vunpack.c.l.b16 %v2715
    %v2731 = vunpack.c.h.b16 %v2713
    %v2732 = vunpack.c.h.b16 %v2714
    %v2733 = vunpack.c.h.b16 %v2715
    %v2734 = vpack.c.b16 %v2723, %v2722
    %v2735 = vpack.c.b16 %v2724, %v2724
    %v2736 = vpack.c.b16 %v2726, %v2725
    %v2737 = vpack.c.b16 %v2727, %v2727
    %v2738 = vpack.c.b16 %v2729, %v2728
    %v2739 = vpack.c.b16 %v2730, %v2730
    %v2740 = vpack.c.b16 %v2732, %v2731
    %v2741 = vpack.c.b16 %v2733, %v2733
    %2742 = vrot.lane.b32.xlu0 %v2734, 113
    %v2743 = vpop.permute.xlu0 %2742
    %2744 = vrot.lane.b32.xlu0 %v2735, 113
    %v2745 = vpop.permute.xlu0 %2744
    %2746 = vrot.lane.b32.xlu0 %v2736, 113
    %v2747 = vpop.permute.xlu0 %2746
    %2748 = vrot.lane.b32.xlu0 %v2737, 113
    %v2749 = vpop.permute.xlu0 %2748
    %2750 = vrot.lane.b32.xlu0 %v2738, 113
    %v2751 = vpop.permute.xlu0 %2750
    %2752 = vrot.lane.b32.xlu0 %v2739, 113
    %v2753 = vpop.permute.xlu0 %2752
    %2754 = vrot.lane.b32.xlu0 %v2740, 113
    %v2755 = vpop.permute.xlu0 %2754
    %2756 = vrot.lane.b32.xlu0 %v2741, 113
    %v2757 = vpop.permute.xlu0 %2756
    %v2758 = vrot.slane %v2743, 4
    %v2759 = vrot.slane %v2745, 4
    %v2760 = vrot.slane %v2747, 4
    %v2761 = vrot.slane %v2749, 4
    %v2762 = vrot.slane %v2751, 4
    %v2763 = vrot.slane %v2753, 4
    %v2764 = vrot.slane %v2755, 4
    %v2765 = vrot.slane %v2757, 4
    %v2766 = vsel %vm991, %v2758, %v2759
    %v2767 = vsel %vm1540, %v2743, %v2766
    %v2768 = vsel %vm991, %v2760, %v2761
    %v2769 = vsel %vm1540, %v2747, %v2768
    %v2770 = vsel %vm991, %v2762, %v2763
    %v2771 = vsel %vm1540, %v2751, %v2770
    %v2772 = vsel %vm991, %v2764, %v2765
    %v2773 = vsel %vm1540, %v2755, %v2772
    %2778 = vst [vmem:[#allocation5 + $0xc0] sm:$0xff] %v2767
    %2779 = vst [vmem:[#allocation5 + $0xc8] sm:$0xff] %v2769
    %2780 = vst [vmem:[#allocation5 + $0xd0] sm:$0xff] %v2771
    %2781 = vst [vmem:[#allocation5 + $0xd8] sm:$0xff] %v2773
    %v2782 = vld [vmem:[#allocation4 + $0x8] sm:$0xff]
    %v2783 = vld [vmem:[#allocation4 + $0x10] sm:$0xff]
    %v2784 = vld [vmem:[#allocation4 + $0x18] sm:$0xff]
    %v2785 = vld [vmem:[#allocation4 + $0x28] sm:$0xff]
    %v2786 = vld [vmem:[#allocation4 + $0x30] sm:$0xff]
    %v2787 = vld [vmem:[#allocation4 + $0x38] sm:$0xff]
    %v2788 = vld [vmem:[#allocation4 + $0x48] sm:$0xff]
    %v2789 = vld [vmem:[#allocation4 + $0x50] sm:$0xff]
    %v2790 = vld [vmem:[#allocation4 + $0x58] sm:$0xff]
    %v2791 = vld [vmem:[#allocation4 + $0x68] sm:$0xff]
    %v2792 = vld [vmem:[#allocation4 + $0x70] sm:$0xff]
    %v2793 = vld [vmem:[#allocation4 + $0x78] sm:$0xff]
    %v2794 = vpack.c.bf16 %v2785, %v2782
    %v2795 = vpack.c.bf16 %v2786, %v2783
    %v2796 = vpack.c.bf16 %v2787, %v2784
    %v2797 = vpack.c.bf16 %v2791, %v2788
    %v2798 = vpack.c.bf16 %v2792, %v2789
    %v2799 = vpack.c.bf16 %v2793, %v2790
    %v2806 = vunpack.c.l.b16 %v2794
    %v2807 = vunpack.c.l.b16 %v2795
    %v2808 = vunpack.c.l.b16 %v2796
    %v2809 = vunpack.c.h.b16 %v2794
    %v2810 = vunpack.c.h.b16 %v2795
    %v2811 = vunpack.c.h.b16 %v2796
    %v2812 = vunpack.c.l.b16 %v2797
    %v2813 = vunpack.c.l.b16 %v2798
    %v2814 = vunpack.c.l.b16 %v2799
    %v2815 = vunpack.c.h.b16 %v2797
    %v2816 = vunpack.c.h.b16 %v2798
    %v2817 = vunpack.c.h.b16 %v2799
    %v2818 = vpack.c.b16 %v2807, %v2806
    %v2819 = vpack.c.b16 %v2808, %v2808
    %v2820 = vpack.c.b16 %v2810, %v2809
    %v2821 = vpack.c.b16 %v2811, %v2811
    %v2822 = vpack.c.b16 %v2813, %v2812
    %v2823 = vpack.c.b16 %v2814, %v2814
    %v2824 = vpack.c.b16 %v2816, %v2815
    %v2825 = vpack.c.b16 %v2817, %v2817
    %2826 = vrot.lane.b32.xlu0 %v2818, 112
    %v2827 = vpop.permute.xlu0 %2826
    %2828 = vrot.lane.b32.xlu0 %v2819, 112
    %v2829 = vpop.permute.xlu0 %2828
    %2830 = vrot.lane.b32.xlu0 %v2820, 112
    %v2831 = vpop.permute.xlu0 %2830
    %2832 = vrot.lane.b32.xlu0 %v2821, 112
    %v2833 = vpop.permute.xlu0 %2832
    %2834 = vrot.lane.b32.xlu0 %v2822, 112
    %v2835 = vpop.permute.xlu0 %2834
    %2836 = vrot.lane.b32.xlu0 %v2823, 112
    %v2837 = vpop.permute.xlu0 %2836
    %2838 = vrot.lane.b32.xlu0 %v2824, 112
    %v2839 = vpop.permute.xlu0 %2838
    %2840 = vrot.lane.b32.xlu0 %v2825, 112
    %v2841 = vpop.permute.xlu0 %2840
    %v2842 = vrot.slane %v2827, 4
    %v2843 = vrot.slane %v2829, 4
    %v2844 = vrot.slane %v2831, 4
    %v2845 = vrot.slane %v2833, 4
    %v2846 = vrot.slane %v2835, 4
    %v2847 = vrot.slane %v2837, 4
    %v2848 = vrot.slane %v2839, 4
    %v2849 = vrot.slane %v2841, 4
    %v2850 = vsel %vm991, %v2842, %v2843
    %v2851 = vsel %vm1625, %v2827, %v2850
    %v2852 = vsel %vm991, %v2844, %v2845
    %v2853 = vsel %vm1625, %v2831, %v2852
    %v2854 = vsel %vm991, %v2846, %v2847
    %v2855 = vsel %vm1625, %v2835, %v2854
    %v2856 = vsel %vm991, %v2848, %v2849
    %v2857 = vsel %vm1625, %v2839, %v2856
    %2862 = vst [vmem:[#allocation5 + $0xe0] sm:$0xff] %v2851
    %2863 = vst [vmem:[#allocation5 + $0xe8] sm:$0xff] %v2853
    %2864 = vst [vmem:[#allocation5 + $0xf0] sm:$0xff] %v2855
    %2865 = vst [vmem:[#allocation5 + $0xf8] sm:$0xff] %v2857
    %v2866 = vld [vmem:[#allocation4 + $0x8] sm:$0xff]
    %v2867 = vld [vmem:[#allocation4 + $0x10] sm:$0xff]
    %v2868 = vld [vmem:[#allocation4 + $0x18] sm:$0xff]
    %v2869 = vld [vmem:[#allocation4 + $0x28] sm:$0xff]
    %v2870 = vld [vmem:[#allocation4 + $0x30] sm:$0xff]
    %v2871 = vld [vmem:[#allocation4 + $0x38] sm:$0xff]
    %v2872 = vld [vmem:[#allocation4 + $0x48] sm:$0xff]
    %v2873 = vld [vmem:[#allocation4 + $0x50] sm:$0xff]
    %v2874 = vld [vmem:[#allocation4 + $0x58] sm:$0xff]
    %v2875 = vld [vmem:[#allocation4 + $0x68] sm:$0xff]
    %v2876 = vld [vmem:[#allocation4 + $0x70] sm:$0xff]
    %v2877 = vld [vmem:[#allocation4 + $0x78] sm:$0xff]
    %v2878 = vmul.f32 %v2866, %v1654
    %v2879 = vmul.f32 %v2867, %v1658
    %v2880 = vmul.f32 %v2868, %v1656
    %v2881 = vmul.f32 %v2869, %v1654
    %v2882 = vmul.f32 %v2870, %v1658
    %v2883 = vmul.f32 %v2871, %v1656
    %v2884 = vmul.f32 %v2872, %v1654
    %v2885 = vmul.f32 %v2873, %v1658
    %v2886 = vmul.f32 %v2874, %v1656
    %v2887 = vmul.f32 %v2875, %v1654
    %v2888 = vmul.f32 %v2876, %v1658
    %v2889 = vmul.f32 %v2877, %v1656
    %v2890 = vpack.c.bf16 %v2881, %v2878
    %v2891 = vpack.c.bf16 %v2882, %v2879
    %v2892 = vpack.c.bf16 %v2883, %v2880
    %v2893 = vpack.c.bf16 %v2887, %v2884
    %v2894 = vpack.c.bf16 %v2888, %v2885
    %v2895 = vpack.c.bf16 %v2889, %v2886
    %v2902 = vunpack.c.l.b16 %v2890
    %v2903 = vunpack.c.l.b16 %v2891
    %v2904 = vunpack.c.l.b16 %v2892
    %v2905 = vunpack.c.h.b16 %v2890
    %v2906 = vunpack.c.h.b16 %v2891
    %v2907 = vunpack.c.h.b16 %v2892
    %v2908 = vunpack.c.l.b16 %v2893
    %v2909 = vunpack.c.l.b16 %v2894
    %v2910 = vunpack.c.l.b16 %v2895
    %v2911 = vunpack.c.h.b16 %v2893
    %v2912 = vunpack.c.h.b16 %v2894
    %v2913 = vunpack.c.h.b16 %v2895
    %v2914 = vpack.c.b16 %v2903, %v2902
    %v2915 = vpack.c.b16 %v2904, %v2904
    %v2916 = vpack.c.b16 %v2906, %v2905
    %v2917 = vpack.c.b16 %v2907, %v2907
    %v2918 = vpack.c.b16 %v2909, %v2908
    %v2919 = vpack.c.b16 %v2910, %v2910
    %v2920 = vpack.c.b16 %v2912, %v2911
    %v2921 = vpack.c.b16 %v2913, %v2913
    %2922 = vrot.lane.b32.xlu0 %v2914, 111
    %v2923 = vpop.permute.xlu0 %2922
    %2924 = vrot.lane.b32.xlu0 %v2915, 111
    %v2925 = vpop.permute.xlu0 %2924
    %2926 = vrot.lane.b32.xlu0 %v2916, 111
    %v2927 = vpop.permute.xlu0 %2926
    %2928 = vrot.lane.b32.xlu0 %v2917, 111
    %v2929 = vpop.permute.xlu0 %2928
    %2930 = vrot.lane.b32.xlu0 %v2918, 111
    %v2931 = vpop.permute.xlu0 %2930
    %2932 = vrot.lane.b32.xlu0 %v2919, 111
    %v2933 = vpop.permute.xlu0 %2932
    %2934 = vrot.lane.b32.xlu0 %v2920, 111
    %v2935 = vpop.permute.xlu0 %2934
    %2936 = vrot.lane.b32.xlu0 %v2921, 111
    %v2937 = vpop.permute.xlu0 %2936
    %v2938 = vrot.slane %v2923, 4
    %v2939 = vrot.slane %v2925, 4
    %v2940 = vrot.slane %v2927, 4
    %v2941 = vrot.slane %v2929, 4
    %v2942 = vrot.slane %v2931, 4
    %v2943 = vrot.slane %v2933, 4
    %v2944 = vrot.slane %v2935, 4
    %v2945 = vrot.slane %v2937, 4
    %v2946 = vsel %vm991, %v2938, %v2939
    %v2947 = vsel %vm1731, %v2923, %v2946
    %v2948 = vsel %vm991, %v2940, %v2941
    %v2949 = vsel %vm1731, %v2927, %v2948
    %v2950 = vsel %vm991, %v2942, %v2943
    %v2951 = vsel %vm1731, %v2931, %v2950
    %v2952 = vsel %vm991, %v2944, %v2945
    %v2953 = vsel %vm1731, %v2935, %v2952
    %2958 = vst [vmem:[#allocation5 + $0x100] sm:$0xff] %v2947
    %2959 = vst [vmem:[#allocation5 + $0x108] sm:$0xff] %v2949
    %2960 = vst [vmem:[#allocation5 + $0x110] sm:$0xff] %v2951
    %2961 = vst [vmem:[#allocation5 + $0x118] sm:$0xff] %v2953
    %v2962 = vld [vmem:[%s5] sm:$0xff]
    %v2963 = vld [vmem:[%s5 + $0x8] sm:$0xf]
    %v2964 = vld [vmem:[%s5 + $0xc] sm:$0xff]
    %v2965 = vld [vmem:[%s5 + $0x14] sm:$0xf]
    %v2966 = vld [vmem:[%s5 + $0x18] sm:$0xff]
    %v2967 = vld [vmem:[%s5 + $0x20] sm:$0xf]
    %v2968 = vld [vmem:[%s5 + $0x24] sm:$0xff]
    %v2969 = vld [vmem:[%s5 + $0x2c] sm:$0xf]
    %v2970 = vld [vmem:[#allocation5] sm:$0xff]
    %v2971 = vld [vmem:[#allocation5 + $0x8] sm:$0xff]
    %v2972 = vld [vmem:[#allocation5 + $0x10] sm:$0xff]
    %v2973 = vld [vmem:[#allocation5 + $0x18] sm:$0xff]
    %v2974 = vld [vmem:[#allocation5 + $0x20] sm:$0xff]
    %v2975 = vld [vmem:[#allocation5 + $0x28] sm:$0xff]
    %v2976 = vld [vmem:[#allocation5 + $0x30] sm:$0xff]
    %v2977 = vld [vmem:[#allocation5 + $0x38] sm:$0xff]
    %v2978 = vld [vmem:[#allocation5 + $0x40] sm:$0xff]
    %v2979 = vld [vmem:[#allocation5 + $0x48] sm:$0xff]
    %v2980 = vld [vmem:[#allocation5 + $0x50] sm:$0xff]
    %v2981 = vld [vmem:[#allocation5 + $0x58] sm:$0xff]
    %v2982 = vld [vmem:[#allocation5 + $0x60] sm:$0xff]
    %v2983 = vld [vmem:[#allocation5 + $0x68] sm:$0xff]
    %v2984 = vld [vmem:[#allocation5 + $0x70] sm:$0xff]
    %v2985 = vld [vmem:[#allocation5 + $0x78] sm:$0xff]
    %v2986 = vld [vmem:[#allocation5 + $0x80] sm:$0xff]
    %v2987 = vld [vmem:[#allocation5 + $0x88] sm:$0xff]
    %v2988 = vld [vmem:[#allocation5 + $0x90] sm:$0xff]
    %v2989 = vld [vmem:[#allocation5 + $0x98] sm:$0xff]
    %v2990 = vld [vmem:[#allocation5 + $0xa0] sm:$0xff]
    %v2991 = vld [vmem:[#allocation5 + $0xa8] sm:$0xff]
    %v2992 = vld [vmem:[#allocation5 + $0xb0] sm:$0xff]
    %v2993 = vld [vmem:[#allocation5 + $0xb8] sm:$0xff]
    %v2994 = vld [vmem:[#allocation5 + $0xc0] sm:$0xff]
    %v2995 = vld [vmem:[#allocation5 + $0xc8] sm:$0xff]
    %v2996 = vld [vmem:[#allocation5 + $0xd0] sm:$0xff]
    %v2997 = vld [vmem:[#allocation5 + $0xd8] sm:$0xff]
    %v2998 = vld [vmem:[#allocation5 + $0xe0] sm:$0xff]
    %v2999 = vld [vmem:[#allocation5 + $0xe8] sm:$0xff]
    %v3000 = vld [vmem:[#allocation5 + $0xf0] sm:$0xff]
    %v3001 = vld [vmem:[#allocation5 + $0xf8] sm:$0xff]
    %v3002 = vld [vmem:[#allocation5 + $0x100] sm:$0xff]
    %v3003 = vld [vmem:[#allocation5 + $0x108] sm:$0xff]
    %v3004 = vld [vmem:[#allocation5 + $0x110] sm:$0xff]
    %v3005 = vld [vmem:[#allocation5 + $0x118] sm:$0xff]
    %v3014 = vunpack.c.l.b16 %v2962
    %v3015 = vunpack.c.h.b16 %v2962
    %v3016 = vunpack.c.l.b16 %v2963
    %v3017 = vunpack.c.l.b16 %v2964
    %v3018 = vunpack.c.h.b16 %v2964
    %v3019 = vunpack.c.l.b16 %v2965
    %v3020 = vunpack.c.l.b16 %v2966
    %v3021 = vunpack.c.h.b16 %v2966
    %v3022 = vunpack.c.l.b16 %v2967
    %v3023 = vunpack.c.l.b16 %v2968
    %v3024 = vunpack.c.h.b16 %v2968
    %v3025 = vunpack.c.l.b16 %v2969
    %v3026 = vpack.c.b16 %v3017, %v3014
    %v3027 = vpack.c.b16 %v3018, %v3015
    %v3028 = vpack.c.b16 %v3019, %v3016
    %v3029 = vpack.c.b16 %v3023, %v3020
    %v3030 = vpack.c.b16 %v3024, %v3021
    %v3031 = vpack.c.b16 %v3025, %v3022
    %v3072 = vunpack.c.l.b16 %v2970
    %v3073 = vunpack.c.h.b16 %v2970
    %v3074 = vunpack.c.l.b16 %v2971
    %v3075 = vunpack.c.h.b16 %v2971
    %v3076 = vunpack.c.l.b16 %v2972
    %v3077 = vunpack.c.h.b16 %v2972
    %v3078 = vunpack.c.l.b16 %v2973
    %v3079 = vunpack.c.h.b16 %v2973
    %v3080 = vunpack.c.l.b16 %v2974
    %v3081 = vunpack.c.h.b16 %v2974
    %v3082 = vunpack.c.l.b16 %v2975
    %v3083 = vunpack.c.h.b16 %v2975
    %v3084 = vunpack.c.l.b16 %v2976
    %v3085 = vunpack.c.h.b16 %v2976
    %v3086 = vunpack.c.l.b16 %v2977
    %v3087 = vunpack.c.h.b16 %v2977
    %v3088 = vunpack.c.l.b16 %v2978
    %v3089 = vunpack.c.h.b16 %v2978
    %v3090 = vunpack.c.l.b16 %v2979
    %v3091 = vunpack.c.h.b16 %v2979
    %v3092 = vunpack.c.l.b16 %v2980
    %v3093 = vunpack.c.h.b16 %v2980
    %v3094 = vunpack.c.l.b16 %v2981
    %v3095 = vunpack.c.h.b16 %v2981
    %v3096 = vunpack.c.l.b16 %v2982
    %v3097 = vunpack.c.h.b16 %v2982
    %v3098 = vunpack.c.l.b16 %v2983
    %v3099 = vunpack.c.h.b16 %v2983
    %v3100 = vunpack.c.l.b16 %v2984
    %v3101 = vunpack.c.h.b16 %v2984
    %v3102 = vunpack.c.l.b16 %v2985
    %v3103 = vunpack.c.h.b16 %v2985
    %v3104 = vunpack.c.l.b16 %v2986
    %v3105 = vunpack.c.h.b16 %v2986
    %v3106 = vunpack.c.l.b16 %v2987
    %v3107 = vunpack.c.h.b16 %v2987
    %v3108 = vunpack.c.l.b16 %v2988
    %v3109 = vunpack.c.h.b16 %v2988
    %v3110 = vunpack.c.l.b16 %v2989
    %v3111 = vunpack.c.h.b16 %v2989
    %v3112 = vunpack.c.l.b16 %v2990
    %v3113 = vunpack.c.h.b16 %v2990
    %v3114 = vunpack.c.l.b16 %v2991
    %v3115 = vunpack.c.h.b16 %v2991
    %v3116 = vunpack.c.l.b16 %v2992
    %v3117 = vunpack.c.h.b16 %v2992
    %v3118 = vunpack.c.l.b16 %v2993
    %v3119 = vunpack.c.h.b16 %v2993
    %v3120 = vunpack.c.l.b16 %v2994
    %v3121 = vunpack.c.h.b16 %v2994
    %v3122 = vunpack.c.l.b16 %v2995
    %v3123 = vunpack.c.h.b16 %v2995
    %v3124 = vunpack.c.l.b16 %v2996
    %v3125 = vunpack.c.h.b16 %v2996
    %v3126 = vunpack.c.l.b16 %v2997
    %v3127 = vunpack.c.h.b16 %v2997
    %v3128 = vunpack.c.l.b16 %v2998
    %v3129 = vunpack.c.h.b16 %v2998
    %v3130 = vunpack.c.l.b16 %v2999
    %v3131 = vunpack.c.h.b16 %v2999
    %v3132 = vunpack.c.l.b16 %v3000
    %v3133 = vunpack.c.h.b16 %v3000
    %v3134 = vunpack.c.l.b16 %v3001
    %v3135 = vunpack.c.h.b16 %v3001
    %v3136 = vunpack.c.l.b16 %v3002
    %v3137 = vunpack.c.h.b16 %v3002
    %v3138 = vunpack.c.l.b16 %v3003
    %v3139 = vunpack.c.h.b16 %v3003
    %v3140 = vunpack.c.l.b16 %v3004
    %v3141 = vunpack.c.h.b16 %v3004
    %v3142 = vunpack.c.l.b16 %v3005
    %v3143 = vunpack.c.h.b16 %v3005
    %v3144 = vpack.c.b16 %v3074, %v3072
    %v3145 = vpack.c.b16 %v3075, %v3073
    %v3146 = vpack.c.b16 %v3078, %v3076
    %v3147 = vpack.c.b16 %v3079, %v3077
    %v3148 = vpack.c.b16 %v3082, %v3080
    %v3149 = vpack.c.b16 %v3083, %v3081
    %v3150 = vpack.c.b16 %v3086, %v3084
    %v3151 = vpack.c.b16 %v3087, %v3085
    %v3152 = vpack.c.b16 %v3090, %v3088
    %v3153 = vpack.c.b16 %v3091, %v3089
    %v3154 = vpack.c.b16 %v3094, %v3092
    %v3155 = vpack.c.b16 %v3095, %v3093
    %v3156 = vpack.c.b16 %v3098, %v3096
    %v3157 = vpack.c.b16 %v3099, %v3097
    %v3158 = vpack.c.b16 %v3102, %v3100
    %v3159 = vpack.c.b16 %v3103, %v3101
    %v3160 = vpack.c.b16 %v3106, %v3104
    %v3161 = vpack.c.b16 %v3107, %v3105
    %v3162 = vpack.c.b16 %v3110, %v3108
    %v3163 = vpack.c.b16 %v3111, %v3109
    %v3164 = vpack.c.b16 %v3114, %v3112
    %v3165 = vpack.c.b16 %v3115, %v3113
    %v3166 = vpack.c.b16 %v3118, %v3116
    %v3167 = vpack.c.b16 %v3119, %v3117
    %v3168 = vpack.c.b16 %v3122, %v3120
    %v3169 = vpack.c.b16 %v3123, %v3121
    %v3170 = vpack.c.b16 %v3126, %v3124
    %v3171 = vpack.c.b16 %v3127, %v3125
    %v3172 = vpack.c.b16 %v3130, %v3128
    %v3173 = vpack.c.b16 %v3131, %v3129
    %v3174 = vpack.c.b16 %v3134, %v3132
    %v3175 = vpack.c.b16 %v3135, %v3133
    %v3176 = vpack.c.b16 %v3138, %v3136
    %v3177 = vpack.c.b16 %v3139, %v3137
    %v3178 = vpack.c.b16 %v3142, %v3140
    %v3179 = vpack.c.b16 %v3143, %v3141
    %v3217 = vsel %vm2001, %v3028, 0
    %v3220 = vsel %vm2001, %v3031, 0
    %3222 = vmatprep.subr.bf16.mxu0 %v3159
    %3223 = vmatpush1.bf16.msra.mxu0 %v3158
    %3224 = vmatprep.subr.bf16.mxu0 %v3157
    %3225 = vmatpush1.bf16.msra.mxu0 %v3156
    %3226 = vmatprep.subr.bf16.mxu0 %v3155
    %3227 = vmatpush1.bf16.msra.mxu0 %v3154
    %3228 = vmatprep.subr.bf16.mxu0 %v3153
    %3229 = vmatpush1.bf16.msra.mxu0 %v3152
    %3230 = vmatprep.subr.bf16.mxu0 %v3151
    %3231 = vmatpush1.bf16.msra.mxu0 %v3150
    %3232 = vmatprep.subr.bf16.mxu0 %v3149
    %3233 = vmatpush1.bf16.msra.mxu0 %v3148
    %3234 = vmatprep.subr.bf16.mxu0 %v3147
    %3235 = vmatpush1.bf16.msra.mxu0 %v3146
    %3236 = vmatprep.subr.bf16.mxu0 %v3145
    %3237 = vmatpush1.bf16.msra.mxu0 %v3144
    %3238 = vmatprep.subr.bf16.mxu0 %v3175
    %3239 = vmatpush2.bf16.msra.mxu0 %v3174
    %3240 = vmatprep.subr.bf16.mxu0 %v3173
    %3241 = vmatpush2.bf16.msra.mxu0 %v3172
    %3242 = vmatprep.subr.bf16.mxu0 %v3171
    %3243 = vmatpush2.bf16.msra.mxu0 %v3170
    %3244 = vmatprep.subr.bf16.mxu0 %v3169
    %3245 = vmatpush2.bf16.msra.mxu0 %v3168
    %3246 = vmatprep.subr.bf16.mxu0 %v3167
    %3247 = vmatpush2.bf16.msra.mxu0 %v3166
    %3248 = vmatprep.subr.bf16.mxu0 %v3165
    %3249 = vmatpush2.bf16.msra.mxu0 %v3164
    %3250 = vmatprep.subr.bf16.mxu0 %v3163
    %3251 = vmatpush2.bf16.msra.mxu0 %v3162
    %3252 = vmatprep.subr.bf16.mxu0 %v3161
    %3253 = vmatpush2.bf16.msra.mxu0 %v3160
    %3254 = vmatprep.mubr.bf16.mxu0 %v3027
    %3255 = vmatmul.mubr.bf16.gmra.mxu0 %v3026
    %v3256 = vpop.f32.mrf.mxu0
    %v3257 = vadd.f32 0.0, %v3256
    %v3258 = vpop.f32.mrf.mxu0
    %v3259 = vadd.f32 0.0, %v3258
    %v3260 = vpop.f32.mrf.mxu0
    %v3261 = vadd.f32 0.0, %v3260
    %v3262 = vpop.f32.mrf.mxu0
    %v3263 = vadd.f32 0.0, %v3262
    %3264 = vmatprep.mubr.bf16.mxu0 %v3030
    %3265 = vmatmul.mubr.bf16.gmra.mxu0 %v3029
    %v3266 = vpop.f32.mrf.mxu0
    %v3267 = vadd.f32 0.0, %v3266
    %v3268 = vpop.f32.mrf.mxu0
    %v3269 = vadd.f32 0.0, %v3268
    %v3270 = vpop.f32.mrf.mxu0
    %v3271 = vpop.f32.mrf.mxu0
    %3272 = vdwg.mxu0
    %3273 = vmatprep.subr.bf16.mxu0 0
    %3274 = vmatpush1.bf16.msra.mxu0 0
    %3275 = vmatprep.subr.bf16.mxu0 0
    %3276 = vmatpush1.bf16.msra.mxu0 0
    %3277 = vmatprep.subr.bf16.mxu0 0
    %3278 = vmatpush1.bf16.msra.mxu0 0
    %3279 = vmatprep.subr.bf16.mxu0 0
    %3280 = vmatpush1.bf16.msra.mxu0 0
    %3281 = vmatprep.subr.bf16.mxu0 0
    %3282 = vmatpush1.bf16.msra.mxu0 0
    %3283 = vmatprep.subr.bf16.mxu0 0
    %3284 = vmatpush1.bf16.msra.mxu0 0
    %3285 = vmatprep.subr.bf16.mxu0 %v3179
    %3286 = vmatpush1.bf16.msra.mxu0 %v3178
    %3287 = vmatprep.subr.bf16.mxu0 %v3177
    %3288 = vmatpush1.bf16.msra.mxu0 %v3176
    %3289 = vmatprep.subr.bf16.mxu0 0
    %3290 = vmatpush2.bf16.msra.mxu0 0
    %3291 = vmatprep.subr.bf16.mxu0 0
    %3292 = vmatpush2.bf16.msra.mxu0 0
    %3293 = vmatprep.subr.bf16.mxu0 0
    %3294 = vmatpush2.bf16.msra.mxu0 0
    %3295 = vmatprep.subr.bf16.mxu0 0
    %3296 = vmatpush2.bf16.msra.mxu0 0
    %3297 = vmatprep.subr.bf16.mxu0 0
    %3298 = vmatpush2.bf16.msra.mxu0 0
    %3299 = vmatprep.subr.bf16.mxu0 0
    %3300 = vmatpush2.bf16.msra.mxu0 0
    %3301 = vmatprep.subr.bf16.mxu0 0
    %3302 = vmatpush2.bf16.msra.mxu0 0
    %3303 = vmatprep.subr.bf16.mxu0 0
    %3304 = vmatpush2.bf16.msra.mxu0 0
    %3305 = vmatprep.mubr.bf16.mxu0 0
    %3306 = vmatmul.mubr.bf16.gmra.mxu0 %v3217
    %v3307 = vpop.f32.mrf.mxu0
    %v3308 = vadd.f32 %v3257, %v3307
    %v3309 = vpop.f32.mrf.mxu0
    %v3310 = vadd.f32 %v3259, %v3309
    %v3311 = vpop.f32.mrf.mxu0
    %v3312 = vadd.f32 %v3261, %v3311
    %v3313 = vpop.f32.mrf.mxu0
    %v3314 = vadd.f32 %v3263, %v3313
    %3315 = vmatprep.mubr.bf16.mxu0 0
    %3316 = vmatmul.mubr.bf16.gmra.mxu0 %v3220
    %v3317 = vpop.f32.mrf.mxu0
    %v3318 = vadd.f32 %v3267, %v3317
    %v3319 = vpop.f32.mrf.mxu0
    %v3320 = vadd.f32 %v3269, %v3319
    %v3321 = vpop.f32.mrf.mxu0
    %v3322 = vpop.f32.mrf.mxu0
    %3323 = vdwg.mxu0
    %v3324 = vld [vmem:[%s6] sm:$0xff]
    %v3325 = vld [vmem:[%s6 + $0x8] sm:$0xff]
    %v3326 = vld [vmem:[%s6 + $0x10] sm:$0xff]
    %3328 = vset.pattern.permute.xlu0 0
    %3329 = vperm.xlu0 %3328, %v3324
    %v3330 = vpop.permute.xlu0 %3329
    %3333 = vset.pattern.permute.xlu0 0
    %3334 = vperm.xlu0 %3333, %v3325
    %v3335 = vpop.permute.xlu0 %3334
    %3338 = vset.pattern.permute.xlu0 0
    %3339 = vperm.xlu0 %3338, %v3326
    %v3340 = vpop.permute.xlu0 %3339
    %v3342 = vadd.f32 %v3308, %v3330
    %v3343 = vadd.f32 %v3310, %v3330
    %v3344 = vadd.f32 %v3312, %v3335
    %v3345 = vadd.f32 %v3314, %v3335
    %v3346 = vadd.f32 %v3318, %v3340
    %v3347 = vadd.f32 %v3320, %v3340
    %v3348 = vmax.f32 %v3342, 0.0
    %v3349 = vmax.f32 %v3343, 0.0
    %v3350 = vmax.f32 %v3344, 0.0
    %v3351 = vmax.f32 %v3345, 0.0
    %v3352 = vmax.f32 %v3346, 0.0
    %v3353 = vmax.f32 %v3347, 0.0
    %v3354 = vld [vmem:[%s718] sm:$0xff]
    %v3355 = vld [vmem:[%s718 + $0x8] sm:$0xff]
    %v3356 = vld [vmem:[%s718 + $0x10] sm:$0xff]
    %v3357 = vld [vmem:[%s718 + $0x18] sm:$0xff]
    %v3358 = vld [vmem:[%s718 + $0x20] sm:$0xff]
    %v3359 = vld [vmem:[%s718 + $0x28] sm:$0xff]
    %v3360 = vadd.f32 %v3348, %v3354
    %v3361 = vadd.f32 %v3349, %v3355
    %v3362 = vadd.f32 %v3350, %v3356
    %v3363 = vadd.f32 %v3351, %v3357
    %v3364 = vadd.f32 %v3352, %v3358
    %v3365 = vadd.f32 %v3353, %v3359
    %s3366 = scalar_lea.vmem [#allocation6], 48
    %3367 = vst [vmem:[%s3366] sm:$0xff] %v3360
    %3368 = vst [vmem:[%s3366 + $0x8] sm:$0xff] %v3361
    %3369 = vst [vmem:[%s3366 + $0x10] sm:$0xff] %v3362
    %3370 = vst [vmem:[%s3366 + $0x18] sm:$0xff] %v3363
    %3371 = vst [vmem:[%s3366 + $0x20] sm:$0xff] %v3364
    %3372 = vst [vmem:[%s3366 + $0x28] sm:$0xff] %v3365
    // Predicated region
    $region30: #{tpu_custom_call.1} parent=1 // pred_check
      _
    $region31: #{tpu_custom_call.1} parent=1 // pred_check_branch
      %3374 = sbr.rel (0) target = $region33
    $region32: #{tpu_custom_call.1} parent=1 // pred_region
      %s3376 = ssub.s32 1536, 1536
      %3377 = vsyncadd [#allocation7], %s3376
      %s3378 = sshll.u32 [#allocation6], 4
      %s3379 = int_to_ptr.vmem [resolvable:$true] %s3378
      %3384 = dma.vmem_to_hbm [thread:$0]  %s3379, 1536, %s7, [#allocation7], 256, 256, 16
    $region33: #{tpu_custom_call.1} parent=1 // pred_fallthru
      _
    // Predicated region
    $region34: #{tpu_custom_call.1} parent=1 // pred_check
      _
    $region35: #{tpu_custom_call.1} parent=1 // pred_check_branch
      %3386 = sbr.rel (0) target = $region37
    $region36: #{tpu_custom_call.1} parent=1 // pred_region
      %3387 = dma.done [#allocation7], 1536
    $region37: #{tpu_custom_call.1} parent=1 // pred_fallthru
      _
    %3388 = vsyncpa [#allocation7], 1

</llo_original>
